<compile_context>
chip_gen: v7x
topology: tpu7x:2x2x1
jax: 0.10.0
libtpu: 0.0.40
codegen_flags: <defaults>
</compile_context>

<pallas_src>
import math
import numpy as np
import jax
import jax.numpy as jnp
from jax import lax
from jax.experimental import pallas as pl
from jax.experimental.pallas import tpu as pltpu

EPS = 1e-5        # torch.nn.GroupNorm default eps
NEG = -1e30       # "minus infinity" for the scatter-max running accumulator
EDGE_CHUNK = 8    # edges per running-max step (keeps the mask/select vreg-resident)


def _gn1(x, gamma, beta):
    # GroupNorm(1, C) on a (rows, C) tensor == per-row normalization over C.
    # Centered (two-pass) variance: robust to |mean| >> std, negligible cost here.
    mean = jnp.mean(x, axis=1, keepdims=True)
    xc = x - mean
    var = jnp.mean(xc * xc, axis=1, keepdims=True)
    return xc * lax.rsqrt(var + EPS) * gamma + beta


def da2da_kernel(u_ref, v_ref, feat_ref, wf_ref, w2b_ref, w3_ref, gn_ref,
                 out_ref, feat_s):
    """One grid step == one GraphAggregationBlock; feat carried in VMEM scratch."""
    f32, bf16 = jnp.float32, jnp.bfloat16
    j = pl.program_id(0)   # block index (outer loop of the module)
    i = pl.program_id(1)   # scale index (inner loop of the module)
    first = jnp.logical_and(j == 0, i == 0)
    last = jnp.logical_and(j == pl.num_programs(0) - 1,
                           i == pl.num_programs(1) - 1)

    @pl.when(first)
    def _():
        feat_s[...] = feat_ref[...]

    feat = feat_s[...]                                   # (N, C) f32, carried
    N, C = feat.shape
    E = u_ref.shape[1]

    gn = gn_ref[0, 0]                                    # (6, C): g1,b1,g2,b2,g3,b3
    g1, b1, g2, b2, g3, b3 = (gn[k:k + 1, :] for k in range(6))

    # ---- fused LHS matmul: feat @ [W1 | W2a]  (fc_1 pre-act + fc_2 top half) ---
    pre = jnp.dot(feat.astype(bf16), wf_ref[0, 0], preferred_element_type=f32)
    pre1, pre2a = pre[:, :C], pre[:, C:]                 # (N, C), (N, C)

    # ---- fc_1: GN -> ReLU ------------------------------------------------------
    ctx1 = jnp.maximum(_gn1(pre1, g1, b1), 0.0)          # (N, C)

    # ---- index_select(0, u): one-hot (E, N) gather matmul on the MXU -----------
    u = u_ref[0]                                         # (E, 1) int32, pad = -1
    col = lax.broadcasted_iota(jnp.int32, (E, N), 1)
    gu = (col == u).astype(bf16)                         # exact 0/1; padded rows = 0
    gath = jnp.dot(gu, ctx1.astype(bf16), preferred_element_type=f32)   # (E, C)

    # ---- scatter_max(gath, v, dim=0, dim_size=N); empty targets -> 0 -----------
    # E-chunked running max: only a (N, EDGE_CHUNK, C) select is live per chunk
    # instead of the full (N, E, C) tensor. Padded edges (v = -1) match nothing.
    v3 = v_ref[0].reshape(1, E, 1)                       # (1, E, 1) int32
    nid = lax.broadcasted_iota(jnp.int32, (N, EDGE_CHUNK, 1), 0)
    acc = jnp.full((N, C), NEG, f32)
    hit = jnp.zeros((N, 1), f32)                         # "any incoming edge" flag
    for c0 in range(0, E, EDGE_CHUNK):
        v_c = v3[:, c0:c0 + EDGE_CHUNK, :]               # (1, EC, 1)
        g_c = gath[c0:c0 + EDGE_CHUNK, :][None, :, :]    # (1, EC, C)
        m_c = nid == v_c                                 # (N, EC, 1)
        acc = jnp.maximum(acc, jnp.max(jnp.where(m_c, g_c, NEG), axis=1))
        hit = jnp.maximum(hit, jnp.max(m_c.astype(f32), axis=1))
    agg = jnp.where(hit > 0.5, acc, 0.0)                 # torch_scatter: empty -> 0

    # ---- fc_2: feat@W2a + agg@W2b -> GN -> ReLU  (concat-free) -----------------
    pre2 = pre2a + jnp.dot(agg.astype(bf16), w2b_ref[0, 0],
                           preferred_element_type=f32)
    h = jnp.maximum(_gn1(pre2, g2, b2), 0.0)

    # ---- linear (act=False) -> dropout(no-op) -> +res -> ReLU ------------------
    h = _gn1(jnp.dot(h.astype(bf16), w3_ref[0, 0], preferred_element_type=f32),
             g3, b3)
    new_feat = jnp.maximum(h + feat, 0.0)

    feat_s[...] = new_feat                               # carry to next block

    @pl.when(last)
    def _():
        out_ref[...] = new_feat


def da2da_forward(kp, feat, u_all, v_all):
    n_blk, n_scales = kp["wf"].shape[0], kp["wf"].shape[1]
    N, C = feat.shape
    E_pad = u_all.shape[1]
    assert E_pad % EDGE_CHUNK == 0

    edge_spec = pl.BlockSpec((1, E_pad, 1), lambda j, i: (i, 0, 0))
    def step_spec(*dims):
        return pl.BlockSpec((1, 1) + dims, lambda j, i: (j, i, 0, 0))

    return pl.pallas_call(
        da2da_kernel,
        out_shape=jax.ShapeDtypeStruct((N, C), jnp.float32),
        grid_spec=pltpu.PrefetchScalarGridSpec(
            num_scalar_prefetch=0,
            grid=(n_blk, n_scales),
            in_specs=[
                edge_spec,                                   # u  (per-scale)
                edge_spec,                                   # v  (per-scale)
                pl.BlockSpec((N, C), lambda j, i: (0, 0)),   # feat (read at step 0)
                step_spec(C, 2 * C),                         # [W1 | W2a]  bf16
                step_spec(C, C),                             # W2b         bf16
                step_spec(C, C),                             # W3          bf16
                step_spec(6, C),                             # gamma/beta table f32
            ],
            out_specs=pl.BlockSpec((N, C), lambda j, i: (0, 0)),
            scratch_shapes=[pltpu.VMEM((N, C), jnp.float32)],  # carried feat
        ),
        compiler_params=pltpu.CompilerParams(
            dimension_semantics=("arbitrary", "arbitrary")),
        input_output_aliases={2: 0},   # feat -> out (consumed before out is written)
    )(u_all, v_all, feat, kp["wf"], kp["w2b"], kp["w3"], kp["gn"])


# ----------------------------- parameters -----------------------------------
def init_params(key, C, n_blk, n_scales):
    params = []
    for _ in range(n_blk):
        row = []
        for _ in range(n_scales):
            key, *ks = jax.random.split(key, 10)
            r = lambda k, s, sc=0.1: (sc * jax.random.normal(k, s)).astype(jnp.float32)
            row.append(dict(
                w1=r(ks[0], (C, C)),            # fc_1 weight (in, out), bias=False
                w2=r(ks[1], (2 * C, C)),        # fc_2 weight
                w3=r(ks[2], (C, C)),            # linear weight
                g1=1.0 + r(ks[3], (C,)), b1=r(ks[4], (C,)),
                g2=1.0 + r(ks[5], (C,)), b2=r(ks[6], (C,)),
                g3=1.0 + r(ks[7], (C,)), b3=r(ks[8], (C,)),
            ))
        params.append(row)
    return params


def stack_kernel_params(params, C):
    def cat_wf(p):   # (C, 2C) = [W1 | W2a]
        return jnp.concatenate([p["w1"], p["w2"][:C]], axis=1)
    wf = jnp.stack([jnp.stack([cat_wf(p) for p in blk]) for blk in params])
    w2b = jnp.stack([jnp.stack([p["w2"][C:] for p in blk]) for blk in params])
    w3 = jnp.stack([jnp.stack([p["w3"] for p in blk]) for blk in params])
    gn = jnp.stack([jnp.stack([jnp.stack([p["g1"], p["b1"], p["g2"],
                                          p["b2"], p["g3"], p["b3"]], 0)
                               for p in blk]) for blk in params])
    return dict(wf=wf.astype(jnp.bfloat16),     # (n_blk, n_scales, C, 2C)
                w2b=w2b.astype(jnp.bfloat16),   # (n_blk, n_scales, C, C)
                w3=w3.astype(jnp.bfloat16),     # (n_blk, n_scales, C, C)
                gn=gn.astype(jnp.float32))      # (n_blk, n_scales, 6, C)


# ----------------------------- pure-JAX reference ----------------------------
def _gn_ref(x, g, b):
    m = x.mean(1, keepdims=True)
    v = ((x - m) ** 2).mean(1, keepdims=True)
    return (x - m) / jnp.sqrt(v + EPS) * g + b


def gab_ref(p, feat, u, v):
    N, C = feat.shape
    res = feat
    ctx = jnp.maximum(_gn_ref(feat @ p["w1"], p["g1"], p["b1"]), 0.0)[u]
    agg = jnp.full((N, C), -jnp.inf, jnp.float32).at[v].max(ctx)
    agg = jnp.where(jnp.isneginf(agg), 0.0, agg)        # torch_scatter: empty -> 0
    h = jnp.concatenate([res, agg], axis=1)
    h = jnp.maximum(_gn_ref(h @ p["w2"], p["g2"], p["b2"]), 0.0)
    h = _gn_ref(h @ p["w3"], p["g3"], p["b3"])
    return jnp.maximum(h + res, 0.0)


def da2da_ref(params, feat, edges):
    for blk in params:
        for p, (u, v) in zip(blk, edges):
            feat = gab_ref(p, feat, u, v)
    return feat


# ----------------------------------- main ------------------------------------
if __name__ == "__main__":
    key = jax.random.PRNGKey(0)
    C = 128                 # n_da (feature width) — lane-dense (128)
    N = 16                  # number of DA nodes
    n_blk, n_scales = 2, 2  # DA2DA(n_blk=2), config['n_scales_da']=2
    E_counts = [28, 44]     # edges per scale

    k_par, k_feat, k_edges = jax.random.split(key, 3)
    params = init_params(k_par, C, n_blk, n_scales)
    kp = stack_kernel_params(params, C)

    feat0 = jax.random.normal(k_feat, (N, C), jnp.float32)

    # Multi-scale edge lists graph['ms_edges'][i] = {'u': ..., 'v': ...},
    # padded to a common E (multiple of 8) with -1 marking invalid edges.
    E_pad = 8 * math.ceil(max(E_counts) / 8)
    edges = []
    u_np = np.full((n_scales, E_pad, 1), -1, np.int32)
    v_np = np.full((n_scales, E_pad, 1), -1, np.int32)
    for i, (E, ek) in enumerate(zip(E_counts, jax.random.split(k_edges, n_scales))):
        uv = jax.random.randint(ek, (2, E), 0, N, dtype=jnp.int32)
        edges.append((uv[0], uv[1]))
        u_np[i, :E, 0] = np.asarray(uv[0])
        v_np[i, :E, 0] = np.asarray(uv[1])
    u_all, v_all = jnp.asarray(u_np), jnp.asarray(v_np)

    out = jax.jit(da2da_forward)(kp, feat0, u_all, v_all)
    out = jax.block_until_ready(out)

    ref = da2da_ref(params, feat0, edges)
    # Tolerance accounts for bf16 MXU operands (f32 accumulation) vs the f32
    # reference, compounded across the 4 chained GraphAggregationBlocks.
    np.testing.assert_allclose(np.asarray(out), np.asarray(ref), rtol=5e-2, atol=5e-2)
    print("KERNEL_OK")
</pallas_src>

<mosaic_0001>
module attributes {stable_mosaic.version = 11 : i64} {
  func.func @da2da_kernel(%arg0: i32, %arg1: i32, %arg2: memref<1x48x1xi32, #tpu.memory_space<vmem>>, %arg3: memref<1x48x1xi32, #tpu.memory_space<vmem>>, %arg4: memref<16x128xf32, #tpu.memory_space<vmem>>, %arg5: memref<1x1x128x256xbf16, #tpu.memory_space<vmem>>, %arg6: memref<1x1x128x128xbf16, #tpu.memory_space<vmem>>, %arg7: memref<1x1x128x128xbf16, #tpu.memory_space<vmem>>, %arg8: memref<1x1x6x128xf32, #tpu.memory_space<vmem>>, %arg9: memref<16x128xf32, #tpu.memory_space<vmem>>, %arg10: memref<16x128xf32, #tpu.memory_space<vmem>>) attributes {dimension_semantics = [#tpu.dimension_semantics<arbitrary>, #tpu.dimension_semantics<arbitrary>], iteration_bounds = array<i64: 2, 2>, scalar_prefetch = 0 : i64, scratch_operands = 1 : i64, tpu.core_type = #tpu.core_type<tc>, window_params = [{transform_indices = @transform_0, window_bounds = array<i64: 1, 48, 1>}, {transform_indices = @transform_1, window_bounds = array<i64: 1, 48, 1>}, {pipeline_mode = #tpu.pipeline_mode<synchronous>, transform_indices = @transform_2, window_bounds = array<i64: 16, 128>}, {transform_indices = @transform_3, window_bounds = array<i64: 1, 1, 128, 256>}, {transform_indices = @transform_4, window_bounds = array<i64: 1, 1, 128, 128>}, {transform_indices = @transform_5, window_bounds = array<i64: 1, 1, 128, 128>}, {transform_indices = @transform_6, window_bounds = array<i64: 1, 1, 6, 128>}, {pipeline_mode = #tpu.pipeline_mode<synchronous>, transform_indices = @transform_7, window_bounds = array<i64: 16, 128>}]} {
    %c0_i32 = arith.constant 0 : i32
    %0 = arith.cmpi eq, %arg0, %c0_i32 : i32
    %c0_i32_0 = arith.constant 0 : i32
    %1 = arith.cmpi eq, %arg1, %c0_i32_0 : i32
    %2 = arith.andi %0, %1 : i1
    %c1_i32 = arith.constant 1 : i32
    %3 = arith.cmpi eq, %arg0, %c1_i32 : i32
    %c1_i32_1 = arith.constant 1 : i32
    %4 = arith.cmpi eq, %arg1, %c1_i32_1 : i32
    %5 = arith.andi %3, %4 : i1
    %6 = arith.extui %2 : i1 to i32
    %c0_i32_2 = arith.constant 0 : i32
    %7 = arith.cmpi ne, %6, %c0_i32_2 : i32
    scf.if %7 {
      %c0_72 = arith.constant 0 : index
      %c0_73 = arith.constant 0 : index
      %226 = vector.load %arg4[%c0_72, %c0_73] : memref<16x128xf32, #tpu.memory_space<vmem>>, vector<16x128xf32>
      %c0_74 = arith.constant 0 : index
      %c0_75 = arith.constant 0 : index
      %227 = vector.load %arg10[%c0_74, %c0_75] : memref<16x128xf32, #tpu.memory_space<vmem>>, vector<16x128xf32>
      tpu.vector_store %arg10[%c0_74, %c0_75], %226 {strides = array<i32>} : memref<16x128xf32, #tpu.memory_space<vmem>>, vector<16x128xf32>,
    } else {
    }
    %c0 = arith.constant 0 : index
    %c0_3 = arith.constant 0 : index
    %8 = vector.load %arg10[%c0, %c0_3] : memref<16x128xf32, #tpu.memory_space<vmem>>, vector<16x128xf32>
    %c0_4 = arith.constant 0 : index
    %c0_5 = arith.constant 0 : index
    %c0_6 = arith.constant 0 : index
    %c0_7 = arith.constant 0 : index
    %9 = vector.load %arg8[%c0_4, %c0_5, %c0_6, %c0_7] : memref<1x1x6x128xf32, #tpu.memory_space<vmem>>, vector<1x1x6x128xf32>
    %10 = vector.shape_cast %9 : vector<1x1x6x128xf32> to vector<6x128xf32>
    %11 = vector.extract_strided_slice %10 {offsets = [0, 0], sizes = [1, 128], strides = [1, 1]} : vector<6x128xf32> to vector<1x128xf32>
    %12 = vector.extract_strided_slice %10 {offsets = [1, 0], sizes = [1, 128], strides = [1, 1]} : vector<6x128xf32> to vector<1x128xf32>
    %13 = vector.extract_strided_slice %10 {offsets = [2, 0], sizes = [1, 128], strides = [1, 1]} : vector<6x128xf32> to vector<1x128xf32>
    %14 = vector.extract_strided_slice %10 {offsets = [3, 0], sizes = [1, 128], strides = [1, 1]} : vector<6x128xf32> to vector<1x128xf32>
    %15 = vector.extract_strided_slice %10 {offsets = [4, 0], sizes = [1, 128], strides = [1, 1]} : vector<6x128xf32> to vector<1x128xf32>
    %16 = vector.extract_strided_slice %10 {offsets = [5, 0], sizes = [1, 128], strides = [1, 1]} : vector<6x128xf32> to vector<1x128xf32>
    %17 = arith.truncf %8 : vector<16x128xf32> to vector<16x128xbf16>
    %c0_8 = arith.constant 0 : index
    %c0_9 = arith.constant 0 : index
    %c0_10 = arith.constant 0 : index
    %c0_11 = arith.constant 0 : index
    %18 = vector.load %arg5[%c0_8, %c0_9, %c0_10, %c0_11] : memref<1x1x128x256xbf16, #tpu.memory_space<vmem>>, vector<1x1x128x256xbf16>
    %19 = vector.shape_cast %18 : vector<1x1x128x256xbf16> to vector<128x256xbf16>
    %cst = arith.constant dense<0.000000e+00> : vector<16x256xf32>
    %20 = tpu.matmul %17, %19, %cst {dimension_numbers = #tpu.dot_dimension_numbers<[1], [0], [0], [1], [0, 0, 1, 1], [], []>} : vector<16x128xbf16>, vector<128x256xbf16>, vector<16x256xf32> -> vector<16x256xf32>
    %21 = vector.extract_strided_slice %20 {offsets = [0, 0], sizes = [16, 128], strides = [1, 1]} : vector<16x256xf32> to vector<16x128xf32>
    %22 = vector.extract_strided_slice %20 {offsets = [0, 128], sizes = [16, 128], strides = [1, 1]} : vector<16x256xf32> to vector<16x128xf32>
    %cst_12 = arith.constant dense<0.000000e+00> : vector<16xf32>
    %23 = vector.multi_reduction <add>, %21, %cst_12 [1] : vector<16x128xf32> to vector<16xf32>
    %24 = vector.shape_cast %23 : vector<16xf32> to vector<16x1xf32>
    %cst_13 = arith.constant 1.280000e+02 : f32
    %25 = vector.broadcast %cst_13 : f32 to vector<16x1xf32>
    %26 = arith.divf %24, %25 : vector<16x1xf32>
    %27 = vector.broadcast %26 : vector<16x1xf32> to vector<16x128xf32>
    %28 = arith.subf %21, %27 : vector<16x128xf32>
    %29 = arith.mulf %28, %28 : vector<16x128xf32>
    %cst_14 = arith.constant dense<0.000000e+00> : vector<16xf32>
    %30 = vector.multi_reduction <add>, %29, %cst_14 [1] : vector<16x128xf32> to vector<16xf32>
    %31 = vector.shape_cast %30 : vector<16xf32> to vector<16x1xf32>
    %cst_15 = arith.constant 1.280000e+02 : f32
    %32 = vector.broadcast %cst_15 : f32 to vector<16x1xf32>
    %33 = arith.divf %31, %32 : vector<16x1xf32>
    %cst_16 = arith.constant 9.99999974E-6 : f32
    %34 = vector.broadcast %cst_16 : f32 to vector<16x1xf32>
    %35 = arith.addf %33, %34 : vector<16x1xf32>
    %36 = math.rsqrt %35 : vector<16x1xf32>
    %37 = vector.broadcast %36 : vector<16x1xf32> to vector<16x128xf32>
    %38 = arith.mulf %28, %37 : vector<16x128xf32>
    %39 = vector.broadcast %11 : vector<1x128xf32> to vector<16x128xf32>
    %40 = arith.mulf %38, %39 : vector<16x128xf32>
    %41 = vector.broadcast %12 : vector<1x128xf32> to vector<16x128xf32>
    %42 = arith.addf %40, %41 : vector<16x128xf32>
    %cst_17 = arith.constant 0.000000e+00 : f32
    %43 = vector.broadcast %cst_17 : f32 to vector<16x128xf32>
    %44 = arith.maximumf %42, %43 : vector<16x128xf32>
    %c0_18 = arith.constant 0 : index
    %c0_19 = arith.constant 0 : index
    %c0_20 = arith.constant 0 : index
    %45 = vector.load %arg2[%c0_18, %c0_19, %c0_20] : memref<1x48x1xi32, #tpu.memory_space<vmem>>, vector<1x48x1xi32>
    %46 = vector.shape_cast %45 : vector<1x48x1xi32> to vector<48x1xi32>
    %47 = tpu.iota {dimensions = array<i32: 1>} : vector<48x16xi32>
    %48 = vector.broadcast %46 : vector<48x1xi32> to vector<48x16xi32>
    %49 = arith.cmpi eq, %47, %48 : vector<48x16xi32>
    %50 = arith.extui %49 : vector<48x16xi1> to vector<48x16xi32>
    %51 = arith.sitofp %50 : vector<48x16xi32> to vector<48x16xf32>
    %52 = arith.truncf %51 : vector<48x16xf32> to vector<48x16xbf16>
    %53 = arith.truncf %44 : vector<16x128xf32> to vector<16x128xbf16>
    %cst_21 = arith.constant dense<0.000000e+00> : vector<48x128xf32>
    %54 = tpu.matmul %52, %53, %cst_21 {dimension_numbers = #tpu.dot_dimension_numbers<[1], [0], [0], [1], [0, 0, 1, 1], [], []>} : vector<48x16xbf16>, vector<16x128xbf16>, vector<48x128xf32> -> vector<48x128xf32>
    %c0_22 = arith.constant 0 : index
    %c0_23 = arith.constant 0 : index
    %c0_24 = arith.constant 0 : index
    %55 = vector.load %arg3[%c0_22, %c0_23, %c0_24] : memref<1x48x1xi32, #tpu.memory_space<vmem>>, vector<1x48x1xi32>
    %56 = vector.shape_cast %55 : vector<1x48x1xi32> to vector<48x1xi32>
    %57 = vector.shape_cast %56 : vector<48x1xi32> to vector<1x48x1xi32>
    %58 = tpu.iota {dimensions = array<i32: 0>} : vector<16x8x1xi32>
    %cst_25 = arith.constant -1.000000e+30 : f32
    %59 = vector.broadcast %cst_25 : f32 to vector<16x128xf32>
    %cst_26 = arith.constant 0.000000e+00 : f32
    %60 = vector.broadcast %cst_26 : f32 to vector<16x1xf32>
    %61 = vector.extract_strided_slice %57 {offsets = [0, 0, 0], sizes = [1, 8, 1], strides = [1, 1, 1]} : vector<1x48x1xi32> to vector<1x8x1xi32>
    %62 = vector.extract_strided_slice %54 {offsets = [0, 0], sizes = [8, 128], strides = [1, 1]} : vector<48x128xf32> to vector<8x128xf32>
    %63 = vector.shape_cast %62 : vector<8x128xf32> to vector<1x8x128xf32>
    %64 = vector.broadcast %61 : vector<1x8x1xi32> to vector<16x8x1xi32>
    %65 = arith.cmpi eq, %58, %64 : vector<16x8x1xi32>
    %cst_27 = arith.constant -1.000000e+30 : f32
    %66 = vector.shape_cast %65 : vector<16x8x1xi1> to vector<16x8x1xi1>
    %67 = vector.broadcast %66 : vector<16x8x1xi1> to vector<16x8x128xi1>
    %68 = vector.shape_cast %63 : vector<1x8x128xf32> to vector<1x8x128xf32>
    %69 = vector.broadcast %68 : vector<1x8x128xf32> to vector<16x8x128xf32>
    %70 = vector.broadcast %cst_27 : f32 to vector<16x8x128xf32>
    %71 = arith.select %67, %69, %70 : vector<16x8x128xi1>, vector<16x8x128xf32>
    %cst_28 = arith.constant dense<0xFF800000> : vector<16x128xf32>
    %72 = vector.multi_reduction <maximumf>, %71, %cst_28 [1] : vector<16x8x128xf32> to vector<16x128xf32>
    %73 = arith.maximumf %59, %72 : vector<16x128xf32>
    %74 = arith.extui %65 : vector<16x8x1xi1> to vector<16x8x1xi32>
    %75 = arith.sitofp %74 : vector<16x8x1xi32> to vector<16x8x1xf32>
    %cst_29 = arith.constant dense<0xFF800000> : vector<16x1xf32>
    %76 = vector.multi_reduction <maximumf>, %75, %cst_29 [1] : vector<16x8x1xf32> to vector<16x1xf32>
    %77 = arith.maximumf %60, %76 : vector<16x1xf32>
    %78 = vector.extract_strided_slice %57 {offsets = [0, 8, 0], sizes = [1, 8, 1], strides = [1, 1, 1]} : vector<1x48x1xi32> to vector<1x8x1xi32>
    %79 = vector.extract_strided_slice %54 {offsets = [8, 0], sizes = [8, 128], strides = [1, 1]} : vector<48x128xf32> to vector<8x128xf32>
    %80 = vector.shape_cast %79 : vector<8x128xf32> to vector<1x8x128xf32>
    %81 = vector.broadcast %78 : vector<1x8x1xi32> to vector<16x8x1xi32>
    %82 = arith.cmpi eq, %58, %81 : vector<16x8x1xi32>
    %cst_30 = arith.constant -1.000000e+30 : f32
    %83 = vector.shape_cast %82 : vector<16x8x1xi1> to vector<16x8x1xi1>
    %84 = vector.broadcast %83 : vector<16x8x1xi1> to vector<16x8x128xi1>
    %85 = vector.shape_cast %80 : vector<1x8x128xf32> to vector<1x8x128xf32>
    %86 = vector.broadcast %85 : vector<1x8x128xf32> to vector<16x8x128xf32>
    %87 = vector.broadcast %cst_30 : f32 to vector<16x8x128xf32>
    %88 = arith.select %84, %86, %87 : vector<16x8x128xi1>, vector<16x8x128xf32>
    %cst_31 = arith.constant dense<0xFF800000> : vector<16x128xf32>
    %89 = vector.multi_reduction <maximumf>, %88, %cst_31 [1] : vector<16x8x128xf32> to vector<16x128xf32>
    %90 = arith.maximumf %73, %89 : vector<16x128xf32>
    %91 = arith.extui %82 : vector<16x8x1xi1> to vector<16x8x1xi32>
    %92 = arith.sitofp %91 : vector<16x8x1xi32> to vector<16x8x1xf32>
    %cst_32 = arith.constant dense<0xFF800000> : vector<16x1xf32>
    %93 = vector.multi_reduction <maximumf>, %92, %cst_32 [1] : vector<16x8x1xf32> to vector<16x1xf32>
    %94 = arith.maximumf %77, %93 : vector<16x1xf32>
    %95 = vector.extract_strided_slice %57 {offsets = [0, 16, 0], sizes = [1, 8, 1], strides = [1, 1, 1]} : vector<1x48x1xi32> to vector<1x8x1xi32>
    %96 = vector.extract_strided_slice %54 {offsets = [16, 0], sizes = [8, 128], strides = [1, 1]} : vector<48x128xf32> to vector<8x128xf32>
    %97 = vector.shape_cast %96 : vector<8x128xf32> to vector<1x8x128xf32>
    %98 = vector.broadcast %95 : vector<1x8x1xi32> to vector<16x8x1xi32>
    %99 = arith.cmpi eq, %58, %98 : vector<16x8x1xi32>
    %cst_33 = arith.constant -1.000000e+30 : f32
    %100 = vector.shape_cast %99 : vector<16x8x1xi1> to vector<16x8x1xi1>
    %101 = vector.broadcast %100 : vector<16x8x1xi1> to vector<16x8x128xi1>
    %102 = vector.shape_cast %97 : vector<1x8x128xf32> to vector<1x8x128xf32>
    %103 = vector.broadcast %102 : vector<1x8x128xf32> to vector<16x8x128xf32>
    %104 = vector.broadcast %cst_33 : f32 to vector<16x8x128xf32>
    %105 = arith.select %101, %103, %104 : vector<16x8x128xi1>, vector<16x8x128xf32>
    %cst_34 = arith.constant dense<0xFF800000> : vector<16x128xf32>
    %106 = vector.multi_reduction <maximumf>, %105, %cst_34 [1] : vector<16x8x128xf32> to vector<16x128xf32>
    %107 = arith.maximumf %90, %106 : vector<16x128xf32>
    %108 = arith.extui %99 : vector<16x8x1xi1> to vector<16x8x1xi32>
    %109 = arith.sitofp %108 : vector<16x8x1xi32> to vector<16x8x1xf32>
    %cst_35 = arith.constant dense<0xFF800000> : vector<16x1xf32>
    %110 = vector.multi_reduction <maximumf>, %109, %cst_35 [1] : vector<16x8x1xf32> to vector<16x1xf32>
    %111 = arith.maximumf %94, %110 : vector<16x1xf32>
    %112 = vector.extract_strided_slice %57 {offsets = [0, 24, 0], sizes = [1, 8, 1], strides = [1, 1, 1]} : vector<1x48x1xi32> to vector<1x8x1xi32>
    %113 = vector.extract_strided_slice %54 {offsets = [24, 0], sizes = [8, 128], strides = [1, 1]} : vector<48x128xf32> to vector<8x128xf32>
    %114 = vector.shape_cast %113 : vector<8x128xf32> to vector<1x8x128xf32>
    %115 = vector.broadcast %112 : vector<1x8x1xi32> to vector<16x8x1xi32>
    %116 = arith.cmpi eq, %58, %115 : vector<16x8x1xi32>
    %cst_36 = arith.constant -1.000000e+30 : f32
    %117 = vector.shape_cast %116 : vector<16x8x1xi1> to vector<16x8x1xi1>
    %118 = vector.broadcast %117 : vector<16x8x1xi1> to vector<16x8x128xi1>
    %119 = vector.shape_cast %114 : vector<1x8x128xf32> to vector<1x8x128xf32>
    %120 = vector.broadcast %119 : vector<1x8x128xf32> to vector<16x8x128xf32>
    %121 = vector.broadcast %cst_36 : f32 to vector<16x8x128xf32>
    %122 = arith.select %118, %120, %121 : vector<16x8x128xi1>, vector<16x8x128xf32>
    %cst_37 = arith.constant dense<0xFF800000> : vector<16x128xf32>
    %123 = vector.multi_reduction <maximumf>, %122, %cst_37 [1] : vector<16x8x128xf32> to vector<16x128xf32>
    %124 = arith.maximumf %107, %123 : vector<16x128xf32>
    %125 = arith.extui %116 : vector<16x8x1xi1> to vector<16x8x1xi32>
    %126 = arith.sitofp %125 : vector<16x8x1xi32> to vector<16x8x1xf32>
    %cst_38 = arith.constant dense<0xFF800000> : vector<16x1xf32>
    %127 = vector.multi_reduction <maximumf>, %126, %cst_38 [1] : vector<16x8x1xf32> to vector<16x1xf32>
    %128 = arith.maximumf %111, %127 : vector<16x1xf32>
    %129 = vector.extract_strided_slice %57 {offsets = [0, 32, 0], sizes = [1, 8, 1], strides = [1, 1, 1]} : vector<1x48x1xi32> to vector<1x8x1xi32>
    %130 = vector.extract_strided_slice %54 {offsets = [32, 0], sizes = [8, 128], strides = [1, 1]} : vector<48x128xf32> to vector<8x128xf32>
    %131 = vector.shape_cast %130 : vector<8x128xf32> to vector<1x8x128xf32>
    %132 = vector.broadcast %129 : vector<1x8x1xi32> to vector<16x8x1xi32>
    %133 = arith.cmpi eq, %58, %132 : vector<16x8x1xi32>
    %cst_39 = arith.constant -1.000000e+30 : f32
    %134 = vector.shape_cast %133 : vector<16x8x1xi1> to vector<16x8x1xi1>
    %135 = vector.broadcast %134 : vector<16x8x1xi1> to vector<16x8x128xi1>
    %136 = vector.shape_cast %131 : vector<1x8x128xf32> to vector<1x8x128xf32>
    %137 = vector.broadcast %136 : vector<1x8x128xf32> to vector<16x8x128xf32>
    %138 = vector.broadcast %cst_39 : f32 to vector<16x8x128xf32>
    %139 = arith.select %135, %137, %138 : vector<16x8x128xi1>, vector<16x8x128xf32>
    %cst_40 = arith.constant dense<0xFF800000> : vector<16x128xf32>
    %140 = vector.multi_reduction <maximumf>, %139, %cst_40 [1] : vector<16x8x128xf32> to vector<16x128xf32>
    %141 = arith.maximumf %124, %140 : vector<16x128xf32>
    %142 = arith.extui %133 : vector<16x8x1xi1> to vector<16x8x1xi32>
    %143 = arith.sitofp %142 : vector<16x8x1xi32> to vector<16x8x1xf32>
    %cst_41 = arith.constant dense<0xFF800000> : vector<16x1xf32>
    %144 = vector.multi_reduction <maximumf>, %143, %cst_41 [1] : vector<16x8x1xf32> to vector<16x1xf32>
    %145 = arith.maximumf %128, %144 : vector<16x1xf32>
    %146 = vector.extract_strided_slice %57 {offsets = [0, 40, 0], sizes = [1, 8, 1], strides = [1, 1, 1]} : vector<1x48x1xi32> to vector<1x8x1xi32>
    %147 = vector.extract_strided_slice %54 {offsets = [40, 0], sizes = [8, 128], strides = [1, 1]} : vector<48x128xf32> to vector<8x128xf32>
    %148 = vector.shape_cast %147 : vector<8x128xf32> to vector<1x8x128xf32>
    %149 = vector.broadcast %146 : vector<1x8x1xi32> to vector<16x8x1xi32>
    %150 = arith.cmpi eq, %58, %149 : vector<16x8x1xi32>
    %cst_42 = arith.constant -1.000000e+30 : f32
    %151 = vector.shape_cast %150 : vector<16x8x1xi1> to vector<16x8x1xi1>
    %152 = vector.broadcast %151 : vector<16x8x1xi1> to vector<16x8x128xi1>
    %153 = vector.shape_cast %148 : vector<1x8x128xf32> to vector<1x8x128xf32>
    %154 = vector.broadcast %153 : vector<1x8x128xf32> to vector<16x8x128xf32>
    %155 = vector.broadcast %cst_42 : f32 to vector<16x8x128xf32>
    %156 = arith.select %152, %154, %155 : vector<16x8x128xi1>, vector<16x8x128xf32>
    %cst_43 = arith.constant dense<0xFF800000> : vector<16x128xf32>
    %157 = vector.multi_reduction <maximumf>, %156, %cst_43 [1] : vector<16x8x128xf32> to vector<16x128xf32>
    %158 = arith.maximumf %141, %157 : vector<16x128xf32>
    %159 = arith.extui %150 : vector<16x8x1xi1> to vector<16x8x1xi32>
    %160 = arith.sitofp %159 : vector<16x8x1xi32> to vector<16x8x1xf32>
    %cst_44 = arith.constant dense<0xFF800000> : vector<16x1xf32>
    %161 = vector.multi_reduction <maximumf>, %160, %cst_44 [1] : vector<16x8x1xf32> to vector<16x1xf32>
    %162 = arith.maximumf %145, %161 : vector<16x1xf32>
    %cst_45 = arith.constant 5.000000e-01 : f32
    %163 = vector.broadcast %cst_45 : f32 to vector<16x1xf32>
    %164 = arith.cmpf ogt, %162, %163 : vector<16x1xf32>
    %cst_46 = arith.constant 0.000000e+00 : f32
    %165 = vector.shape_cast %164 : vector<16x1xi1> to vector<16x1xi1>
    %166 = vector.broadcast %165 : vector<16x1xi1> to vector<16x128xi1>
    %167 = vector.broadcast %cst_46 : f32 to vector<16x128xf32>
    %168 = arith.select %166, %158, %167 : vector<16x128xi1>, vector<16x128xf32>
    %169 = arith.truncf %168 : vector<16x128xf32> to vector<16x128xbf16>
    %c0_47 = arith.constant 0 : index
    %c0_48 = arith.constant 0 : index
    %c0_49 = arith.constant 0 : index
    %c0_50 = arith.constant 0 : index
    %170 = vector.load %arg6[%c0_47, %c0_48, %c0_49, %c0_50] : memref<1x1x128x128xbf16, #tpu.memory_space<vmem>>, vector<1x1x128x128xbf16>
    %171 = vector.shape_cast %170 : vector<1x1x128x128xbf16> to vector<128x128xbf16>
    %cst_51 = arith.constant dense<0.000000e+00> : vector<16x128xf32>
    %172 = tpu.matmul %169, %171, %cst_51 {dimension_numbers = #tpu.dot_dimension_numbers<[1], [0], [0], [1], [0, 0, 1, 1], [], []>} : vector<16x128xbf16>, vector<128x128xbf16>, vector<16x128xf32> -> vector<16x128xf32>
    %173 = arith.addf %22, %172 : vector<16x128xf32>
    %cst_52 = arith.constant dense<0.000000e+00> : vector<16xf32>
    %174 = vector.multi_reduction <add>, %173, %cst_52 [1] : vector<16x128xf32> to vector<16xf32>
    %175 = vector.shape_cast %174 : vector<16xf32> to vector<16x1xf32>
    %cst_53 = arith.constant 1.280000e+02 : f32
    %176 = vector.broadcast %cst_53 : f32 to vector<16x1xf32>
    %177 = arith.divf %175, %176 : vector<16x1xf32>
    %178 = vector.broadcast %177 : vector<16x1xf32> to vector<16x128xf32>
    %179 = arith.subf %173, %178 : vector<16x128xf32>
    %180 = arith.mulf %179, %179 : vector<16x128xf32>
    %cst_54 = arith.constant dense<0.000000e+00> : vector<16xf32>
    %181 = vector.multi_reduction <add>, %180, %cst_54 [1] : vector<16x128xf32> to vector<16xf32>
    %182 = vector.shape_cast %181 : vector<16xf32> to vector<16x1xf32>
    %cst_55 = arith.constant 1.280000e+02 : f32
    %183 = vector.broadcast %cst_55 : f32 to vector<16x1xf32>
    %184 = arith.divf %182, %183 : vector<16x1xf32>
    %cst_56 = arith.constant 9.99999974E-6 : f32
    %185 = vector.broadcast %cst_56 : f32 to vector<16x1xf32>
    %186 = arith.addf %184, %185 : vector<16x1xf32>
    %187 = math.rsqrt %186 : vector<16x1xf32>
    %188 = vector.broadcast %187 : vector<16x1xf32> to vector<16x128xf32>
    %189 = arith.mulf %179, %188 : vector<16x128xf32>
    %190 = vector.broadcast %13 : vector<1x128xf32> to vector<16x128xf32>
    %191 = arith.mulf %189, %190 : vector<16x128xf32>
    %192 = vector.broadcast %14 : vector<1x128xf32> to vector<16x128xf32>
    %193 = arith.addf %191, %192 : vector<16x128xf32>
    %cst_57 = arith.constant 0.000000e+00 : f32
    %194 = vector.broadcast %cst_57 : f32 to vector<16x128xf32>
    %195 = arith.maximumf %193, %194 : vector<16x128xf32>
    %196 = arith.truncf %195 : vector<16x128xf32> to vector<16x128xbf16>
    %c0_58 = arith.constant 0 : index
    %c0_59 = arith.constant 0 : index
    %c0_60 = arith.constant 0 : index
    %c0_61 = arith.constant 0 : index
    %197 = vector.load %arg7[%c0_58, %c0_59, %c0_60, %c0_61] : memref<1x1x128x128xbf16, #tpu.memory_space<vmem>>, vector<1x1x128x128xbf16>
    %198 = vector.shape_cast %197 : vector<1x1x128x128xbf16> to vector<128x128xbf16>
    %cst_62 = arith.constant dense<0.000000e+00> : vector<16x128xf32>
    %199 = tpu.matmul %196, %198, %cst_62 {dimension_numbers = #tpu.dot_dimension_numbers<[1], [0], [0], [1], [0, 0, 1, 1], [], []>} : vector<16x128xbf16>, vector<128x128xbf16>, vector<16x128xf32> -> vector<16x128xf32>
    %cst_63 = arith.constant dense<0.000000e+00> : vector<16xf32>
    %200 = vector.multi_reduction <add>, %199, %cst_63 [1] : vector<16x128xf32> to vector<16xf32>
    %201 = vector.shape_cast %200 : vector<16xf32> to vector<16x1xf32>
    %cst_64 = arith.constant 1.280000e+02 : f32
    %202 = vector.broadcast %cst_64 : f32 to vector<16x1xf32>
    %203 = arith.divf %201, %202 : vector<16x1xf32>
    %204 = vector.broadcast %203 : vector<16x1xf32> to vector<16x128xf32>
    %205 = arith.subf %199, %204 : vector<16x128xf32>
    %206 = arith.mulf %205, %205 : vector<16x128xf32>
    %cst_65 = arith.constant dense<0.000000e+00> : vector<16xf32>
    %207 = vector.multi_reduction <add>, %206, %cst_65 [1] : vector<16x128xf32> to vector<16xf32>
    %208 = vector.shape_cast %207 : vector<16xf32> to vector<16x1xf32>
    %cst_66 = arith.constant 1.280000e+02 : f32
    %209 = vector.broadcast %cst_66 : f32 to vector<16x1xf32>
    %210 = arith.divf %208, %209 : vector<16x1xf32>
    %cst_67 = arith.constant 9.99999974E-6 : f32
    %211 = vector.broadcast %cst_67 : f32 to vector<16x1xf32>
    %212 = arith.addf %210, %211 : vector<16x1xf32>
    %213 = math.rsqrt %212 : vector<16x1xf32>
    %214 = vector.broadcast %213 : vector<16x1xf32> to vector<16x128xf32>
    %215 = arith.mulf %205, %214 : vector<16x128xf32>
    %216 = vector.broadcast %15 : vector<1x128xf32> to vector<16x128xf32>
    %217 = arith.mulf %215, %216 : vector<16x128xf32>
    %218 = vector.broadcast %16 : vector<1x128xf32> to vector<16x128xf32>
    %219 = arith.addf %217, %218 : vector<16x128xf32>
    %220 = arith.addf %219, %8 : vector<16x128xf32>
    %cst_68 = arith.constant 0.000000e+00 : f32
    %221 = vector.broadcast %cst_68 : f32 to vector<16x128xf32>
    %222 = arith.maximumf %220, %221 : vector<16x128xf32>
    %c0_69 = arith.constant 0 : index
    %c0_70 = arith.constant 0 : index
    %223 = vector.load %arg10[%c0_69, %c0_70] : memref<16x128xf32, #tpu.memory_space<vmem>>, vector<16x128xf32>
    tpu.vector_store %arg10[%c0_69, %c0_70], %222 {strides = array<i32>} : memref<16x128xf32, #tpu.memory_space<vmem>>, vector<16x128xf32>,
    %224 = arith.extui %5 : i1 to i32
    %c0_i32_71 = arith.constant 0 : i32
    %225 = arith.cmpi ne, %224, %c0_i32_71 : i32
    scf.if %225 {
      %c0_72 = arith.constant 0 : index
      %c0_73 = arith.constant 0 : index
      %226 = vector.load %arg9[%c0_72, %c0_73] : memref<16x128xf32, #tpu.memory_space<vmem>>, vector<16x128xf32>
      tpu.vector_store %arg9[%c0_72, %c0_73], %222 {strides = array<i32>} : memref<16x128xf32, #tpu.memory_space<vmem>>, vector<16x128xf32>,
    } else {
    }
    return
  }
  func.func @transform_0(%arg0: i32, %arg1: i32) -> (i32, i32, i32) {
    %c0_i32 = arith.constant 0 : i32
    %c0_i32_0 = arith.constant 0 : i32
    %c0_i32_1 = arith.constant 0 : i32
    return %arg1, %c0_i32, %c0_i32_0 : i32, i32, i32
  }
  func.func @transform_1(%arg0: i32, %arg1: i32) -> (i32, i32, i32) {
    %c0_i32 = arith.constant 0 : i32
    %c0_i32_0 = arith.constant 0 : i32
    %c0_i32_1 = arith.constant 0 : i32
    return %arg1, %c0_i32, %c0_i32_0 : i32, i32, i32
  }
  func.func @transform_2(%arg0: i32, %arg1: i32) -> (i32, i32) {
    %c0_i32 = arith.constant 0 : i32
    %c0_i32_0 = arith.constant 0 : i32
    %c0_i32_1 = arith.constant 0 : i32
    return %c0_i32, %c0_i32_0 : i32, i32
  }
  func.func @transform_3(%arg0: i32, %arg1: i32) -> (i32, i32, i32, i32) {
    %c0_i32 = arith.constant 0 : i32
    %c0_i32_0 = arith.constant 0 : i32
    %c0_i32_1 = arith.constant 0 : i32
    return %arg0, %arg1, %c0_i32, %c0_i32_0 : i32, i32, i32, i32
  }
  func.func @transform_4(%arg0: i32, %arg1: i32) -> (i32, i32, i32, i32) {
    %c0_i32 = arith.constant 0 : i32
    %c0_i32_0 = arith.constant 0 : i32
    %c0_i32_1 = arith.constant 0 : i32
    return %arg0, %arg1, %c0_i32, %c0_i32_0 : i32, i32, i32, i32
  }
  func.func @transform_5(%arg0: i32, %arg1: i32) -> (i32, i32, i32, i32) {
    %c0_i32 = arith.constant 0 : i32
    %c0_i32_0 = arith.constant 0 : i32
    %c0_i32_1 = arith.constant 0 : i32
    return %arg0, %arg1, %c0_i32, %c0_i32_0 : i32, i32, i32, i32
  }
  func.func @transform_6(%arg0: i32, %arg1: i32) -> (i32, i32, i32, i32) {
    %c0_i32 = arith.constant 0 : i32
    %c0_i32_0 = arith.constant 0 : i32
    %c0_i32_1 = arith.constant 0 : i32
    return %arg0, %arg1, %c0_i32, %c0_i32_0 : i32, i32, i32, i32
  }
  func.func @transform_7(%arg0: i32, %arg1: i32) -> (i32, i32) {
    %c0_i32 = arith.constant 0 : i32
    %c0_i32_0 = arith.constant 0 : i32
    %c0_i32_1 = arith.constant 0 : i32
    return %c0_i32, %c0_i32_0 : i32, i32
  }
}

</mosaic_0001>

<llo_original>
// kernel: da2da_forward.1
$region0: #{da2da_forward.1}
  #allocation0 [shape = 'u32[]', space=smem, size = 0x4, offset = 0x4, fixed_abs, tag = 'smem constant byte address 0x4 - core index']
  #allocation1 [shape = 'u32[144,128]{1,0:T(1,128)}', space=vmem, size = 0x12000, scoped, tag = 'internal scratch']
  #allocation2 [shape = 'f32[16,128]{1,0:T(8,128)}', space=vmem, size = 0x2000, scoped, tag = 'scratch operand']
  %s0 = inlined_call_operand.vmem [shape: s32[2,48,1], index: 0, kind: input, shape index: {}]
  %s1 = inlined_call_operand.vmem [shape: s32[2,48,1], index: 1, kind: input, shape index: {}]
  %s2 = inlined_call_operand.hbm [shape: f32[16,128], index: 2, kind: input, shape index: {}, may-alias: {2,7}]
  %s3 = inlined_call_operand.hbm [shape: bf16[2,2,128,256], index: 3, kind: input, shape index: {}]
  %s4 = inlined_call_operand.vmem [shape: bf16[2,2,128,128], index: 4, kind: input, shape index: {}]
  %s5 = inlined_call_operand.hbm [shape: bf16[2,2,128,128], index: 5, kind: input, shape index: {}]
  %s6 = inlined_call_operand.vmem [shape: f32[2,2,6,128], index: 6, kind: input, shape index: {}]
  %s7 = inlined_call_operand.hbm [shape: f32[16,128], index: 7, kind: output, shape index: {}, may-alias: {2,7}]
  %s8 = sld [smem:[#allocation0]]
  $region81: #{da2da_forward.1} parent=0
    _
  %s10 = ssub.s32 1, %s8
  %s11 = scalar_select 0, %s10, %s8
  $region1: #{da2da_forward.1} parent=0
    #allocation3 [shape = 'u8[8192]{0}', space=vmem, size = 0x2000, scoped, tag = 'input window, operand 2, single buffered']
    #allocation4 [shape = 's32[2]{0}', space=sflag, size = 0x8, scoped, tag = 'scoped memory for da2da_forward.1']
    #allocation5 [shape = 's32[2]{0}', space=sflag, size = 0x8, scoped, tag = 'scoped memory for da2da_forward.1']
    #allocation6 [shape = 'u8[131072]{0}', space=vmem, size = 0x20000, scoped, tag = 'input window, operand 3']
    #allocation7 [shape = 's32[2]{0}', space=sflag, size = 0x8, scoped, tag = 'scoped memory for da2da_forward.1']
    #allocation8 [shape = 'u8[65536]{0}', space=vmem, size = 0x10000, scoped, tag = 'input window, operand 5']
    #allocation9 [shape = 'u8[8192]{0}', space=vmem, size = 0x2000, scoped, tag = 'output window, operand 0, single buffered']
    %12 = vsyncpa [#allocation4], 0
    %13 = vsyncpa [#allocation7], 0
    %s14 = scalar_lea.sflag [#allocation7], 1
    %15 = vsyncpa %s14, 0
    %16 = vsyncpa [#allocation5], 0
    loop: start=0, step=1, limit=6
    $region2: #{da2da_forward.1} parent=1 // loop_pre_header
      _
    $region3: #{da2da_forward.1} parent=1 // loop_header
      %s18 = sphi 0, %s22
      %p19 = scmp.ge.s32.totalorder %s18, 6
      %s25 = sphi 0, %s37
      %s26 = sphi 0, %s33
      %s27 = sphi 0, %s25
      %s28 = sphi 0, %s26
      %s29 = sphi 0, %s27
      %s30 = sphi 0, %s28
      %s40 = sphi 0, %s42
      %s43 = sphi 0, %s40
      %s44 = sphi 0, %s43
      %s60 = sphi 0, %s44
      %s66 = sphi 0, %s68
      %s69 = sphi 0, %s66
      %s70 = sphi 0, %s69
      %s86 = sphi 0, %s70
      %s90 = sphi 0, %s90
      %s92 = sphi 0, %s90
      %s93 = sphi 0, %s92
      %s107 = sphi 0, %s93
      %s115 = sphi 0, %s117
      %s118 = sphi 0, %s115
      %s119 = sphi 0, %s118
      %s135 = sphi 0, %s119
      %s143 = sphi 0, %s145
      %s146 = sphi 0, %s143
      %s147 = sphi 0, %s146
      %s163 = sphi 0, %s147
      %s171 = sphi 0, %s173
      %s174 = sphi 0, %s171
      %s175 = sphi 0, %s174
      %s191 = sphi 0, %s175
      %s199 = sphi 0, %s201
      %s202 = sphi 0, %s199
      %s203 = sphi 0, %s202
      %s219 = sphi 0, %s203
      %s223 = sphi 0, %s223
      %s225 = sphi 0, %s223
      %s226 = sphi 0, %s225
      %s240 = sphi 0, %s226
    $region4: #{da2da_forward.1} parent=1 // loop_header_branch
      %21 = sbr.rel (%p19) target = $region8
    $region5: #{da2da_forward.1} parent=1 // loop_body
      %s23 = ssub.s32 %s18, 1
      %s24 = ssub.s32 %s18, 2
      %s31 = sadd.s32 1, %s26
      %p32 = scmp.ge.s32.totalorder %s31, 2
      %s33 = scalar_select %p32, 0, %s31
      %s34 = sadd.s32 1, %s25
      %s35 = scalar_select %p32, %s34, %s25
      %p36 = scmp.ge.s32.totalorder %s35, 2
      %s37 = scalar_select %p36, 0, %s35
      %s38 = ssub.s32 %s26, %s33
      %p39 = scmp.eq.s32.totalorder %s38, 0
      %s41 = sadd.s32 %s40, 1
      %s42 = scalar_select %p39, %s40, %s41
      %p45 = pneg %p39
      %p46 = scmp.eq.s32.totalorder %s18, 3
      %p47 = por %p45, %p46
      %p48 = scmp.ne.s32.totalorder %s40, %s43
      %p49 = scmp.eq.s32.totalorder %s18, 0
      %p50 = por %p48, %p49
      %p51 = scmp.ne.s32.totalorder %s40, %s43
      %p52 = scmp.eq.s32.totalorder %s23, 3
      %p53 = por %p51, %p52
      %p54 = scmp.ne.s32.totalorder %s43, %s44
      %p55 = scmp.eq.s32.totalorder %s23, 0
      %p56 = por %p54, %p55
      %p57 = scmp.ne.s32.totalorder %s43, %s44
      %p58 = scmp.eq.s32.totalorder %s24, 3
      %p59 = por %p57, %p58
      %p61 = scmp.ne.s32.totalorder %s44, %s60
      %p62 = scmp.eq.s32.totalorder %s24, 0
      %p63 = por %p61, %p62
      %s64 = ssub.s32 %s26, %s33
      %p65 = scmp.eq.s32.totalorder %s64, 0
      %s67 = sadd.s32 %s66, 1
      %s68 = scalar_select %p65, %s66, %s67
      %p71 = pneg %p65
      %p72 = scmp.eq.s32.totalorder %s18, 3
      %p73 = por %p71, %p72
      %p74 = scmp.ne.s32.totalorder %s66, %s69
      %p75 = scmp.eq.s32.totalorder %s18, 0
      %p76 = por %p74, %p75
      %p77 = scmp.ne.s32.totalorder %s66, %s69
      %p78 = scmp.eq.s32.totalorder %s23, 3
      %p79 = por %p77, %p78
      %p80 = scmp.ne.s32.totalorder %s69, %s70
      %p81 = scmp.eq.s32.totalorder %s23, 0
      %p82 = por %p80, %p81
      %p83 = scmp.ne.s32.totalorder %s69, %s70
      %p84 = scmp.eq.s32.totalorder %s24, 3
      %p85 = por %p83, %p84
      %p87 = scmp.ne.s32.totalorder %s70, %s86
      %p88 = scmp.eq.s32.totalorder %s24, 0
      %p89 = por %p87, %p88
      %s91 = sadd.s32 %s90, 1
      %p94 = scmp.eq.s32.totalorder %s18, 3
      %p95 = scmp.ne.s32.totalorder %s90, %s92
      %p96 = scmp.eq.s32.totalorder %s18, 0
      %p97 = por %p95, %p96
      %p98 = scmp.ne.s32.totalorder %s90, %s92
      %p99 = scmp.eq.s32.totalorder %s23, 3
      %p100 = por %p98, %p99
      %p101 = scmp.ne.s32.totalorder %s92, %s93
      %p102 = scmp.eq.s32.totalorder %s23, 0
      %p103 = por %p101, %p102
      %p104 = scmp.ne.s32.totalorder %s92, %s93
      %p105 = scmp.eq.s32.totalorder %s24, 3
      %p106 = por %p104, %p105
      %p108 = scmp.ne.s32.totalorder %s93, %s107
      %p109 = scmp.eq.s32.totalorder %s24, 0
      %p110 = por %p108, %p109
      %s111 = ssub.s32 %s25, %s37
      %s112 = ssub.s32 %s26, %s33
      %s113 = sor.u32 %s111, %s112
      %p114 = scmp.eq.s32.totalorder %s113, 0
      %s116 = sadd.s32 %s115, 1
      %s117 = scalar_select %p114, %s115, %s116
      %p120 = pneg %p114
      %p121 = scmp.eq.s32.totalorder %s18, 3
      %p122 = por %p120, %p121
      %p123 = scmp.ne.s32.totalorder %s115, %s118
      %p124 = scmp.eq.s32.totalorder %s18, 0
      %p125 = por %p123, %p124
      %p126 = scmp.ne.s32.totalorder %s115, %s118
      %p127 = scmp.eq.s32.totalorder %s23, 3
      %p128 = por %p126, %p127
      %p129 = scmp.ne.s32.totalorder %s118, %s119
      %p130 = scmp.eq.s32.totalorder %s23, 0
      %p131 = por %p129, %p130
      %p132 = scmp.ne.s32.totalorder %s118, %s119
      %p133 = scmp.eq.s32.totalorder %s24, 3
      %p134 = por %p132, %p133
      %p136 = scmp.ne.s32.totalorder %s119, %s135
      %p137 = scmp.eq.s32.totalorder %s24, 0
      %p138 = por %p136, %p137
      %s139 = ssub.s32 %s25, %s37
      %s140 = ssub.s32 %s26, %s33
      %s141 = sor.u32 %s139, %s140
      %p142 = scmp.eq.s32.totalorder %s141, 0
      %s144 = sadd.s32 %s143, 1
      %s145 = scalar_select %p142, %s143, %s144
      %p148 = pneg %p142
      %p149 = scmp.eq.s32.totalorder %s18, 3
      %p150 = por %p148, %p149
      %p151 = scmp.ne.s32.totalorder %s143, %s146
      %p152 = scmp.eq.s32.totalorder %s18, 0
      %p153 = por %p151, %p152
      %p154 = scmp.ne.s32.totalorder %s143, %s146
      %p155 = scmp.eq.s32.totalorder %s23, 3
      %p156 = por %p154, %p155
      %p157 = scmp.ne.s32.totalorder %s146, %s147
      %p158 = scmp.eq.s32.totalorder %s23, 0
      %p159 = por %p157, %p158
      %p160 = scmp.ne.s32.totalorder %s146, %s147
      %p161 = scmp.eq.s32.totalorder %s24, 3
      %p162 = por %p160, %p161
      %p164 = scmp.ne.s32.totalorder %s147, %s163
      %p165 = scmp.eq.s32.totalorder %s24, 0
      %p166 = por %p164, %p165
      %s167 = ssub.s32 %s25, %s37
      %s168 = ssub.s32 %s26, %s33
      %s169 = sor.u32 %s167, %s168
      %p170 = scmp.eq.s32.totalorder %s169, 0
      %s172 = sadd.s32 %s171, 1
      %s173 = scalar_select %p170, %s171, %s172
      %p176 = pneg %p170
      %p177 = scmp.eq.s32.totalorder %s18, 3
      %p178 = por %p176, %p177
      %p179 = scmp.ne.s32.totalorder %s171, %s174
      %p180 = scmp.eq.s32.totalorder %s18, 0
      %p181 = por %p179, %p180
      %p182 = scmp.ne.s32.totalorder %s171, %s174
      %p183 = scmp.eq.s32.totalorder %s23, 3
      %p184 = por %p182, %p183
      %p185 = scmp.ne.s32.totalorder %s174, %s175
      %p186 = scmp.eq.s32.totalorder %s23, 0
      %p187 = por %p185, %p186
      %p188 = scmp.ne.s32.totalorder %s174, %s175
      %p189 = scmp.eq.s32.totalorder %s24, 3
      %p190 = por %p188, %p189
      %p192 = scmp.ne.s32.totalorder %s175, %s191
      %p193 = scmp.eq.s32.totalorder %s24, 0
      %p194 = por %p192, %p193
      %s195 = ssub.s32 %s25, %s37
      %s196 = ssub.s32 %s26, %s33
      %s197 = sor.u32 %s195, %s196
      %p198 = scmp.eq.s32.totalorder %s197, 0
      %s200 = sadd.s32 %s199, 1
      %s201 = scalar_select %p198, %s199, %s200
      %p204 = pneg %p198
      %p205 = scmp.eq.s32.totalorder %s18, 3
      %p206 = por %p204, %p205
      %p207 = scmp.ne.s32.totalorder %s199, %s202
      %p208 = scmp.eq.s32.totalorder %s18, 0
      %p209 = por %p207, %p208
      %p210 = scmp.ne.s32.totalorder %s199, %s202
      %p211 = scmp.eq.s32.totalorder %s23, 3
      %p212 = por %p210, %p211
      %p213 = scmp.ne.s32.totalorder %s202, %s203
      %p214 = scmp.eq.s32.totalorder %s23, 0
      %p215 = por %p213, %p214
      %p216 = scmp.ne.s32.totalorder %s202, %s203
      %p217 = scmp.eq.s32.totalorder %s24, 3
      %p218 = por %p216, %p217
      %p220 = scmp.ne.s32.totalorder %s203, %s219
      %p221 = scmp.eq.s32.totalorder %s24, 0
      %p222 = por %p220, %p221
      %s224 = sadd.s32 %s223, 1
      %p227 = scmp.eq.s32.totalorder %s18, 3
      %p228 = scmp.ne.s32.totalorder %s223, %s225
      %p229 = scmp.eq.s32.totalorder %s18, 0
      %p230 = por %p228, %p229
      %p231 = scmp.ne.s32.totalorder %s223, %s225
      %p232 = scmp.eq.s32.totalorder %s23, 3
      %p233 = por %p231, %p232
      %p234 = scmp.ne.s32.totalorder %s225, %s226
      %p235 = scmp.eq.s32.totalorder %s23, 0
      %p236 = por %p234, %p235
      %p237 = scmp.ne.s32.totalorder %s225, %s226
      %p238 = scmp.eq.s32.totalorder %s24, 3
      %p239 = por %p237, %p238
      %p241 = scmp.ne.s32.totalorder %s226, %s240
      %p242 = scmp.eq.s32.totalorder %s24, 0
      %p243 = por %p241, %p242
      %p244 = scmp.le.s32.totalorder 1, %s18
      %p245 = scmp.lt.s32.totalorder %s18, 5
      %p246 = pnand %p244, %p245
      %p247 = pneg %p246
      // Predicated region
      $region9: #{da2da_forward.1} parent=5 // pred_check
        _
      $region10: #{da2da_forward.1} parent=5 // pred_check_branch
        %249 = sbr.rel (%p246) target = $region12
      $region11: #{da2da_forward.1} parent=5 // pred_region
        %s250 = ssub.s32 %s18, 1
        // Predicated region
        $region13: #{da2da_forward.1} parent=11 // pred_check
          %p251 = pneg %p103
        $region14: #{da2da_forward.1} parent=11 // pred_check_branch
          %253 = sbr.rel (%p251) target = $region16
        $region15: #{da2da_forward.1} parent=11 // pred_region
          %s255 = ssub.s32 256, 256
          %256 = vsyncadd [#allocation4], %s255
          %s257 = sshll.u32 [#allocation3], 4
          %s258 = int_to_ptr.vmem [resolvable:$true] %s257
          %263 = dma.hbm_to_vmem [thread:$0]  %s2, 256, %s258, [#allocation4], 128, 128, 8
        $region16: #{da2da_forward.1} parent=11 // pred_fallthru
          _
      $region12: #{da2da_forward.1} parent=5 // pred_fallthru
        _
      %p264 = scmp.lt.s32.totalorder %s18, 4
      // Predicated region
      $region17: #{da2da_forward.1} parent=5 // pred_check
        %p265 = pneg %p264
      $region18: #{da2da_forward.1} parent=5 // pred_check_branch
        %267 = sbr.rel (%p265) target = $region20
      $region19: #{da2da_forward.1} parent=5 // pred_region
        // Predicated region
        $region21: #{da2da_forward.1} parent=19 // pred_check
          %p268 = pneg %p50
        $region22: #{da2da_forward.1} parent=19 // pred_check_branch
          %270 = sbr.rel (%p268) target = $region24
        $region23: #{da2da_forward.1} parent=19 // pred_region
          %p271 = scmp.lt.s32.totalorder %s26, 1
          %s272 = scalar_select %p271, %s26, 1
          %s273 = smul.addr %s272, 6
          %s274 = smul.addr %s273, 8
          %s275 = scalar_lea.vmem %s0, %s274
        $region24: #{da2da_forward.1} parent=19 // pred_fallthru
          _
        // Predicated region
        $region25: #{da2da_forward.1} parent=19 // pred_check
          %p276 = pneg %p76
        $region26: #{da2da_forward.1} parent=19 // pred_check_branch
          %278 = sbr.rel (%p276) target = $region28
        $region27: #{da2da_forward.1} parent=19 // pred_region
          %p279 = scmp.lt.s32.totalorder %s26, 1
          %s280 = scalar_select %p279, %s26, 1
          %s281 = smul.addr %s280, 6
          %s282 = smul.addr %s281, 8
          %s283 = scalar_lea.vmem %s1, %s282
        $region28: #{da2da_forward.1} parent=19 // pred_fallthru
          _
        // Predicated region
        $region29: #{da2da_forward.1} parent=19 // pred_check
          %p284 = pneg %p125
        $region30: #{da2da_forward.1} parent=19 // pred_check_branch
          %286 = sbr.rel (%p284) target = $region32
        $region31: #{da2da_forward.1} parent=19 // pred_region
          %s287 = sand.u32 %s18, 1
          %s288 = scalar_lea.sflag [#allocation7], %s287
          %s289 = sand.u32 %s115, 1
          %s290 = smul.addr %s289, 128
          %s291 = scalar_lea.vmem [#allocation6], %s290
          %s293 = ssub.s32 2048, 2048
          %294 = vsyncadd %s288, %s293
          %s295 = smul.addr %s26, 32
          %s296 = smul.addr %s25, 64
          %s297 = sadd.s32 %s295, %s296
          %s298 = smul.addr %s297, 64
          %s299 = scalar_lea.hbm %s3, %s298
          %s300 = sshll.u32 %s291, 4
          %s301 = int_to_ptr.vmem [resolvable:$true] %s300
          %306 = dma.hbm_to_vmem [thread:$0]  %s299, 2048, %s301, %s288, 128, 128, 8
        $region32: #{da2da_forward.1} parent=19 // pred_fallthru
          _
        // Predicated region
        $region33: #{da2da_forward.1} parent=19 // pred_check
          %p307 = pneg %p153
        $region34: #{da2da_forward.1} parent=19 // pred_check_branch
          %309 = sbr.rel (%p307) target = $region36
        $region35: #{da2da_forward.1} parent=19 // pred_region
          %p310 = scmp.lt.s32.totalorder %s25, 1
          %s311 = scalar_select %p310, %s25, 1
          %p312 = scmp.lt.s32.totalorder %s26, 1
          %s313 = scalar_select %p312, %s26, 1
          %s314 = smul.addr %s313, 16
          %s315 = smul.addr %s311, 32
          %s316 = sadd.s32 %s314, %s315
          %s317 = smul.addr %s316, 4
          %s318 = scalar_lea.vmem %s4, %s317
        $region36: #{da2da_forward.1} parent=19 // pred_fallthru
          _
        // Predicated region
        $region37: #{da2da_forward.1} parent=19 // pred_check
          %p319 = pneg %p181
        $region38: #{da2da_forward.1} parent=19 // pred_check_branch
          %321 = sbr.rel (%p319) target = $region40
        $region39: #{da2da_forward.1} parent=19 // pred_region
          %s322 = sand.u32 %s18, 1
          %s323 = scalar_lea.sflag [#allocation7], %s322
          %s324 = sand.u32 %s171, 1
          %s325 = smul.addr %s324, 64
          %s326 = scalar_lea.vmem [#allocation8], %s325
          %s328 = ssub.s32 1024, 1024
          %329 = vsyncadd %s323, %s328
          %s330 = smul.addr %s26, 16
          %s331 = smul.addr %s25, 32
          %s332 = sadd.s32 %s330, %s331
          %s333 = smul.addr %s332, 64
          %s334 = scalar_lea.hbm %s5, %s333
          %s335 = sshll.u32 %s326, 4
          %s336 = int_to_ptr.vmem [resolvable:$true] %s335
          %341 = dma.hbm_to_vmem [thread:$0]  %s334, 1024, %s336, %s323, 64, 64, 4
        $region40: #{da2da_forward.1} parent=19 // pred_fallthru
          _
        // Predicated region
        $region41: #{da2da_forward.1} parent=19 // pred_check
          %p342 = pneg %p209
        $region42: #{da2da_forward.1} parent=19 // pred_check_branch
          %344 = sbr.rel (%p342) target = $region44
        $region43: #{da2da_forward.1} parent=19 // pred_region
          %p345 = scmp.lt.s32.totalorder %s25, 1
          %s346 = scalar_select %p345, %s25, 1
          %p347 = scmp.lt.s32.totalorder %s26, 1
          %s348 = scalar_select %p347, %s26, 1
          %s349 = smul.addr %s346, 2
          %s350 = sadd.s32 %s348, %s349
          %s351 = smul.addr %s350, 8
          %s352 = scalar_lea.vmem %s6, %s351
        $region44: #{da2da_forward.1} parent=19 // pred_fallthru
          _
      $region20: #{da2da_forward.1} parent=5 // pred_fallthru
        _
      %p353 = scmp.le.s32.totalorder 1, %s18
      %p354 = scmp.lt.s32.totalorder %s18, 5
      %p355 = pnand %p353, %p354
      %p356 = pneg %p355
      // Predicated region
      $region45: #{da2da_forward.1} parent=5 // pred_check
        _
      $region46: #{da2da_forward.1} parent=5 // pred_check_branch
        %358 = sbr.rel (%p355) target = $region48
      $region47: #{da2da_forward.1} parent=5 // pred_region
        %s359 = ssub.s32 %s18, 1
        // Predicated region
        $region49: #{da2da_forward.1} parent=47 // pred_check
          %p360 = pneg %p103
        $region50: #{da2da_forward.1} parent=47 // pred_check_branch
          %362 = sbr.rel (%p360) target = $region52
        $region51: #{da2da_forward.1} parent=47 // pred_region
          %363 = dma.done [#allocation4], 256
        $region52: #{da2da_forward.1} parent=47 // pred_fallthru
          _
        %s364 = sand.u32 %s23, 1
        %s365 = scalar_lea.sflag [#allocation7], %s364
        %s366 = sand.u32 %s118, 1
        %s367 = smul.addr %s366, 128
        %s368 = scalar_lea.vmem [#allocation6], %s367
        // Predicated region
        $region53: #{da2da_forward.1} parent=47 // pred_check
          %p369 = pneg %p131
        $region54: #{da2da_forward.1} parent=47 // pred_check_branch
          %371 = sbr.rel (%p369) target = $region56
        $region55: #{da2da_forward.1} parent=47 // pred_region
          %372 = dma.done %s365, 2048
        $region56: #{da2da_forward.1} parent=47 // pred_fallthru
          _
        %s373 = sand.u32 %s23, 1
        %s374 = scalar_lea.sflag [#allocation7], %s373
        %s375 = sand.u32 %s174, 1
        %s376 = smul.addr %s375, 64
        %s377 = scalar_lea.vmem [#allocation8], %s376
        // Predicated region
        $region57: #{da2da_forward.1} parent=47 // pred_check
          %p378 = pneg %p187
        $region58: #{da2da_forward.1} parent=47 // pred_check_branch
          %380 = sbr.rel (%p378) target = $region60
        $region59: #{da2da_forward.1} parent=47 // pred_region
          %381 = dma.done %s374, 1024
        $region60: #{da2da_forward.1} parent=47 // pred_fallthru
          _
        %p382 = scmp.lt.s32.totalorder %s28, 1
        %s383 = scalar_select %p382, %s28, 1
        %s384 = smul.addr %s383, 6
        %s385 = smul.addr %s384, 8
        %s386 = scalar_lea.vmem %s0, %s385
        %p387 = pneg %p56
        %p388 = pneg %p53
        %p389 = scmp.lt.s32.totalorder %s28, 1
        %s390 = scalar_select %p389, %s28, 1
        %s391 = smul.addr %s390, 6
        %s392 = smul.addr %s391, 8
        %s393 = scalar_lea.vmem %s1, %s392
        %p394 = pneg %p82
        %p395 = pneg %p79
        %p396 = pneg %p103
        %p397 = pneg %p100
        %s398 = sand.u32 %s23, 1
        %s399 = scalar_lea.sflag [#allocation7], %s398
        %s400 = sand.u32 %s118, 1
        %s401 = smul.addr %s400, 128
        %s402 = scalar_lea.vmem [#allocation6], %s401
        %p403 = pneg %p131
        %p404 = pneg %p128
        %p405 = scmp.lt.s32.totalorder %s27, 1
        %s406 = scalar_select %p405, %s27, 1
        %p407 = scmp.lt.s32.totalorder %s28, 1
        %s408 = scalar_select %p407, %s28, 1
        %s409 = smul.addr %s408, 16
        %s410 = smul.addr %s406, 32
        %s411 = sadd.s32 %s409, %s410
        %s412 = smul.addr %s411, 4
        %s413 = scalar_lea.vmem %s4, %s412
        %p414 = pneg %p159
        %p415 = pneg %p156
        %s416 = sand.u32 %s23, 1
        %s417 = scalar_lea.sflag [#allocation7], %s416
        %s418 = sand.u32 %s174, 1
        %s419 = smul.addr %s418, 64
        %s420 = scalar_lea.vmem [#allocation8], %s419
        %p421 = pneg %p187
        %p422 = pneg %p184
        %p423 = scmp.lt.s32.totalorder %s27, 1
        %s424 = scalar_select %p423, %s27, 1
        %p425 = scmp.lt.s32.totalorder %s28, 1
        %s426 = scalar_select %p425, %s28, 1
        %s427 = smul.addr %s424, 2
        %s428 = sadd.s32 %s426, %s427
        %s429 = smul.addr %s428, 8
        %s430 = scalar_lea.vmem %s6, %s429
        %p431 = pneg %p215
        %p432 = pneg %p212
        %p433 = pneg %p236
        %p434 = pneg %p233
        %p435 = scmp.lt.s32.totalorder %s28, 1
        %s436 = scalar_select %p435, %s28, 1
        %s437 = smul.addr %s436, 6
        %s438 = smul.addr %s437, 8
        %s439 = scalar_lea.vmem %s0, %s438
        %p440 = scmp.lt.s32.totalorder %s28, 1
        %s441 = scalar_select %p440, %s28, 1
        %s442 = smul.addr %s441, 6
        %s443 = smul.addr %s442, 8
        %s444 = scalar_lea.vmem %s1, %s443
        %p445 = scmp.lt.s32.totalorder %s27, 1
        %s446 = scalar_select %p445, %s27, 1
        %p447 = scmp.lt.s32.totalorder %s28, 1
        %s448 = scalar_select %p447, %s28, 1
        %s449 = smul.addr %s448, 16
        %s450 = smul.addr %s446, 32
        %s451 = sadd.s32 %s449, %s450
        %s452 = smul.addr %s451, 4
        %s453 = scalar_lea.vmem %s4, %s452
        %p454 = scmp.lt.s32.totalorder %s27, 1
        %s455 = scalar_select %p454, %s27, 1
        %p456 = scmp.lt.s32.totalorder %s28, 1
        %s457 = scalar_select %p456, %s28, 1
        %s458 = smul.addr %s455, 2
        %s459 = sadd.s32 %s457, %s458
        %s460 = smul.addr %s459, 8
        %s461 = scalar_lea.vmem %s6, %s460
        %p463 = scmp.eq.s32.totalorder %s27, 0
        %p464 = scmp.eq.s32.totalorder %s28, 0
        %p465 = pnand %p463, %p464
        %p466 = pneg %p465
        %p467 = scmp.eq.s32.totalorder %s27, 1
        %p468 = scmp.eq.s32.totalorder %s28, 1
        %p469 = pnand %p467, %p468
        %p470 = pneg %p469
        // Predicated region
        $region61: #{da2da_forward.1} parent=47 // pred_check
          _
        $region62: #{da2da_forward.1} parent=47 // pred_check_branch
          %472 = sbr.rel (%p465) target = $region64
        $region63: #{da2da_forward.1} parent=47 // pred_region
          %v473 = vld [vmem:[#allocation3] sm:$0xff]
          %v474 = vld [vmem:[#allocation3 + $0x8] sm:$0xff]
          %475 = vst [vmem:[#allocation2] sm:$0xff] %v473
          %476 = vst [vmem:[#allocation2 + $0x8] sm:$0xff] %v474
        $region64: #{da2da_forward.1} parent=47 // pred_fallthru
          _
        %v477 = vld [vmem:[#allocation2] sm:$0xff]
        %v478 = vld [vmem:[#allocation2 + $0x8] sm:$0xff]
        %v479 = vld [vmem:[%s461] sm:$0x3f]
        %v480 = vpack.c.bf16 %v478, %v477
        %v481 = vld [vmem:[%s368] sm:$0xff]
        %v482 = vld [vmem:[%s368 + $0x8] sm:$0xff]
        %v483 = vld [vmem:[%s368 + $0x10] sm:$0xff]
        %v484 = vld [vmem:[%s368 + $0x18] sm:$0xff]
        %v485 = vld [vmem:[%s368 + $0x20] sm:$0xff]
        %v486 = vld [vmem:[%s368 + $0x28] sm:$0xff]
        %v487 = vld [vmem:[%s368 + $0x30] sm:$0xff]
        %v488 = vld [vmem:[%s368 + $0x38] sm:$0xff]
        %v489 = vld [vmem:[%s368 + $0x40] sm:$0xff]
        %v490 = vld [vmem:[%s368 + $0x48] sm:$0xff]
        %v491 = vld [vmem:[%s368 + $0x50] sm:$0xff]
        %v492 = vld [vmem:[%s368 + $0x58] sm:$0xff]
        %v493 = vld [vmem:[%s368 + $0x60] sm:$0xff]
        %v494 = vld [vmem:[%s368 + $0x68] sm:$0xff]
        %v495 = vld [vmem:[%s368 + $0x70] sm:$0xff]
        %v496 = vld [vmem:[%s368 + $0x78] sm:$0xff]
        %v513 = vunpack.c.l.b16 %v481
        %v514 = vunpack.c.h.b16 %v481
        %v515 = vunpack.c.l.b16 %v482
        %v516 = vunpack.c.h.b16 %v482
        %v517 = vunpack.c.l.b16 %v483
        %v518 = vunpack.c.h.b16 %v483
        %v519 = vunpack.c.l.b16 %v484
        %v520 = vunpack.c.h.b16 %v484
        %v521 = vunpack.c.l.b16 %v485
        %v522 = vunpack.c.h.b16 %v485
        %v523 = vunpack.c.l.b16 %v486
        %v524 = vunpack.c.h.b16 %v486
        %v525 = vunpack.c.l.b16 %v487
        %v526 = vunpack.c.h.b16 %v487
        %v527 = vunpack.c.l.b16 %v488
        %v528 = vunpack.c.h.b16 %v488
        %v529 = vunpack.c.l.b16 %v489
        %v530 = vunpack.c.h.b16 %v489
        %v531 = vunpack.c.l.b16 %v490
        %v532 = vunpack.c.h.b16 %v490
        %v533 = vunpack.c.l.b16 %v491
        %v534 = vunpack.c.h.b16 %v491
        %v535 = vunpack.c.l.b16 %v492
        %v536 = vunpack.c.h.b16 %v492
        %v537 = vunpack.c.l.b16 %v493
        %v538 = vunpack.c.h.b16 %v493
        %v539 = vunpack.c.l.b16 %v494
        %v540 = vunpack.c.h.b16 %v494
        %v541 = vunpack.c.l.b16 %v495
        %v542 = vunpack.c.h.b16 %v495
        %v543 = vunpack.c.l.b16 %v496
        %v544 = vunpack.c.h.b16 %v496
        %v545 = vpack.c.b16 %v515, %v513
        %v546 = vpack.c.b16 %v516, %v514
        %v547 = vpack.c.b16 %v519, %v517
        %v548 = vpack.c.b16 %v520, %v518
        %v549 = vpack.c.b16 %v523, %v521
        %v550 = vpack.c.b16 %v524, %v522
        %v551 = vpack.c.b16 %v527, %v525
        %v552 = vpack.c.b16 %v528, %v526
        %v553 = vpack.c.b16 %v531, %v529
        %v554 = vpack.c.b16 %v532, %v530
        %v555 = vpack.c.b16 %v535, %v533
        %v556 = vpack.c.b16 %v536, %v534
        %v557 = vpack.c.b16 %v539, %v537
        %v558 = vpack.c.b16 %v540, %v538
        %v559 = vpack.c.b16 %v543, %v541
        %v560 = vpack.c.b16 %v544, %v542
        %577 = vmatprep.subr.bf16.mxu0 %v546
        %578 = vmatpush1.bf16.msra.mxu0 %v545
        %579 = vmatprep.subr.bf16.mxu0 %v548
        %580 = vmatpush1.bf16.msra.mxu0 %v547
        %581 = vmatprep.subr.bf16.mxu0 %v550
        %582 = vmatpush1.bf16.msra.mxu0 %v549
        %583 = vmatprep.subr.bf16.mxu0 %v552
        %584 = vmatpush1.bf16.msra.mxu0 %v551
        %585 = vmatprep.subr.bf16.mxu0 %v554
        %586 = vmatpush1.bf16.msra.mxu0 %v553
        %587 = vmatprep.subr.bf16.mxu0 %v556
        %588 = vmatpush1.bf16.msra.mxu0 %v555
        %589 = vmatprep.subr.bf16.mxu0 %v558
        %590 = vmatpush1.bf16.msra.mxu0 %v557
        %591 = vmatprep.subr.bf16.mxu0 %v560
        %592 = vmatpush1.bf16.msra.mxu0 %v559
        %593 = vmatprep.subr.bf16.mxu0 0
        %594 = vmatpush1.bf16.msra.mxu0 0
        %595 = vmatprep.subr.bf16.mxu0 0
        %596 = vmatpush1.bf16.msra.mxu0 0
        %597 = vmatprep.subr.bf16.mxu0 0
        %598 = vmatpush1.bf16.msra.mxu0 0
        %599 = vmatprep.subr.bf16.mxu0 0
        %600 = vmatpush1.bf16.msra.mxu0 0
        %601 = vmatprep.subr.bf16.mxu0 0
        %602 = vmatpush1.bf16.msra.mxu0 0
        %603 = vmatprep.subr.bf16.mxu0 0
        %604 = vmatpush1.bf16.msra.mxu0 0
        %605 = vmatprep.subr.bf16.mxu0 0
        %606 = vmatpush1.bf16.msra.mxu0 0
        %607 = vmatprep.subr.bf16.mxu0 0
        %608 = vmatpush1.bf16.msra.mxu0 0
        %609 = vmatprep.mubr.bf16.mxu0 0
        %610 = vmatmul.mubr.bf16.gmra.mrb[0].mxu0 %v480
        %v611 = vpop.f32.mrb[0].mxu0
        %v612 = vadd.f32 0.0, %v611
        %v613 = vpop.f32.mrb[0].mxu0
        %v614 = vadd.f32 0.0, %v613
        %v615 = vpop.f32.mrb[0].mxu0
        %v616 = vadd.f32 0.0, %v615
        %v617 = vpop.f32.mrb[0].mxu0
        %v618 = vadd.f32 0.0, %v617
        %619 = vdwg.mxu0
        %620 = vadd.xlane.f32.xlu0 %v612
        %v621 = vpop.xlane.xlu0 %620
        %622 = vadd.xlane.f32.xlu0 %v616
        %v623 = vpop.xlane.xlu0 %622
        %v624 = vrcp.pop 128.0
        %v625 = vmul.f32 %v621, %v624
        %v626 = vmul.f32 %v623, %v624
        %v627 = vsub.f32 %v612, %v625
        %v628 = vsub.f32 %v616, %v626
        %v629 = vmul.f32 %v627, %v627
        %v630 = vmul.f32 %v628, %v628
        %631 = vadd.xlane.f32.xlu0 %v629
        %v632 = vpop.xlane.xlu0 %631
        %633 = vadd.xlane.f32.xlu0 %v630
        %v634 = vpop.xlane.xlu0 %633
        %v635 = vmul.f32 %v632, %v624
        %v636 = vmul.f32 %v634, %v624
        %v637 = vadd.f32 %v635, 1e-05
        %v638 = vadd.f32 %v636, 1e-05
        %v639 = vrsqrt.pop %v637
        %v640 = vrsqrt.pop %v638
        %v641 = vmul.f32 %v627, %v639
        %v642 = vmul.f32 %v628, %v640
        %v643 = vlaneseq
        %v644 = vshrl.u32 %v643, 7
        %v645 = vsub.s32 0, %v644
        %v646 = vrot.slane %v479, %v645
        %v647 = vmul.f32 %v641, %v646
        %v648 = vmul.f32 %v642, %v646
        %v649 = vlaneseq
        %v650 = vshrl.u32 %v649, 7
        %v651 = vsub.s32 1, %v650
        %v652 = vrot.slane %v479, %v651
        %v653 = vadd.f32 %v647, %v652
        %v654 = vadd.f32 %v648, %v652
        %v655 = vmax.f32 %v653, 0.0
        %v656 = vmax.f32 %v654, 0.0
        %v657 = vld [vmem:[%s439] sm:$0xff]
        %v658 = vld [vmem:[%s439 + $0x8] sm:$0xff]
        %v659 = vld [vmem:[%s439 + $0x10] sm:$0xff]
        %v660 = vld [vmem:[%s439 + $0x18] sm:$0xff]
        %v661 = vld [vmem:[%s439 + $0x20] sm:$0xff]
        %v662 = vld [vmem:[%s439 + $0x28] sm:$0xff]
        %v663 = vlaneseq
        %v664 = vand.u32 %v663, 127
        %665 = vset.pattern.permute.xlu0 0
        %666 = vperm.xlu0 %665, %v657
        %v667 = vpop.permute.xlu0 %666
        %668 = vset.pattern.permute.xlu0 0
        %669 = vperm.xlu0 %668, %v658
        %v670 = vpop.permute.xlu0 %669
        %671 = vset.pattern.permute.xlu0 0
        %672 = vperm.xlu0 %671, %v659
        %v673 = vpop.permute.xlu0 %672
        %674 = vset.pattern.permute.xlu0 0
        %675 = vperm.xlu0 %674, %v660
        %v676 = vpop.permute.xlu0 %675
        %677 = vset.pattern.permute.xlu0 0
        %678 = vperm.xlu0 %677, %v661
        %v679 = vpop.permute.xlu0 %678
        %680 = vset.pattern.permute.xlu0 0
        %681 = vperm.xlu0 %680, %v662
        %v682 = vpop.permute.xlu0 %681
        %vm683 = vcmp.eq.s32.totalorder %v664, %v667
        %vm684 = vcmp.eq.s32.totalorder %v664, %v670
        %vm685 = vcmp.eq.s32.totalorder %v664, %v673
        %vm686 = vcmp.eq.s32.totalorder %v664, %v676
        %vm687 = vcmp.eq.s32.totalorder %v664, %v679
        %vm688 = vcmp.eq.s32.totalorder %v664, %v682
        %v689 = vsel %vm683, 1, 0
        %v690 = vsel %vm684, 1, 0
        %v691 = vsel %vm685, 1, 0
        %v692 = vsel %vm686, 1, 0
        %v693 = vsel %vm687, 1, 0
        %v694 = vsel %vm688, 1, 0
        %v695 = vcvt.s32.f32 %v689
        %v696 = vcvt.s32.f32 %v690
        %v697 = vcvt.s32.f32 %v691
        %v698 = vcvt.s32.f32 %v692
        %v699 = vcvt.s32.f32 %v693
        %v700 = vcvt.s32.f32 %v694
        %v701 = vpack.c.bf16 %v696, %v695
        %v702 = vpack.c.bf16 %v698, %v697
        %v703 = vpack.c.bf16 %v700, %v699
        %v704 = vpack.c.bf16 %v656, %v655
        %vm705 = vcmask 130048
        %v707 = vsel %vm705, %v701, 0
        %v710 = vsel %vm705, %v702, 0
        %v713 = vsel %vm705, %v703, 0
        %715 = vmatprep.subr.bf16.mxu0 0
        %716 = vmatpush1.bf16.msra.mxu0 %v704
        %717 = vmatprep.subr.bf16.mxu0 0
        %718 = vmatpush1.bf16.msra.mxu0 0
        %719 = vmatprep.subr.bf16.mxu0 0
        %720 = vmatpush1.bf16.msra.mxu0 0
        %721 = vmatprep.subr.bf16.mxu0 0
        %722 = vmatpush1.bf16.msra.mxu0 0
        %723 = vmatprep.subr.bf16.mxu0 0
        %724 = vmatpush1.bf16.msra.mxu0 0
        %725 = vmatprep.subr.bf16.mxu0 0
        %726 = vmatpush1.bf16.msra.mxu0 0
        %727 = vmatprep.subr.bf16.mxu0 0
        %728 = vmatpush1.bf16.msra.mxu0 0
        %729 = vmatprep.subr.bf16.mxu0 0
        %730 = vmatpush1.bf16.msra.mxu0 0
        %731 = vmatprep.subr.bf16.mxu0 0
        %732 = vmatpush1.bf16.msra.mxu0 0
        %733 = vmatprep.subr.bf16.mxu0 0
        %734 = vmatpush1.bf16.msra.mxu0 0
        %735 = vmatprep.subr.bf16.mxu0 0
        %736 = vmatpush1.bf16.msra.mxu0 0
        %737 = vmatprep.subr.bf16.mxu0 0
        %738 = vmatpush1.bf16.msra.mxu0 0
        %739 = vmatprep.subr.bf16.mxu0 0
        %740 = vmatpush1.bf16.msra.mxu0 0
        %741 = vmatprep.subr.bf16.mxu0 0
        %742 = vmatpush1.bf16.msra.mxu0 0
        %743 = vmatprep.subr.bf16.mxu0 0
        %744 = vmatpush1.bf16.msra.mxu0 0
        %745 = vmatprep.subr.bf16.mxu0 0
        %746 = vmatpush1.bf16.msra.mxu0 0
        %747 = vmatprep.mubr.bf16.mxu0 0
        %748 = vmatmul.mubr.bf16.gmra.mrb[0].mxu0 %v707
        %v749 = vpop.f32.mrb[0].mxu0
        %v750 = vadd.f32 0.0, %v749
        %v751 = vpop.f32.mrb[0].mxu0
        %v752 = vpop.f32.mrb[0].mxu0
        %v753 = vadd.f32 0.0, %v752
        %v754 = vpop.f32.mrb[0].mxu0
        %755 = vmatprep.mubr.bf16.mxu0 0
        %756 = vmatmul.mubr.bf16.gmra.mrb[0].mxu0 %v710
        %v757 = vpop.f32.mrb[0].mxu0
        %v758 = vadd.f32 0.0, %v757
        %v759 = vpop.f32.mrb[0].mxu0
        %v760 = vpop.f32.mrb[0].mxu0
        %v761 = vadd.f32 0.0, %v760
        %v762 = vpop.f32.mrb[0].mxu0
        %763 = vmatprep.mubr.bf16.mxu0 0
        %764 = vmatmul.mubr.bf16.gmra.mrb[0].mxu0 %v713
        %v765 = vpop.f32.mrb[0].mxu0
        %v766 = vadd.f32 0.0, %v765
        %v767 = vpop.f32.mrb[0].mxu0
        %v768 = vpop.f32.mrb[0].mxu0
        %v769 = vadd.f32 0.0, %v768
        %v770 = vpop.f32.mrb[0].mxu0
        %771 = vdwg.mxu0
        %v772 = vld [vmem:[%s444] sm:$0xff]
        %v773 = vld [vmem:[%s444 + $0x8] sm:$0xff]
        %v774 = vld [vmem:[%s444 + $0x10] sm:$0xff]
        %v775 = vld [vmem:[%s444 + $0x18] sm:$0xff]
        %v776 = vld [vmem:[%s444 + $0x20] sm:$0xff]
        %v777 = vld [vmem:[%s444 + $0x28] sm:$0xff]
        %vm778 = vcmp.eq.s32.totalorder %v772, 0
        %vm779 = vcmp.eq.s32.totalorder %v772, 1
        %vm780 = vcmp.eq.s32.totalorder %v772, 2
        %vm781 = vcmp.eq.s32.totalorder %v772, 3
        %vm782 = vcmp.eq.s32.totalorder %v772, 4
        %vm783 = vcmp.eq.s32.totalorder %v772, 5
        %vm784 = vcmp.eq.s32.totalorder %v772, 6
        %vm785 = vcmp.eq.s32.totalorder %v772, 7
        %vm786 = vcmp.eq.s32.totalorder %v772, 8
        %vm787 = vcmp.eq.s32.totalorder %v772, 9
        %vm788 = vcmp.eq.s32.totalorder %v772, 10
        %vm789 = vcmp.eq.s32.totalorder %v772, 11
        %vm790 = vcmp.eq.s32.totalorder %v772, 12
        %vm791 = vcmp.eq.s32.totalorder %v772, 13
        %vm792 = vcmp.eq.s32.totalorder %v772, 14
        %vm793 = vcmp.eq.s32.totalorder %v772, 15
        %v794 = vsel %vm778, 1, 0
        %v795 = vsel %vm779, 1, 0
        %v796 = vsel %vm780, 1, 0
        %v797 = vsel %vm781, 1, 0
        %v798 = vsel %vm782, 1, 0
        %v799 = vsel %vm783, 1, 0
        %v800 = vsel %vm784, 1, 0
        %v801 = vsel %vm785, 1, 0
        %v802 = vsel %vm786, 1, 0
        %v803 = vsel %vm787, 1, 0
        %v804 = vsel %vm788, 1, 0
        %v805 = vsel %vm789, 1, 0
        %v806 = vsel %vm790, 1, 0
        %v807 = vsel %vm791, 1, 0
        %v808 = vsel %vm792, 1, 0
        %v809 = vsel %vm793, 1, 0
        %810 = vset.pattern.permute.xlu0 0
        %811 = vperm.xlu0 %810, %v794
        %v812 = vpop.permute.xlu0 %811
        %813 = vset.pattern.permute.xlu0 0
        %814 = vperm.xlu0 %813, %v795
        %v815 = vpop.permute.xlu0 %814
        %816 = vset.pattern.permute.xlu0 0
        %817 = vperm.xlu0 %816, %v796
        %v818 = vpop.permute.xlu0 %817
        %819 = vset.pattern.permute.xlu0 0
        %820 = vperm.xlu0 %819, %v797
        %v821 = vpop.permute.xlu0 %820
        %822 = vset.pattern.permute.xlu0 0
        %823 = vperm.xlu0 %822, %v798
        %v824 = vpop.permute.xlu0 %823
        %825 = vset.pattern.permute.xlu0 0
        %826 = vperm.xlu0 %825, %v799
        %v827 = vpop.permute.xlu0 %826
        %828 = vset.pattern.permute.xlu0 0
        %829 = vperm.xlu0 %828, %v800
        %v830 = vpop.permute.xlu0 %829
        %831 = vset.pattern.permute.xlu0 0
        %832 = vperm.xlu0 %831, %v801
        %v833 = vpop.permute.xlu0 %832
        %834 = vset.pattern.permute.xlu0 0
        %835 = vperm.xlu0 %834, %v802
        %v836 = vpop.permute.xlu0 %835
        %837 = vset.pattern.permute.xlu0 0
        %838 = vperm.xlu0 %837, %v803
        %v839 = vpop.permute.xlu0 %838
        %840 = vset.pattern.permute.xlu0 0
        %841 = vperm.xlu0 %840, %v804
        %v842 = vpop.permute.xlu0 %841
        %843 = vset.pattern.permute.xlu0 0
        %844 = vperm.xlu0 %843, %v805
        %v845 = vpop.permute.xlu0 %844
        %846 = vset.pattern.permute.xlu0 0
        %847 = vperm.xlu0 %846, %v806
        %v848 = vpop.permute.xlu0 %847
        %849 = vset.pattern.permute.xlu0 0
        %850 = vperm.xlu0 %849, %v807
        %v851 = vpop.permute.xlu0 %850
        %852 = vset.pattern.permute.xlu0 0
        %853 = vperm.xlu0 %852, %v808
        %v854 = vpop.permute.xlu0 %853
        %855 = vset.pattern.permute.xlu0 0
        %856 = vperm.xlu0 %855, %v809
        %v857 = vpop.permute.xlu0 %856
        %vm858 = vcmp.eq.s32.totalorder %v812, 1
        %vm859 = vcmp.eq.s32.totalorder %v815, 1
        %vm860 = vcmp.eq.s32.totalorder %v818, 1
        %vm861 = vcmp.eq.s32.totalorder %v821, 1
        %vm862 = vcmp.eq.s32.totalorder %v824, 1
        %vm863 = vcmp.eq.s32.totalorder %v827, 1
        %vm864 = vcmp.eq.s32.totalorder %v830, 1
        %vm865 = vcmp.eq.s32.totalorder %v833, 1
        %vm866 = vcmp.eq.s32.totalorder %v836, 1
        %vm867 = vcmp.eq.s32.totalorder %v839, 1
        %vm868 = vcmp.eq.s32.totalorder %v842, 1
        %vm869 = vcmp.eq.s32.totalorder %v845, 1
        %vm870 = vcmp.eq.s32.totalorder %v848, 1
        %vm871 = vcmp.eq.s32.totalorder %v851, 1
        %vm872 = vcmp.eq.s32.totalorder %v854, 1
        %vm873 = vcmp.eq.s32.totalorder %v857, 1
        %v874 = vsel %vm858, %v750, -1e+30
        %v875 = vsel %vm859, %v750, -1e+30
        %v876 = vsel %vm860, %v750, -1e+30
        %v877 = vsel %vm861, %v750, -1e+30
        %v878 = vsel %vm862, %v750, -1e+30
        %v879 = vsel %vm863, %v750, -1e+30
        %v880 = vsel %vm864, %v750, -1e+30
        %v881 = vsel %vm865, %v750, -1e+30
        %v882 = vsel %vm866, %v750, -1e+30
        %v883 = vsel %vm867, %v750, -1e+30
        %v884 = vsel %vm868, %v750, -1e+30
        %v885 = vsel %vm869, %v750, -1e+30
        %v886 = vsel %vm870, %v750, -1e+30
        %v887 = vsel %vm871, %v750, -1e+30
        %v888 = vsel %vm872, %v750, -1e+30
        %v889 = vsel %vm873, %v750, -1e+30
        %v890 = vrot.slane %v874, 4
        %v891 = vmax.f32 %v874, %v890
        %v892 = vrot.slane %v891, 2
        %v893 = vmax.f32 %v891, %v892
        %v894 = vrot.slane %v893, 1
        %v895 = vmax.f32 %v893, %v894
        %v896 = vrot.slane %v875, 4
        %v897 = vmax.f32 %v875, %v896
        %v898 = vrot.slane %v897, 2
        %v899 = vmax.f32 %v897, %v898
        %v900 = vrot.slane %v899, 1
        %v901 = vmax.f32 %v899, %v900
        %v902 = vrot.slane %v876, 4
        %v903 = vmax.f32 %v876, %v902
        %v904 = vrot.slane %v903, 2
        %v905 = vmax.f32 %v903, %v904
        %v906 = vrot.slane %v905, 1
        %v907 = vmax.f32 %v905, %v906
        %v908 = vrot.slane %v877, 4
        %v909 = vmax.f32 %v877, %v908
        %v910 = vrot.slane %v909, 2
        %v911 = vmax.f32 %v909, %v910
        %v912 = vrot.slane %v911, 1
        %v913 = vmax.f32 %v911, %v912
        %v914 = vrot.slane %v878, 4
        %v915 = vmax.f32 %v878, %v914
        %v916 = vrot.slane %v915, 2
        %v917 = vmax.f32 %v915, %v916
        %v918 = vrot.slane %v917, 1
        %v919 = vmax.f32 %v917, %v918
        %v920 = vrot.slane %v879, 4
        %v921 = vmax.f32 %v879, %v920
        %v922 = vrot.slane %v921, 2
        %v923 = vmax.f32 %v921, %v922
        %v924 = vrot.slane %v923, 1
        %v925 = vmax.f32 %v923, %v924
        %v926 = vrot.slane %v880, 4
        %v927 = vmax.f32 %v880, %v926
        %v928 = vrot.slane %v927, 2
        %v929 = vmax.f32 %v927, %v928
        %v930 = vrot.slane %v929, 1
        %v931 = vmax.f32 %v929, %v930
        %v932 = vrot.slane %v881, 4
        %v933 = vmax.f32 %v881, %v932
        %v934 = vrot.slane %v933, 2
        %v935 = vmax.f32 %v933, %v934
        %v936 = vrot.slane %v935, 1
        %v937 = vmax.f32 %v935, %v936
        %v938 = vrot.slane %v882, 4
        %v939 = vmax.f32 %v882, %v938
        %v940 = vrot.slane %v939, 2
        %v941 = vmax.f32 %v939, %v940
        %v942 = vrot.slane %v941, 1
        %v943 = vmax.f32 %v941, %v942
        %v944 = vrot.slane %v883, 4
        %v945 = vmax.f32 %v883, %v944
        %v946 = vrot.slane %v945, 2
        %v947 = vmax.f32 %v945, %v946
        %v948 = vrot.slane %v947, 1
        %v949 = vmax.f32 %v947, %v948
        %v950 = vrot.slane %v884, 4
        %v951 = vmax.f32 %v884, %v950
        %v952 = vrot.slane %v951, 2
        %v953 = vmax.f32 %v951, %v952
        %v954 = vrot.slane %v953, 1
        %v955 = vmax.f32 %v953, %v954
        %v956 = vrot.slane %v885, 4
        %v957 = vmax.f32 %v885, %v956
        %v958 = vrot.slane %v957, 2
        %v959 = vmax.f32 %v957, %v958
        %v960 = vrot.slane %v959, 1
        %v961 = vmax.f32 %v959, %v960
        %v962 = vrot.slane %v886, 4
        %v963 = vmax.f32 %v886, %v962
        %v964 = vrot.slane %v963, 2
        %v965 = vmax.f32 %v963, %v964
        %v966 = vrot.slane %v965, 1
        %v967 = vmax.f32 %v965, %v966
        %v968 = vrot.slane %v887, 4
        %v969 = vmax.f32 %v887, %v968
        %v970 = vrot.slane %v969, 2
        %v971 = vmax.f32 %v969, %v970
        %v972 = vrot.slane %v971, 1
        %v973 = vmax.f32 %v971, %v972
        %v974 = vrot.slane %v888, 4
        %v975 = vmax.f32 %v888, %v974
        %v976 = vrot.slane %v975, 2
        %v977 = vmax.f32 %v975, %v976
        %v978 = vrot.slane %v977, 1
        %v979 = vmax.f32 %v977, %v978
        %v980 = vrot.slane %v889, 4
        %v981 = vmax.f32 %v889, %v980
        %v982 = vrot.slane %v981, 2
        %v983 = vmax.f32 %v981, %v982
        %v984 = vrot.slane %v983, 1
        %v985 = vmax.f32 %v983, %v984
        %v986 = vmax.f32 %v895, -1e+30
        %v987 = vmax.f32 %v901, -1e+30
        %v988 = vmax.f32 %v907, -1e+30
        %v989 = vmax.f32 %v913, -1e+30
        %v990 = vmax.f32 %v919, -1e+30
        %v991 = vmax.f32 %v925, -1e+30
        %v992 = vmax.f32 %v931, -1e+30
        %v993 = vmax.f32 %v937, -1e+30
        %v994 = vmax.f32 %v943, -1e+30
        %v995 = vmax.f32 %v949, -1e+30
        %v996 = vmax.f32 %v955, -1e+30
        %v997 = vmax.f32 %v961, -1e+30
        %v998 = vmax.f32 %v967, -1e+30
        %v999 = vmax.f32 %v973, -1e+30
        %v1000 = vmax.f32 %v979, -1e+30
        %v1001 = vmax.f32 %v985, -1e+30
        %v1002 = vcvt.s32.f32 %v794
        %v1003 = vcvt.s32.f32 %v795
        %v1004 = vcvt.s32.f32 %v796
        %v1005 = vcvt.s32.f32 %v797
        %v1006 = vcvt.s32.f32 %v798
        %v1007 = vcvt.s32.f32 %v799
        %v1008 = vcvt.s32.f32 %v800
        %v1009 = vcvt.s32.f32 %v801
        %v1010 = vcvt.s32.f32 %v802
        %v1011 = vcvt.s32.f32 %v803
        %v1012 = vcvt.s32.f32 %v804
        %v1013 = vcvt.s32.f32 %v805
        %v1014 = vcvt.s32.f32 %v806
        %v1015 = vcvt.s32.f32 %v807
        %v1016 = vcvt.s32.f32 %v808
        %v1017 = vcvt.s32.f32 %v809
        %vm1018 = vcmask 7168
        %v1019 = vsel %vm1018, %v1002, -inf
        %v1020 = vrot.slane %v1019, 4
        %v1021 = vmax.f32 %v1019, %v1020
        %v1022 = vrot.slane %v1021, 2
        %v1023 = vmax.f32 %v1021, %v1022
        %v1024 = vrot.slane %v1023, 1
        %v1025 = vmax.f32 %v1023, %v1024
        %v1026 = vsel %vm1018, %v1003, -inf
        %v1027 = vrot.slane %v1026, 4
        %v1028 = vmax.f32 %v1026, %v1027
        %v1029 = vrot.slane %v1028, 2
        %v1030 = vmax.f32 %v1028, %v1029
        %v1031 = vrot.slane %v1030, 1
        %v1032 = vmax.f32 %v1030, %v1031
        %v1033 = vsel %vm1018, %v1004, -inf
        %v1034 = vrot.slane %v1033, 4
        %v1035 = vmax.f32 %v1033, %v1034
        %v1036 = vrot.slane %v1035, 2
        %v1037 = vmax.f32 %v1035, %v1036
        %v1038 = vrot.slane %v1037, 1
        %v1039 = vmax.f32 %v1037, %v1038
        %v1040 = vsel %vm1018, %v1005, -inf
        %v1041 = vrot.slane %v1040, 4
        %v1042 = vmax.f32 %v1040, %v1041
        %v1043 = vrot.slane %v1042, 2
        %v1044 = vmax.f32 %v1042, %v1043
        %v1045 = vrot.slane %v1044, 1
        %v1046 = vmax.f32 %v1044, %v1045
        %v1047 = vsel %vm1018, %v1006, -inf
        %v1048 = vrot.slane %v1047, 4
        %v1049 = vmax.f32 %v1047, %v1048
        %v1050 = vrot.slane %v1049, 2
        %v1051 = vmax.f32 %v1049, %v1050
        %v1052 = vrot.slane %v1051, 1
        %v1053 = vmax.f32 %v1051, %v1052
        %v1054 = vsel %vm1018, %v1007, -inf
        %v1055 = vrot.slane %v1054, 4
        %v1056 = vmax.f32 %v1054, %v1055
        %v1057 = vrot.slane %v1056, 2
        %v1058 = vmax.f32 %v1056, %v1057
        %v1059 = vrot.slane %v1058, 1
        %v1060 = vmax.f32 %v1058, %v1059
        %v1061 = vsel %vm1018, %v1008, -inf
        %v1062 = vrot.slane %v1061, 4
        %v1063 = vmax.f32 %v1061, %v1062
        %v1064 = vrot.slane %v1063, 2
        %v1065 = vmax.f32 %v1063, %v1064
        %v1066 = vrot.slane %v1065, 1
        %v1067 = vmax.f32 %v1065, %v1066
        %v1068 = vsel %vm1018, %v1009, -inf
        %v1069 = vrot.slane %v1068, 4
        %v1070 = vmax.f32 %v1068, %v1069
        %v1071 = vrot.slane %v1070, 2
        %v1072 = vmax.f32 %v1070, %v1071
        %v1073 = vrot.slane %v1072, 1
        %v1074 = vmax.f32 %v1072, %v1073
        %v1075 = vsel %vm1018, %v1010, -inf
        %v1076 = vrot.slane %v1075, 4
        %v1077 = vmax.f32 %v1075, %v1076
        %v1078 = vrot.slane %v1077, 2
        %v1079 = vmax.f32 %v1077, %v1078
        %v1080 = vrot.slane %v1079, 1
        %v1081 = vmax.f32 %v1079, %v1080
        %v1082 = vsel %vm1018, %v1011, -inf
        %v1083 = vrot.slane %v1082, 4
        %v1084 = vmax.f32 %v1082, %v1083
        %v1085 = vrot.slane %v1084, 2
        %v1086 = vmax.f32 %v1084, %v1085
        %v1087 = vrot.slane %v1086, 1
        %v1088 = vmax.f32 %v1086, %v1087
        %v1089 = vsel %vm1018, %v1012, -inf
        %v1090 = vrot.slane %v1089, 4
        %v1091 = vmax.f32 %v1089, %v1090
        %v1092 = vrot.slane %v1091, 2
        %v1093 = vmax.f32 %v1091, %v1092
        %v1094 = vrot.slane %v1093, 1
        %v1095 = vmax.f32 %v1093, %v1094
        %v1096 = vsel %vm1018, %v1013, -inf
        %v1097 = vrot.slane %v1096, 4
        %v1098 = vmax.f32 %v1096, %v1097
        %v1099 = vrot.slane %v1098, 2
        %v1100 = vmax.f32 %v1098, %v1099
        %v1101 = vrot.slane %v1100, 1
        %v1102 = vmax.f32 %v1100, %v1101
        %v1103 = vsel %vm1018, %v1014, -inf
        %v1104 = vrot.slane %v1103, 4
        %v1105 = vmax.f32 %v1103, %v1104
        %v1106 = vrot.slane %v1105, 2
        %v1107 = vmax.f32 %v1105, %v1106
        %v1108 = vrot.slane %v1107, 1
        %v1109 = vmax.f32 %v1107, %v1108
        %v1110 = vsel %vm1018, %v1015, -inf
        %v1111 = vrot.slane %v1110, 4
        %v1112 = vmax.f32 %v1110, %v1111
        %v1113 = vrot.slane %v1112, 2
        %v1114 = vmax.f32 %v1112, %v1113
        %v1115 = vrot.slane %v1114, 1
        %v1116 = vmax.f32 %v1114, %v1115
        %v1117 = vsel %vm1018, %v1016, -inf
        %v1118 = vrot.slane %v1117, 4
        %v1119 = vmax.f32 %v1117, %v1118
        %v1120 = vrot.slane %v1119, 2
        %v1121 = vmax.f32 %v1119, %v1120
        %v1122 = vrot.slane %v1121, 1
        %v1123 = vmax.f32 %v1121, %v1122
        %v1124 = vsel %vm1018, %v1017, -inf
        %v1125 = vrot.slane %v1124, 4
        %v1126 = vmax.f32 %v1124, %v1125
        %v1127 = vrot.slane %v1126, 2
        %v1128 = vmax.f32 %v1126, %v1127
        %v1129 = vrot.slane %v1128, 1
        %v1130 = vmax.f32 %v1128, %v1129
        %v1131 = vmax.f32 %v1025, 0.0
        %v1132 = vmax.f32 %v1032, 0.0
        %v1133 = vmax.f32 %v1039, 0.0
        %v1134 = vmax.f32 %v1046, 0.0
        %v1135 = vmax.f32 %v1053, 0.0
        %v1136 = vmax.f32 %v1060, 0.0
        %v1137 = vmax.f32 %v1067, 0.0
        %v1138 = vmax.f32 %v1074, 0.0
        %v1139 = vmax.f32 %v1081, 0.0
        %v1140 = vmax.f32 %v1088, 0.0
        %v1141 = vmax.f32 %v1095, 0.0
        %v1142 = vmax.f32 %v1102, 0.0
        %v1143 = vmax.f32 %v1109, 0.0
        %v1144 = vmax.f32 %v1116, 0.0
        %v1145 = vmax.f32 %v1123, 0.0
        %v1146 = vmax.f32 %v1130, 0.0
        %vm1147 = vcmp.eq.s32.totalorder %v773, 0
        %vm1148 = vcmp.eq.s32.totalorder %v773, 1
        %vm1149 = vcmp.eq.s32.totalorder %v773, 2
        %vm1150 = vcmp.eq.s32.totalorder %v773, 3
        %vm1151 = vcmp.eq.s32.totalorder %v773, 4
        %vm1152 = vcmp.eq.s32.totalorder %v773, 5
        %vm1153 = vcmp.eq.s32.totalorder %v773, 6
        %vm1154 = vcmp.eq.s32.totalorder %v773, 7
        %vm1155 = vcmp.eq.s32.totalorder %v773, 8
        %vm1156 = vcmp.eq.s32.totalorder %v773, 9
        %vm1157 = vcmp.eq.s32.totalorder %v773, 10
        %vm1158 = vcmp.eq.s32.totalorder %v773, 11
        %vm1159 = vcmp.eq.s32.totalorder %v773, 12
        %vm1160 = vcmp.eq.s32.totalorder %v773, 13
        %vm1161 = vcmp.eq.s32.totalorder %v773, 14
        %vm1162 = vcmp.eq.s32.totalorder %v773, 15
        %v1163 = vsel %vm1147, 1, 0
        %v1164 = vsel %vm1148, 1, 0
        %v1165 = vsel %vm1149, 1, 0
        %v1166 = vsel %vm1150, 1, 0
        %v1167 = vsel %vm1151, 1, 0
        %v1168 = vsel %vm1152, 1, 0
        %v1169 = vsel %vm1153, 1, 0
        %v1170 = vsel %vm1154, 1, 0
        %v1171 = vsel %vm1155, 1, 0
        %v1172 = vsel %vm1156, 1, 0
        %v1173 = vsel %vm1157, 1, 0
        %v1174 = vsel %vm1158, 1, 0
        %v1175 = vsel %vm1159, 1, 0
        %v1176 = vsel %vm1160, 1, 0
        %v1177 = vsel %vm1161, 1, 0
        %v1178 = vsel %vm1162, 1, 0
        %1179 = vset.pattern.permute.xlu0 0
        %1180 = vperm.xlu0 %1179, %v1163
        %v1181 = vpop.permute.xlu0 %1180
        %1182 = vset.pattern.permute.xlu0 0
        %1183 = vperm.xlu0 %1182, %v1164
        %v1184 = vpop.permute.xlu0 %1183
        %1185 = vset.pattern.permute.xlu0 0
        %1186 = vperm.xlu0 %1185, %v1165
        %v1187 = vpop.permute.xlu0 %1186
        %1188 = vset.pattern.permute.xlu0 0
        %1189 = vperm.xlu0 %1188, %v1166
        %v1190 = vpop.permute.xlu0 %1189
        %1191 = vset.pattern.permute.xlu0 0
        %1192 = vperm.xlu0 %1191, %v1167
        %v1193 = vpop.permute.xlu0 %1192
        %1194 = vset.pattern.permute.xlu0 0
        %1195 = vperm.xlu0 %1194, %v1168
        %v1196 = vpop.permute.xlu0 %1195
        %1197 = vset.pattern.permute.xlu0 0
        %1198 = vperm.xlu0 %1197, %v1169
        %v1199 = vpop.permute.xlu0 %1198
        %1200 = vset.pattern.permute.xlu0 0
        %1201 = vperm.xlu0 %1200, %v1170
        %v1202 = vpop.permute.xlu0 %1201
        %1203 = vset.pattern.permute.xlu0 0
        %1204 = vperm.xlu0 %1203, %v1171
        %v1205 = vpop.permute.xlu0 %1204
        %1206 = vset.pattern.permute.xlu0 0
        %1207 = vperm.xlu0 %1206, %v1172
        %v1208 = vpop.permute.xlu0 %1207
        %1209 = vset.pattern.permute.xlu0 0
        %1210 = vperm.xlu0 %1209, %v1173
        %v1211 = vpop.permute.xlu0 %1210
        %1212 = vset.pattern.permute.xlu0 0
        %1213 = vperm.xlu0 %1212, %v1174
        %v1214 = vpop.permute.xlu0 %1213
        %1215 = vset.pattern.permute.xlu0 0
        %1216 = vperm.xlu0 %1215, %v1175
        %v1217 = vpop.permute.xlu0 %1216
        %1218 = vset.pattern.permute.xlu0 0
        %1219 = vperm.xlu0 %1218, %v1176
        %v1220 = vpop.permute.xlu0 %1219
        %1221 = vset.pattern.permute.xlu0 0
        %1222 = vperm.xlu0 %1221, %v1177
        %v1223 = vpop.permute.xlu0 %1222
        %1224 = vset.pattern.permute.xlu0 0
        %1225 = vperm.xlu0 %1224, %v1178
        %v1226 = vpop.permute.xlu0 %1225
        %vm1227 = vcmp.eq.s32.totalorder %v1181, 1
        %vm1228 = vcmp.eq.s32.totalorder %v1184, 1
        %vm1229 = vcmp.eq.s32.totalorder %v1187, 1
        %vm1230 = vcmp.eq.s32.totalorder %v1190, 1
        %vm1231 = vcmp.eq.s32.totalorder %v1193, 1
        %vm1232 = vcmp.eq.s32.totalorder %v1196, 1
        %vm1233 = vcmp.eq.s32.totalorder %v1199, 1
        %vm1234 = vcmp.eq.s32.totalorder %v1202, 1
        %vm1235 = vcmp.eq.s32.totalorder %v1205, 1
        %vm1236 = vcmp.eq.s32.totalorder %v1208, 1
        %vm1237 = vcmp.eq.s32.totalorder %v1211, 1
        %vm1238 = vcmp.eq.s32.totalorder %v1214, 1
        %vm1239 = vcmp.eq.s32.totalorder %v1217, 1
        %vm1240 = vcmp.eq.s32.totalorder %v1220, 1
        %vm1241 = vcmp.eq.s32.totalorder %v1223, 1
        %vm1242 = vcmp.eq.s32.totalorder %v1226, 1
        %v1243 = vsel %vm1227, %v753, -1e+30
        %v1244 = vsel %vm1228, %v753, -1e+30
        %v1245 = vsel %vm1229, %v753, -1e+30
        %v1246 = vsel %vm1230, %v753, -1e+30
        %v1247 = vsel %vm1231, %v753, -1e+30
        %v1248 = vsel %vm1232, %v753, -1e+30
        %v1249 = vsel %vm1233, %v753, -1e+30
        %v1250 = vsel %vm1234, %v753, -1e+30
        %v1251 = vsel %vm1235, %v753, -1e+30
        %v1252 = vsel %vm1236, %v753, -1e+30
        %v1253 = vsel %vm1237, %v753, -1e+30
        %v1254 = vsel %vm1238, %v753, -1e+30
        %v1255 = vsel %vm1239, %v753, -1e+30
        %v1256 = vsel %vm1240, %v753, -1e+30
        %v1257 = vsel %vm1241, %v753, -1e+30
        %v1258 = vsel %vm1242, %v753, -1e+30
        %v1259 = vrot.slane %v1243, 4
        %v1260 = vmax.f32 %v1243, %v1259
        %v1261 = vrot.slane %v1260, 2
        %v1262 = vmax.f32 %v1260, %v1261
        %v1263 = vrot.slane %v1262, 1
        %v1264 = vmax.f32 %v1262, %v1263
        %v1265 = vrot.slane %v1244, 4
        %v1266 = vmax.f32 %v1244, %v1265
        %v1267 = vrot.slane %v1266, 2
        %v1268 = vmax.f32 %v1266, %v1267
        %v1269 = vrot.slane %v1268, 1
        %v1270 = vmax.f32 %v1268, %v1269
        %v1271 = vrot.slane %v1245, 4
        %v1272 = vmax.f32 %v1245, %v1271
        %v1273 = vrot.slane %v1272, 2
        %v1274 = vmax.f32 %v1272, %v1273
        %v1275 = vrot.slane %v1274, 1
        %v1276 = vmax.f32 %v1274, %v1275
        %v1277 = vrot.slane %v1246, 4
        %v1278 = vmax.f32 %v1246, %v1277
        %v1279 = vrot.slane %v1278, 2
        %v1280 = vmax.f32 %v1278, %v1279
        %v1281 = vrot.slane %v1280, 1
        %v1282 = vmax.f32 %v1280, %v1281
        %v1283 = vrot.slane %v1247, 4
        %v1284 = vmax.f32 %v1247, %v1283
        %v1285 = vrot.slane %v1284, 2
        %v1286 = vmax.f32 %v1284, %v1285
        %v1287 = vrot.slane %v1286, 1
        %v1288 = vmax.f32 %v1286, %v1287
        %v1289 = vrot.slane %v1248, 4
        %v1290 = vmax.f32 %v1248, %v1289
        %v1291 = vrot.slane %v1290, 2
        %v1292 = vmax.f32 %v1290, %v1291
        %v1293 = vrot.slane %v1292, 1
        %v1294 = vmax.f32 %v1292, %v1293
        %v1295 = vrot.slane %v1249, 4
        %v1296 = vmax.f32 %v1249, %v1295
        %v1297 = vrot.slane %v1296, 2
        %v1298 = vmax.f32 %v1296, %v1297
        %v1299 = vrot.slane %v1298, 1
        %v1300 = vmax.f32 %v1298, %v1299
        %v1301 = vrot.slane %v1250, 4
        %v1302 = vmax.f32 %v1250, %v1301
        %v1303 = vrot.slane %v1302, 2
        %v1304 = vmax.f32 %v1302, %v1303
        %v1305 = vrot.slane %v1304, 1
        %v1306 = vmax.f32 %v1304, %v1305
        %v1307 = vrot.slane %v1251, 4
        %v1308 = vmax.f32 %v1251, %v1307
        %v1309 = vrot.slane %v1308, 2
        %v1310 = vmax.f32 %v1308, %v1309
        %v1311 = vrot.slane %v1310, 1
        %v1312 = vmax.f32 %v1310, %v1311
        %v1313 = vrot.slane %v1252, 4
        %v1314 = vmax.f32 %v1252, %v1313
        %v1315 = vrot.slane %v1314, 2
        %v1316 = vmax.f32 %v1314, %v1315
        %v1317 = vrot.slane %v1316, 1
        %v1318 = vmax.f32 %v1316, %v1317
        %v1319 = vrot.slane %v1253, 4
        %v1320 = vmax.f32 %v1253, %v1319
        %v1321 = vrot.slane %v1320, 2
        %v1322 = vmax.f32 %v1320, %v1321
        %v1323 = vrot.slane %v1322, 1
        %v1324 = vmax.f32 %v1322, %v1323
        %v1325 = vrot.slane %v1254, 4
        %v1326 = vmax.f32 %v1254, %v1325
        %v1327 = vrot.slane %v1326, 2
        %v1328 = vmax.f32 %v1326, %v1327
        %v1329 = vrot.slane %v1328, 1
        %v1330 = vmax.f32 %v1328, %v1329
        %v1331 = vrot.slane %v1255, 4
        %v1332 = vmax.f32 %v1255, %v1331
        %v1333 = vrot.slane %v1332, 2
        %v1334 = vmax.f32 %v1332, %v1333
        %v1335 = vrot.slane %v1334, 1
        %v1336 = vmax.f32 %v1334, %v1335
        %v1337 = vrot.slane %v1256, 4
        %v1338 = vmax.f32 %v1256, %v1337
        %v1339 = vrot.slane %v1338, 2
        %v1340 = vmax.f32 %v1338, %v1339
        %v1341 = vrot.slane %v1340, 1
        %v1342 = vmax.f32 %v1340, %v1341
        %v1343 = vrot.slane %v1257, 4
        %v1344 = vmax.f32 %v1257, %v1343
        %v1345 = vrot.slane %v1344, 2
        %v1346 = vmax.f32 %v1344, %v1345
        %v1347 = vrot.slane %v1346, 1
        %v1348 = vmax.f32 %v1346, %v1347
        %v1349 = vrot.slane %v1258, 4
        %v1350 = vmax.f32 %v1258, %v1349
        %v1351 = vrot.slane %v1350, 2
        %v1352 = vmax.f32 %v1350, %v1351
        %v1353 = vrot.slane %v1352, 1
        %v1354 = vmax.f32 %v1352, %v1353
        %v1355 = vmax.f32 %v986, %v1264
        %v1356 = vmax.f32 %v987, %v1270
        %v1357 = vmax.f32 %v988, %v1276
        %v1358 = vmax.f32 %v989, %v1282
        %v1359 = vmax.f32 %v990, %v1288
        %v1360 = vmax.f32 %v991, %v1294
        %v1361 = vmax.f32 %v992, %v1300
        %v1362 = vmax.f32 %v993, %v1306
        %v1363 = vmax.f32 %v994, %v1312
        %v1364 = vmax.f32 %v995, %v1318
        %v1365 = vmax.f32 %v996, %v1324
        %v1366 = vmax.f32 %v997, %v1330
        %v1367 = vmax.f32 %v998, %v1336
        %v1368 = vmax.f32 %v999, %v1342
        %v1369 = vmax.f32 %v1000, %v1348
        %v1370 = vmax.f32 %v1001, %v1354
        %v1371 = vcvt.s32.f32 %v1163
        %v1372 = vcvt.s32.f32 %v1164
        %v1373 = vcvt.s32.f32 %v1165
        %v1374 = vcvt.s32.f32 %v1166
        %v1375 = vcvt.s32.f32 %v1167
        %v1376 = vcvt.s32.f32 %v1168
        %v1377 = vcvt.s32.f32 %v1169
        %v1378 = vcvt.s32.f32 %v1170
        %v1379 = vcvt.s32.f32 %v1171
        %v1380 = vcvt.s32.f32 %v1172
        %v1381 = vcvt.s32.f32 %v1173
        %v1382 = vcvt.s32.f32 %v1174
        %v1383 = vcvt.s32.f32 %v1175
        %v1384 = vcvt.s32.f32 %v1176
        %v1385 = vcvt.s32.f32 %v1177
        %v1386 = vcvt.s32.f32 %v1178
        %v1387 = vsel %vm1018, %v1371, -inf
        %v1388 = vrot.slane %v1387, 4
        %v1389 = vmax.f32 %v1387, %v1388
        %v1390 = vrot.slane %v1389, 2
        %v1391 = vmax.f32 %v1389, %v1390
        %v1392 = vrot.slane %v1391, 1
        %v1393 = vmax.f32 %v1391, %v1392
        %v1394 = vsel %vm1018, %v1372, -inf
        %v1395 = vrot.slane %v1394, 4
        %v1396 = vmax.f32 %v1394, %v1395
        %v1397 = vrot.slane %v1396, 2
        %v1398 = vmax.f32 %v1396, %v1397
        %v1399 = vrot.slane %v1398, 1
        %v1400 = vmax.f32 %v1398, %v1399
        %v1401 = vsel %vm1018, %v1373, -inf
        %v1402 = vrot.slane %v1401, 4
        %v1403 = vmax.f32 %v1401, %v1402
        %v1404 = vrot.slane %v1403, 2
        %v1405 = vmax.f32 %v1403, %v1404
        %v1406 = vrot.slane %v1405, 1
        %v1407 = vmax.f32 %v1405, %v1406
        %v1408 = vsel %vm1018, %v1374, -inf
        %v1409 = vrot.slane %v1408, 4
        %v1410 = vmax.f32 %v1408, %v1409
        %v1411 = vrot.slane %v1410, 2
        %v1412 = vmax.f32 %v1410, %v1411
        %v1413 = vrot.slane %v1412, 1
        %v1414 = vmax.f32 %v1412, %v1413
        %v1415 = vsel %vm1018, %v1375, -inf
        %v1416 = vrot.slane %v1415, 4
        %v1417 = vmax.f32 %v1415, %v1416
        %v1418 = vrot.slane %v1417, 2
        %v1419 = vmax.f32 %v1417, %v1418
        %v1420 = vrot.slane %v1419, 1
        %v1421 = vmax.f32 %v1419, %v1420
        %v1422 = vsel %vm1018, %v1376, -inf
        %v1423 = vrot.slane %v1422, 4
        %v1424 = vmax.f32 %v1422, %v1423
        %v1425 = vrot.slane %v1424, 2
        %v1426 = vmax.f32 %v1424, %v1425
        %v1427 = vrot.slane %v1426, 1
        %v1428 = vmax.f32 %v1426, %v1427
        %v1429 = vsel %vm1018, %v1377, -inf
        %v1430 = vrot.slane %v1429, 4
        %v1431 = vmax.f32 %v1429, %v1430
        %v1432 = vrot.slane %v1431, 2
        %v1433 = vmax.f32 %v1431, %v1432
        %v1434 = vrot.slane %v1433, 1
        %v1435 = vmax.f32 %v1433, %v1434
        %v1436 = vsel %vm1018, %v1378, -inf
        %v1437 = vrot.slane %v1436, 4
        %v1438 = vmax.f32 %v1436, %v1437
        %v1439 = vrot.slane %v1438, 2
        %v1440 = vmax.f32 %v1438, %v1439
        %v1441 = vrot.slane %v1440, 1
        %v1442 = vmax.f32 %v1440, %v1441
        %v1443 = vsel %vm1018, %v1379, -inf
        %v1444 = vrot.slane %v1443, 4
        %v1445 = vmax.f32 %v1443, %v1444
        %v1446 = vrot.slane %v1445, 2
        %v1447 = vmax.f32 %v1445, %v1446
        %v1448 = vrot.slane %v1447, 1
        %v1449 = vmax.f32 %v1447, %v1448
        %v1450 = vsel %vm1018, %v1380, -inf
        %v1451 = vrot.slane %v1450, 4
        %v1452 = vmax.f32 %v1450, %v1451
        %v1453 = vrot.slane %v1452, 2
        %v1454 = vmax.f32 %v1452, %v1453
        %v1455 = vrot.slane %v1454, 1
        %v1456 = vmax.f32 %v1454, %v1455
        %v1457 = vsel %vm1018, %v1381, -inf
        %v1458 = vrot.slane %v1457, 4
        %v1459 = vmax.f32 %v1457, %v1458
        %v1460 = vrot.slane %v1459, 2
        %v1461 = vmax.f32 %v1459, %v1460
        %v1462 = vrot.slane %v1461, 1
        %v1463 = vmax.f32 %v1461, %v1462
        %v1464 = vsel %vm1018, %v1382, -inf
        %v1465 = vrot.slane %v1464, 4
        %v1466 = vmax.f32 %v1464, %v1465
        %v1467 = vrot.slane %v1466, 2
        %v1468 = vmax.f32 %v1466, %v1467
        %v1469 = vrot.slane %v1468, 1
        %v1470 = vmax.f32 %v1468, %v1469
        %v1471 = vsel %vm1018, %v1383, -inf
        %v1472 = vrot.slane %v1471, 4
        %v1473 = vmax.f32 %v1471, %v1472
        %v1474 = vrot.slane %v1473, 2
        %v1475 = vmax.f32 %v1473, %v1474
        %v1476 = vrot.slane %v1475, 1
        %v1477 = vmax.f32 %v1475, %v1476
        %v1478 = vsel %vm1018, %v1384, -inf
        %v1479 = vrot.slane %v1478, 4
        %v1480 = vmax.f32 %v1478, %v1479
        %v1481 = vrot.slane %v1480, 2
        %v1482 = vmax.f32 %v1480, %v1481
        %v1483 = vrot.slane %v1482, 1
        %v1484 = vmax.f32 %v1482, %v1483
        %v1485 = vsel %vm1018, %v1385, -inf
        %v1486 = vrot.slane %v1485, 4
        %v1487 = vmax.f32 %v1485, %v1486
        %v1488 = vrot.slane %v1487, 2
        %v1489 = vmax.f32 %v1487, %v1488
        %v1490 = vrot.slane %v1489, 1
        %v1491 = vmax.f32 %v1489, %v1490
        %v1492 = vsel %vm1018, %v1386, -inf
        %v1493 = vrot.slane %v1492, 4
        %v1494 = vmax.f32 %v1492, %v1493
        %v1495 = vrot.slane %v1494, 2
        %v1496 = vmax.f32 %v1494, %v1495
        %v1497 = vrot.slane %v1496, 1
        %v1498 = vmax.f32 %v1496, %v1497
        %v1499 = vmax.f32 %v1131, %v1393
        %v1500 = vmax.f32 %v1132, %v1400
        %v1501 = vmax.f32 %v1133, %v1407
        %v1502 = vmax.f32 %v1134, %v1414
        %v1503 = vmax.f32 %v1135, %v1421
        %v1504 = vmax.f32 %v1136, %v1428
        %v1505 = vmax.f32 %v1137, %v1435
        %v1506 = vmax.f32 %v1138, %v1442
        %v1507 = vmax.f32 %v1139, %v1449
        %v1508 = vmax.f32 %v1140, %v1456
        %v1509 = vmax.f32 %v1141, %v1463
        %v1510 = vmax.f32 %v1142, %v1470
        %v1511 = vmax.f32 %v1143, %v1477
        %v1512 = vmax.f32 %v1144, %v1484
        %v1513 = vmax.f32 %v1145, %v1491
        %v1514 = vmax.f32 %v1146, %v1498
        %vm1515 = vcmp.eq.s32.totalorder %v774, 0
        %vm1516 = vcmp.eq.s32.totalorder %v774, 1
        %vm1517 = vcmp.eq.s32.totalorder %v774, 2
        %vm1518 = vcmp.eq.s32.totalorder %v774, 3
        %vm1519 = vcmp.eq.s32.totalorder %v774, 4
        %vm1520 = vcmp.eq.s32.totalorder %v774, 5
        %vm1521 = vcmp.eq.s32.totalorder %v774, 6
        %vm1522 = vcmp.eq.s32.totalorder %v774, 7
        %vm1523 = vcmp.eq.s32.totalorder %v774, 8
        %vm1524 = vcmp.eq.s32.totalorder %v774, 9
        %vm1525 = vcmp.eq.s32.totalorder %v774, 10
        %vm1526 = vcmp.eq.s32.totalorder %v774, 11
        %vm1527 = vcmp.eq.s32.totalorder %v774, 12
        %vm1528 = vcmp.eq.s32.totalorder %v774, 13
        %vm1529 = vcmp.eq.s32.totalorder %v774, 14
        %vm1530 = vcmp.eq.s32.totalorder %v774, 15
        %v1531 = vsel %vm1515, 1, 0
        %v1532 = vsel %vm1516, 1, 0
        %v1533 = vsel %vm1517, 1, 0
        %v1534 = vsel %vm1518, 1, 0
        %v1535 = vsel %vm1519, 1, 0
        %v1536 = vsel %vm1520, 1, 0
        %v1537 = vsel %vm1521, 1, 0
        %v1538 = vsel %vm1522, 1, 0
        %v1539 = vsel %vm1523, 1, 0
        %v1540 = vsel %vm1524, 1, 0
        %v1541 = vsel %vm1525, 1, 0
        %v1542 = vsel %vm1526, 1, 0
        %v1543 = vsel %vm1527, 1, 0
        %v1544 = vsel %vm1528, 1, 0
        %v1545 = vsel %vm1529, 1, 0
        %v1546 = vsel %vm1530, 1, 0
        %1547 = vset.pattern.permute.xlu0 0
        %1548 = vperm.xlu0 %1547, %v1531
        %v1549 = vpop.permute.xlu0 %1548
        %1550 = vset.pattern.permute.xlu0 0
        %1551 = vperm.xlu0 %1550, %v1532
        %v1552 = vpop.permute.xlu0 %1551
        %1553 = vset.pattern.permute.xlu0 0
        %1554 = vperm.xlu0 %1553, %v1533
        %v1555 = vpop.permute.xlu0 %1554
        %1556 = vset.pattern.permute.xlu0 0
        %1557 = vperm.xlu0 %1556, %v1534
        %v1558 = vpop.permute.xlu0 %1557
        %1559 = vset.pattern.permute.xlu0 0
        %1560 = vperm.xlu0 %1559, %v1535
        %v1561 = vpop.permute.xlu0 %1560
        %1562 = vset.pattern.permute.xlu0 0
        %1563 = vperm.xlu0 %1562, %v1536
        %v1564 = vpop.permute.xlu0 %1563
        %1565 = vset.pattern.permute.xlu0 0
        %1566 = vperm.xlu0 %1565, %v1537
        %v1567 = vpop.permute.xlu0 %1566
        %1568 = vset.pattern.permute.xlu0 0
        %1569 = vperm.xlu0 %1568, %v1538
        %v1570 = vpop.permute.xlu0 %1569
        %1571 = vset.pattern.permute.xlu0 0
        %1572 = vperm.xlu0 %1571, %v1539
        %v1573 = vpop.permute.xlu0 %1572
        %1574 = vset.pattern.permute.xlu0 0
        %1575 = vperm.xlu0 %1574, %v1540
        %v1576 = vpop.permute.xlu0 %1575
        %1577 = vset.pattern.permute.xlu0 0
        %1578 = vperm.xlu0 %1577, %v1541
        %v1579 = vpop.permute.xlu0 %1578
        %1580 = vset.pattern.permute.xlu0 0
        %1581 = vperm.xlu0 %1580, %v1542
        %v1582 = vpop.permute.xlu0 %1581
        %1583 = vset.pattern.permute.xlu0 0
        %1584 = vperm.xlu0 %1583, %v1543
        %v1585 = vpop.permute.xlu0 %1584
        %1586 = vset.pattern.permute.xlu0 0
        %1587 = vperm.xlu0 %1586, %v1544
        %v1588 = vpop.permute.xlu0 %1587
        %1589 = vset.pattern.permute.xlu0 0
        %1590 = vperm.xlu0 %1589, %v1545
        %v1591 = vpop.permute.xlu0 %1590
        %1592 = vset.pattern.permute.xlu0 0
        %1593 = vperm.xlu0 %1592, %v1546
        %v1594 = vpop.permute.xlu0 %1593
        %vm1595 = vcmp.eq.s32.totalorder %v1549, 1
        %vm1596 = vcmp.eq.s32.totalorder %v1552, 1
        %vm1597 = vcmp.eq.s32.totalorder %v1555, 1
        %vm1598 = vcmp.eq.s32.totalorder %v1558, 1
        %vm1599 = vcmp.eq.s32.totalorder %v1561, 1
        %vm1600 = vcmp.eq.s32.totalorder %v1564, 1
        %vm1601 = vcmp.eq.s32.totalorder %v1567, 1
        %vm1602 = vcmp.eq.s32.totalorder %v1570, 1
        %vm1603 = vcmp.eq.s32.totalorder %v1573, 1
        %vm1604 = vcmp.eq.s32.totalorder %v1576, 1
        %vm1605 = vcmp.eq.s32.totalorder %v1579, 1
        %vm1606 = vcmp.eq.s32.totalorder %v1582, 1
        %vm1607 = vcmp.eq.s32.totalorder %v1585, 1
        %vm1608 = vcmp.eq.s32.totalorder %v1588, 1
        %vm1609 = vcmp.eq.s32.totalorder %v1591, 1
        %vm1610 = vcmp.eq.s32.totalorder %v1594, 1
        %v1611 = vsel %vm1595, %v758, -1e+30
        %v1612 = vsel %vm1596, %v758, -1e+30
        %v1613 = vsel %vm1597, %v758, -1e+30
        %v1614 = vsel %vm1598, %v758, -1e+30
        %v1615 = vsel %vm1599, %v758, -1e+30
        %v1616 = vsel %vm1600, %v758, -1e+30
        %v1617 = vsel %vm1601, %v758, -1e+30
        %v1618 = vsel %vm1602, %v758, -1e+30
        %v1619 = vsel %vm1603, %v758, -1e+30
        %v1620 = vsel %vm1604, %v758, -1e+30
        %v1621 = vsel %vm1605, %v758, -1e+30
        %v1622 = vsel %vm1606, %v758, -1e+30
        %v1623 = vsel %vm1607, %v758, -1e+30
        %v1624 = vsel %vm1608, %v758, -1e+30
        %v1625 = vsel %vm1609, %v758, -1e+30
        %v1626 = vsel %vm1610, %v758, -1e+30
        %v1627 = vrot.slane %v1611, 4
        %v1628 = vmax.f32 %v1611, %v1627
        %v1629 = vrot.slane %v1628, 2
        %v1630 = vmax.f32 %v1628, %v1629
        %v1631 = vrot.slane %v1630, 1
        %v1632 = vmax.f32 %v1630, %v1631
        %v1633 = vrot.slane %v1612, 4
        %v1634 = vmax.f32 %v1612, %v1633
        %v1635 = vrot.slane %v1634, 2
        %v1636 = vmax.f32 %v1634, %v1635
        %v1637 = vrot.slane %v1636, 1
        %v1638 = vmax.f32 %v1636, %v1637
        %v1639 = vrot.slane %v1613, 4
        %v1640 = vmax.f32 %v1613, %v1639
        %v1641 = vrot.slane %v1640, 2
        %v1642 = vmax.f32 %v1640, %v1641
        %v1643 = vrot.slane %v1642, 1
        %v1644 = vmax.f32 %v1642, %v1643
        %v1645 = vrot.slane %v1614, 4
        %v1646 = vmax.f32 %v1614, %v1645
        %v1647 = vrot.slane %v1646, 2
        %v1648 = vmax.f32 %v1646, %v1647
        %v1649 = vrot.slane %v1648, 1
        %v1650 = vmax.f32 %v1648, %v1649
        %v1651 = vrot.slane %v1615, 4
        %v1652 = vmax.f32 %v1615, %v1651
        %v1653 = vrot.slane %v1652, 2
        %v1654 = vmax.f32 %v1652, %v1653
        %v1655 = vrot.slane %v1654, 1
        %v1656 = vmax.f32 %v1654, %v1655
        %v1657 = vrot.slane %v1616, 4
        %v1658 = vmax.f32 %v1616, %v1657
        %v1659 = vrot.slane %v1658, 2
        %v1660 = vmax.f32 %v1658, %v1659
        %v1661 = vrot.slane %v1660, 1
        %v1662 = vmax.f32 %v1660, %v1661
        %v1663 = vrot.slane %v1617, 4
        %v1664 = vmax.f32 %v1617, %v1663
        %v1665 = vrot.slane %v1664, 2
        %v1666 = vmax.f32 %v1664, %v1665
        %v1667 = vrot.slane %v1666, 1
        %v1668 = vmax.f32 %v1666, %v1667
        %v1669 = vrot.slane %v1618, 4
        %v1670 = vmax.f32 %v1618, %v1669
        %v1671 = vrot.slane %v1670, 2
        %v1672 = vmax.f32 %v1670, %v1671
        %v1673 = vrot.slane %v1672, 1
        %v1674 = vmax.f32 %v1672, %v1673
        %v1675 = vrot.slane %v1619, 4
        %v1676 = vmax.f32 %v1619, %v1675
        %v1677 = vrot.slane %v1676, 2
        %v1678 = vmax.f32 %v1676, %v1677
        %v1679 = vrot.slane %v1678, 1
        %v1680 = vmax.f32 %v1678, %v1679
        %v1681 = vrot.slane %v1620, 4
        %v1682 = vmax.f32 %v1620, %v1681
        %v1683 = vrot.slane %v1682, 2
        %v1684 = vmax.f32 %v1682, %v1683
        %v1685 = vrot.slane %v1684, 1
        %v1686 = vmax.f32 %v1684, %v1685
        %v1687 = vrot.slane %v1621, 4
        %v1688 = vmax.f32 %v1621, %v1687
        %v1689 = vrot.slane %v1688, 2
        %v1690 = vmax.f32 %v1688, %v1689
        %v1691 = vrot.slane %v1690, 1
        %v1692 = vmax.f32 %v1690, %v1691
        %v1693 = vrot.slane %v1622, 4
        %v1694 = vmax.f32 %v1622, %v1693
        %v1695 = vrot.slane %v1694, 2
        %v1696 = vmax.f32 %v1694, %v1695
        %v1697 = vrot.slane %v1696, 1
        %v1698 = vmax.f32 %v1696, %v1697
        %v1699 = vrot.slane %v1623, 4
        %v1700 = vmax.f32 %v1623, %v1699
        %v1701 = vrot.slane %v1700, 2
        %v1702 = vmax.f32 %v1700, %v1701
        %v1703 = vrot.slane %v1702, 1
        %v1704 = vmax.f32 %v1702, %v1703
        %v1705 = vrot.slane %v1624, 4
        %v1706 = vmax.f32 %v1624, %v1705
        %v1707 = vrot.slane %v1706, 2
        %v1708 = vmax.f32 %v1706, %v1707
        %v1709 = vrot.slane %v1708, 1
        %v1710 = vmax.f32 %v1708, %v1709
        %v1711 = vrot.slane %v1625, 4
        %v1712 = vmax.f32 %v1625, %v1711
        %v1713 = vrot.slane %v1712, 2
        %v1714 = vmax.f32 %v1712, %v1713
        %v1715 = vrot.slane %v1714, 1
        %v1716 = vmax.f32 %v1714, %v1715
        %v1717 = vrot.slane %v1626, 4
        %v1718 = vmax.f32 %v1626, %v1717
        %v1719 = vrot.slane %v1718, 2
        %v1720 = vmax.f32 %v1718, %v1719
        %v1721 = vrot.slane %v1720, 1
        %v1722 = vmax.f32 %v1720, %v1721
        %v1723 = vmax.f32 %v1355, %v1632
        %v1724 = vmax.f32 %v1356, %v1638
        %v1725 = vmax.f32 %v1357, %v1644
        %v1726 = vmax.f32 %v1358, %v1650
        %v1727 = vmax.f32 %v1359, %v1656
        %v1728 = vmax.f32 %v1360, %v1662
        %v1729 = vmax.f32 %v1361, %v1668
        %v1730 = vmax.f32 %v1362, %v1674
        %v1731 = vmax.f32 %v1363, %v1680
        %v1732 = vmax.f32 %v1364, %v1686
        %v1733 = vmax.f32 %v1365, %v1692
        %v1734 = vmax.f32 %v1366, %v1698
        %v1735 = vmax.f32 %v1367, %v1704
        %v1736 = vmax.f32 %v1368, %v1710
        %v1737 = vmax.f32 %v1369, %v1716
        %v1738 = vmax.f32 %v1370, %v1722
        %v1739 = vcvt.s32.f32 %v1531
        %v1740 = vcvt.s32.f32 %v1532
        %v1741 = vcvt.s32.f32 %v1533
        %v1742 = vcvt.s32.f32 %v1534
        %v1743 = vcvt.s32.f32 %v1535
        %v1744 = vcvt.s32.f32 %v1536
        %v1745 = vcvt.s32.f32 %v1537
        %v1746 = vcvt.s32.f32 %v1538
        %v1747 = vcvt.s32.f32 %v1539
        %v1748 = vcvt.s32.f32 %v1540
        %v1749 = vcvt.s32.f32 %v1541
        %v1750 = vcvt.s32.f32 %v1542
        %v1751 = vcvt.s32.f32 %v1543
        %v1752 = vcvt.s32.f32 %v1544
        %v1753 = vcvt.s32.f32 %v1545
        %v1754 = vcvt.s32.f32 %v1546
        %v1755 = vsel %vm1018, %v1739, -inf
        %v1756 = vrot.slane %v1755, 4
        %v1757 = vmax.f32 %v1755, %v1756
        %v1758 = vrot.slane %v1757, 2
        %v1759 = vmax.f32 %v1757, %v1758
        %v1760 = vrot.slane %v1759, 1
        %v1761 = vmax.f32 %v1759, %v1760
        %v1762 = vsel %vm1018, %v1740, -inf
        %v1763 = vrot.slane %v1762, 4
        %v1764 = vmax.f32 %v1762, %v1763
        %v1765 = vrot.slane %v1764, 2
        %v1766 = vmax.f32 %v1764, %v1765
        %v1767 = vrot.slane %v1766, 1
        %v1768 = vmax.f32 %v1766, %v1767
        %v1769 = vsel %vm1018, %v1741, -inf
        %v1770 = vrot.slane %v1769, 4
        %v1771 = vmax.f32 %v1769, %v1770
        %v1772 = vrot.slane %v1771, 2
        %v1773 = vmax.f32 %v1771, %v1772
        %v1774 = vrot.slane %v1773, 1
        %v1775 = vmax.f32 %v1773, %v1774
        %v1776 = vsel %vm1018, %v1742, -inf
        %v1777 = vrot.slane %v1776, 4
        %v1778 = vmax.f32 %v1776, %v1777
        %v1779 = vrot.slane %v1778, 2
        %v1780 = vmax.f32 %v1778, %v1779
        %v1781 = vrot.slane %v1780, 1
        %v1782 = vmax.f32 %v1780, %v1781
        %v1783 = vsel %vm1018, %v1743, -inf
        %v1784 = vrot.slane %v1783, 4
        %v1785 = vmax.f32 %v1783, %v1784
        %v1786 = vrot.slane %v1785, 2
        %v1787 = vmax.f32 %v1785, %v1786
        %v1788 = vrot.slane %v1787, 1
        %v1789 = vmax.f32 %v1787, %v1788
        %v1790 = vsel %vm1018, %v1744, -inf
        %v1791 = vrot.slane %v1790, 4
        %v1792 = vmax.f32 %v1790, %v1791
        %v1793 = vrot.slane %v1792, 2
        %v1794 = vmax.f32 %v1792, %v1793
        %v1795 = vrot.slane %v1794, 1
        %v1796 = vmax.f32 %v1794, %v1795
        %v1797 = vsel %vm1018, %v1745, -inf
        %v1798 = vrot.slane %v1797, 4
        %v1799 = vmax.f32 %v1797, %v1798
        %v1800 = vrot.slane %v1799, 2
        %v1801 = vmax.f32 %v1799, %v1800
        %v1802 = vrot.slane %v1801, 1
        %v1803 = vmax.f32 %v1801, %v1802
        %v1804 = vsel %vm1018, %v1746, -inf
        %v1805 = vrot.slane %v1804, 4
        %v1806 = vmax.f32 %v1804, %v1805
        %v1807 = vrot.slane %v1806, 2
        %v1808 = vmax.f32 %v1806, %v1807
        %v1809 = vrot.slane %v1808, 1
        %v1810 = vmax.f32 %v1808, %v1809
        %v1811 = vsel %vm1018, %v1747, -inf
        %v1812 = vrot.slane %v1811, 4
        %v1813 = vmax.f32 %v1811, %v1812
        %v1814 = vrot.slane %v1813, 2
        %v1815 = vmax.f32 %v1813, %v1814
        %v1816 = vrot.slane %v1815, 1
        %v1817 = vmax.f32 %v1815, %v1816
        %v1818 = vsel %vm1018, %v1748, -inf
        %v1819 = vrot.slane %v1818, 4
        %v1820 = vmax.f32 %v1818, %v1819
        %v1821 = vrot.slane %v1820, 2
        %v1822 = vmax.f32 %v1820, %v1821
        %v1823 = vrot.slane %v1822, 1
        %v1824 = vmax.f32 %v1822, %v1823
        %v1825 = vsel %vm1018, %v1749, -inf
        %v1826 = vrot.slane %v1825, 4
        %v1827 = vmax.f32 %v1825, %v1826
        %v1828 = vrot.slane %v1827, 2
        %v1829 = vmax.f32 %v1827, %v1828
        %v1830 = vrot.slane %v1829, 1
        %v1831 = vmax.f32 %v1829, %v1830
        %v1832 = vsel %vm1018, %v1750, -inf
        %v1833 = vrot.slane %v1832, 4
        %v1834 = vmax.f32 %v1832, %v1833
        %v1835 = vrot.slane %v1834, 2
        %v1836 = vmax.f32 %v1834, %v1835
        %v1837 = vrot.slane %v1836, 1
        %v1838 = vmax.f32 %v1836, %v1837
        %v1839 = vsel %vm1018, %v1751, -inf
        %v1840 = vrot.slane %v1839, 4
        %v1841 = vmax.f32 %v1839, %v1840
        %v1842 = vrot.slane %v1841, 2
        %v1843 = vmax.f32 %v1841, %v1842
        %v1844 = vrot.slane %v1843, 1
        %v1845 = vmax.f32 %v1843, %v1844
        %v1846 = vsel %vm1018, %v1752, -inf
        %v1847 = vrot.slane %v1846, 4
        %v1848 = vmax.f32 %v1846, %v1847
        %v1849 = vrot.slane %v1848, 2
        %v1850 = vmax.f32 %v1848, %v1849
        %v1851 = vrot.slane %v1850, 1
        %v1852 = vmax.f32 %v1850, %v1851
        %v1853 = vsel %vm1018, %v1753, -inf
        %v1854 = vrot.slane %v1853, 4
        %v1855 = vmax.f32 %v1853, %v1854
        %v1856 = vrot.slane %v1855, 2
        %v1857 = vmax.f32 %v1855, %v1856
        %v1858 = vrot.slane %v1857, 1
        %v1859 = vmax.f32 %v1857, %v1858
        %v1860 = vsel %vm1018, %v1754, -inf
        %v1861 = vrot.slane %v1860, 4
        %v1862 = vmax.f32 %v1860, %v1861
        %v1863 = vrot.slane %v1862, 2
        %v1864 = vmax.f32 %v1862, %v1863
        %v1865 = vrot.slane %v1864, 1
        %v1866 = vmax.f32 %v1864, %v1865
        %v1867 = vmax.f32 %v1499, %v1761
        %v1868 = vmax.f32 %v1500, %v1768
        %v1869 = vmax.f32 %v1501, %v1775
        %v1870 = vmax.f32 %v1502, %v1782
        %v1871 = vmax.f32 %v1503, %v1789
        %v1872 = vmax.f32 %v1504, %v1796
        %v1873 = vmax.f32 %v1505, %v1803
        %v1874 = vmax.f32 %v1506, %v1810
        %v1875 = vmax.f32 %v1507, %v1817
        %v1876 = vmax.f32 %v1508, %v1824
        %v1877 = vmax.f32 %v1509, %v1831
        %v1878 = vmax.f32 %v1510, %v1838
        %v1879 = vmax.f32 %v1511, %v1845
        %v1880 = vmax.f32 %v1512, %v1852
        %v1881 = vmax.f32 %v1513, %v1859
        %v1882 = vmax.f32 %v1514, %v1866
        %vm1883 = vcmp.eq.s32.totalorder %v775, 0
        %vm1884 = vcmp.eq.s32.totalorder %v775, 1
        %vm1885 = vcmp.eq.s32.totalorder %v775, 2
        %vm1886 = vcmp.eq.s32.totalorder %v775, 3
        %vm1887 = vcmp.eq.s32.totalorder %v775, 4
        %vm1888 = vcmp.eq.s32.totalorder %v775, 5
        %vm1889 = vcmp.eq.s32.totalorder %v775, 6
        %vm1890 = vcmp.eq.s32.totalorder %v775, 7
        %vm1891 = vcmp.eq.s32.totalorder %v775, 8
        %vm1892 = vcmp.eq.s32.totalorder %v775, 9
        %vm1893 = vcmp.eq.s32.totalorder %v775, 10
        %vm1894 = vcmp.eq.s32.totalorder %v775, 11
        %vm1895 = vcmp.eq.s32.totalorder %v775, 12
        %vm1896 = vcmp.eq.s32.totalorder %v775, 13
        %vm1897 = vcmp.eq.s32.totalorder %v775, 14
        %vm1898 = vcmp.eq.s32.totalorder %v775, 15
        %v1899 = vsel %vm1883, 1, 0
        %v1900 = vsel %vm1884, 1, 0
        %v1901 = vsel %vm1885, 1, 0
        %v1902 = vsel %vm1886, 1, 0
        %v1903 = vsel %vm1887, 1, 0
        %v1904 = vsel %vm1888, 1, 0
        %v1905 = vsel %vm1889, 1, 0
        %v1906 = vsel %vm1890, 1, 0
        %v1907 = vsel %vm1891, 1, 0
        %v1908 = vsel %vm1892, 1, 0
        %v1909 = vsel %vm1893, 1, 0
        %v1910 = vsel %vm1894, 1, 0
        %v1911 = vsel %vm1895, 1, 0
        %v1912 = vsel %vm1896, 1, 0
        %v1913 = vsel %vm1897, 1, 0
        %v1914 = vsel %vm1898, 1, 0
        %1915 = vset.pattern.permute.xlu0 0
        %1916 = vperm.xlu0 %1915, %v1899
        %v1917 = vpop.permute.xlu0 %1916
        %1918 = vset.pattern.permute.xlu0 0
        %1919 = vperm.xlu0 %1918, %v1900
        %v1920 = vpop.permute.xlu0 %1919
        %1921 = vset.pattern.permute.xlu0 0
        %1922 = vperm.xlu0 %1921, %v1901
        %v1923 = vpop.permute.xlu0 %1922
        %1924 = vset.pattern.permute.xlu0 0
        %1925 = vperm.xlu0 %1924, %v1902
        %v1926 = vpop.permute.xlu0 %1925
        %1927 = vset.pattern.permute.xlu0 0
        %1928 = vperm.xlu0 %1927, %v1903
        %v1929 = vpop.permute.xlu0 %1928
        %1930 = vset.pattern.permute.xlu0 0
        %1931 = vperm.xlu0 %1930, %v1904
        %v1932 = vpop.permute.xlu0 %1931
        %1933 = vset.pattern.permute.xlu0 0
        %1934 = vperm.xlu0 %1933, %v1905
        %v1935 = vpop.permute.xlu0 %1934
        %1936 = vset.pattern.permute.xlu0 0
        %1937 = vperm.xlu0 %1936, %v1906
        %v1938 = vpop.permute.xlu0 %1937
        %1939 = vset.pattern.permute.xlu0 0
        %1940 = vperm.xlu0 %1939, %v1907
        %v1941 = vpop.permute.xlu0 %1940
        %1942 = vset.pattern.permute.xlu0 0
        %1943 = vperm.xlu0 %1942, %v1908
        %v1944 = vpop.permute.xlu0 %1943
        %1945 = vset.pattern.permute.xlu0 0
        %1946 = vperm.xlu0 %1945, %v1909
        %v1947 = vpop.permute.xlu0 %1946
        %1948 = vset.pattern.permute.xlu0 0
        %1949 = vperm.xlu0 %1948, %v1910
        %v1950 = vpop.permute.xlu0 %1949
        %1951 = vset.pattern.permute.xlu0 0
        %1952 = vperm.xlu0 %1951, %v1911
        %v1953 = vpop.permute.xlu0 %1952
        %1954 = vset.pattern.permute.xlu0 0
        %1955 = vperm.xlu0 %1954, %v1912
        %v1956 = vpop.permute.xlu0 %1955
        %1957 = vset.pattern.permute.xlu0 0
        %1958 = vperm.xlu0 %1957, %v1913
        %v1959 = vpop.permute.xlu0 %1958
        %1960 = vset.pattern.permute.xlu0 0
        %1961 = vperm.xlu0 %1960, %v1914
        %v1962 = vpop.permute.xlu0 %1961
        %vm1963 = vcmp.eq.s32.totalorder %v1917, 1
        %vm1964 = vcmp.eq.s32.totalorder %v1920, 1
        %vm1965 = vcmp.eq.s32.totalorder %v1923, 1
        %vm1966 = vcmp.eq.s32.totalorder %v1926, 1
        %vm1967 = vcmp.eq.s32.totalorder %v1929, 1
        %vm1968 = vcmp.eq.s32.totalorder %v1932, 1
        %vm1969 = vcmp.eq.s32.totalorder %v1935, 1
        %vm1970 = vcmp.eq.s32.totalorder %v1938, 1
        %vm1971 = vcmp.eq.s32.totalorder %v1941, 1
        %vm1972 = vcmp.eq.s32.totalorder %v1944, 1
        %vm1973 = vcmp.eq.s32.totalorder %v1947, 1
        %vm1974 = vcmp.eq.s32.totalorder %v1950, 1
        %vm1975 = vcmp.eq.s32.totalorder %v1953, 1
        %vm1976 = vcmp.eq.s32.totalorder %v1956, 1
        %vm1977 = vcmp.eq.s32.totalorder %v1959, 1
        %vm1978 = vcmp.eq.s32.totalorder %v1962, 1
        %v1979 = vsel %vm1963, %v761, -1e+30
        %v1980 = vsel %vm1964, %v761, -1e+30
        %v1981 = vsel %vm1965, %v761, -1e+30
        %v1982 = vsel %vm1966, %v761, -1e+30
        %v1983 = vsel %vm1967, %v761, -1e+30
        %v1984 = vsel %vm1968, %v761, -1e+30
        %v1985 = vsel %vm1969, %v761, -1e+30
        %v1986 = vsel %vm1970, %v761, -1e+30
        %v1987 = vsel %vm1971, %v761, -1e+30
        %v1988 = vsel %vm1972, %v761, -1e+30
        %v1989 = vsel %vm1973, %v761, -1e+30
        %v1990 = vsel %vm1974, %v761, -1e+30
        %v1991 = vsel %vm1975, %v761, -1e+30
        %v1992 = vsel %vm1976, %v761, -1e+30
        %v1993 = vsel %vm1977, %v761, -1e+30
        %v1994 = vsel %vm1978, %v761, -1e+30
        %v1995 = vrot.slane %v1979, 4
        %v1996 = vmax.f32 %v1979, %v1995
        %v1997 = vrot.slane %v1996, 2
        %v1998 = vmax.f32 %v1996, %v1997
        %v1999 = vrot.slane %v1998, 1
        %v2000 = vmax.f32 %v1998, %v1999
        %v2001 = vrot.slane %v1980, 4
        %v2002 = vmax.f32 %v1980, %v2001
        %v2003 = vrot.slane %v2002, 2
        %v2004 = vmax.f32 %v2002, %v2003
        %v2005 = vrot.slane %v2004, 1
        %v2006 = vmax.f32 %v2004, %v2005
        %v2007 = vrot.slane %v1981, 4
        %v2008 = vmax.f32 %v1981, %v2007
        %v2009 = vrot.slane %v2008, 2
        %v2010 = vmax.f32 %v2008, %v2009
        %v2011 = vrot.slane %v2010, 1
        %v2012 = vmax.f32 %v2010, %v2011
        %v2013 = vrot.slane %v1982, 4
        %v2014 = vmax.f32 %v1982, %v2013
        %v2015 = vrot.slane %v2014, 2
        %v2016 = vmax.f32 %v2014, %v2015
        %v2017 = vrot.slane %v2016, 1
        %v2018 = vmax.f32 %v2016, %v2017
        %v2019 = vrot.slane %v1983, 4
        %v2020 = vmax.f32 %v1983, %v2019
        %v2021 = vrot.slane %v2020, 2
        %v2022 = vmax.f32 %v2020, %v2021
        %v2023 = vrot.slane %v2022, 1
        %v2024 = vmax.f32 %v2022, %v2023
        %v2025 = vrot.slane %v1984, 4
        %v2026 = vmax.f32 %v1984, %v2025
        %v2027 = vrot.slane %v2026, 2
        %v2028 = vmax.f32 %v2026, %v2027
        %v2029 = vrot.slane %v2028, 1
        %v2030 = vmax.f32 %v2028, %v2029
        %v2031 = vrot.slane %v1985, 4
        %v2032 = vmax.f32 %v1985, %v2031
        %v2033 = vrot.slane %v2032, 2
        %v2034 = vmax.f32 %v2032, %v2033
        %v2035 = vrot.slane %v2034, 1
        %v2036 = vmax.f32 %v2034, %v2035
        %v2037 = vrot.slane %v1986, 4
        %v2038 = vmax.f32 %v1986, %v2037
        %v2039 = vrot.slane %v2038, 2
        %v2040 = vmax.f32 %v2038, %v2039
        %v2041 = vrot.slane %v2040, 1
        %v2042 = vmax.f32 %v2040, %v2041
        %v2043 = vrot.slane %v1987, 4
        %v2044 = vmax.f32 %v1987, %v2043
        %v2045 = vrot.slane %v2044, 2
        %v2046 = vmax.f32 %v2044, %v2045
        %v2047 = vrot.slane %v2046, 1
        %v2048 = vmax.f32 %v2046, %v2047
        %v2049 = vrot.slane %v1988, 4
        %v2050 = vmax.f32 %v1988, %v2049
        %v2051 = vrot.slane %v2050, 2
        %v2052 = vmax.f32 %v2050, %v2051
        %v2053 = vrot.slane %v2052, 1
        %v2054 = vmax.f32 %v2052, %v2053
        %v2055 = vrot.slane %v1989, 4
        %v2056 = vmax.f32 %v1989, %v2055
        %v2057 = vrot.slane %v2056, 2
        %v2058 = vmax.f32 %v2056, %v2057
        %v2059 = vrot.slane %v2058, 1
        %v2060 = vmax.f32 %v2058, %v2059
        %v2061 = vrot.slane %v1990, 4
        %v2062 = vmax.f32 %v1990, %v2061
        %v2063 = vrot.slane %v2062, 2
        %v2064 = vmax.f32 %v2062, %v2063
        %v2065 = vrot.slane %v2064, 1
        %v2066 = vmax.f32 %v2064, %v2065
        %v2067 = vrot.slane %v1991, 4
        %v2068 = vmax.f32 %v1991, %v2067
        %v2069 = vrot.slane %v2068, 2
        %v2070 = vmax.f32 %v2068, %v2069
        %v2071 = vrot.slane %v2070, 1
        %v2072 = vmax.f32 %v2070, %v2071
        %v2073 = vrot.slane %v1992, 4
        %v2074 = vmax.f32 %v1992, %v2073
        %v2075 = vrot.slane %v2074, 2
        %v2076 = vmax.f32 %v2074, %v2075
        %v2077 = vrot.slane %v2076, 1
        %v2078 = vmax.f32 %v2076, %v2077
        %v2079 = vrot.slane %v1993, 4
        %v2080 = vmax.f32 %v1993, %v2079
        %v2081 = vrot.slane %v2080, 2
        %v2082 = vmax.f32 %v2080, %v2081
        %v2083 = vrot.slane %v2082, 1
        %v2084 = vmax.f32 %v2082, %v2083
        %v2085 = vrot.slane %v1994, 4
        %v2086 = vmax.f32 %v1994, %v2085
        %v2087 = vrot.slane %v2086, 2
        %v2088 = vmax.f32 %v2086, %v2087
        %v2089 = vrot.slane %v2088, 1
        %v2090 = vmax.f32 %v2088, %v2089
        %v2091 = vmax.f32 %v1723, %v2000
        %v2092 = vmax.f32 %v1724, %v2006
        %v2093 = vmax.f32 %v1725, %v2012
        %v2094 = vmax.f32 %v1726, %v2018
        %v2095 = vmax.f32 %v1727, %v2024
        %v2096 = vmax.f32 %v1728, %v2030
        %v2097 = vmax.f32 %v1729, %v2036
        %v2098 = vmax.f32 %v1730, %v2042
        %v2099 = vmax.f32 %v1731, %v2048
        %v2100 = vmax.f32 %v1732, %v2054
        %v2101 = vmax.f32 %v1733, %v2060
        %v2102 = vmax.f32 %v1734, %v2066
        %v2103 = vmax.f32 %v1735, %v2072
        %v2104 = vmax.f32 %v1736, %v2078
        %v2105 = vmax.f32 %v1737, %v2084
        %v2106 = vmax.f32 %v1738, %v2090
        %v2107 = vcvt.s32.f32 %v1899
        %v2108 = vcvt.s32.f32 %v1900
        %v2109 = vcvt.s32.f32 %v1901
        %v2110 = vcvt.s32.f32 %v1902
        %v2111 = vcvt.s32.f32 %v1903
        %v2112 = vcvt.s32.f32 %v1904
        %v2113 = vcvt.s32.f32 %v1905
        %v2114 = vcvt.s32.f32 %v1906
        %v2115 = vcvt.s32.f32 %v1907
        %v2116 = vcvt.s32.f32 %v1908
        %v2117 = vcvt.s32.f32 %v1909
        %v2118 = vcvt.s32.f32 %v1910
        %v2119 = vcvt.s32.f32 %v1911
        %v2120 = vcvt.s32.f32 %v1912
        %v2121 = vcvt.s32.f32 %v1913
        %v2122 = vcvt.s32.f32 %v1914
        %v2123 = vsel %vm1018, %v2107, -inf
        %v2124 = vrot.slane %v2123, 4
        %v2125 = vmax.f32 %v2123, %v2124
        %v2126 = vrot.slane %v2125, 2
        %v2127 = vmax.f32 %v2125, %v2126
        %v2128 = vrot.slane %v2127, 1
        %v2129 = vmax.f32 %v2127, %v2128
        %v2130 = vsel %vm1018, %v2108, -inf
        %v2131 = vrot.slane %v2130, 4
        %v2132 = vmax.f32 %v2130, %v2131
        %v2133 = vrot.slane %v2132, 2
        %v2134 = vmax.f32 %v2132, %v2133
        %v2135 = vrot.slane %v2134, 1
        %v2136 = vmax.f32 %v2134, %v2135
        %v2137 = vsel %vm1018, %v2109, -inf
        %v2138 = vrot.slane %v2137, 4
        %v2139 = vmax.f32 %v2137, %v2138
        %v2140 = vrot.slane %v2139, 2
        %v2141 = vmax.f32 %v2139, %v2140
        %v2142 = vrot.slane %v2141, 1
        %v2143 = vmax.f32 %v2141, %v2142
        %v2144 = vsel %vm1018, %v2110, -inf
        %v2145 = vrot.slane %v2144, 4
        %v2146 = vmax.f32 %v2144, %v2145
        %v2147 = vrot.slane %v2146, 2
        %v2148 = vmax.f32 %v2146, %v2147
        %v2149 = vrot.slane %v2148, 1
        %v2150 = vmax.f32 %v2148, %v2149
        %v2151 = vsel %vm1018, %v2111, -inf
        %v2152 = vrot.slane %v2151, 4
        %v2153 = vmax.f32 %v2151, %v2152
        %v2154 = vrot.slane %v2153, 2
        %v2155 = vmax.f32 %v2153, %v2154
        %v2156 = vrot.slane %v2155, 1
        %v2157 = vmax.f32 %v2155, %v2156
        %v2158 = vsel %vm1018, %v2112, -inf
        %v2159 = vrot.slane %v2158, 4
        %v2160 = vmax.f32 %v2158, %v2159
        %v2161 = vrot.slane %v2160, 2
        %v2162 = vmax.f32 %v2160, %v2161
        %v2163 = vrot.slane %v2162, 1
        %v2164 = vmax.f32 %v2162, %v2163
        %v2165 = vsel %vm1018, %v2113, -inf
        %v2166 = vrot.slane %v2165, 4
        %v2167 = vmax.f32 %v2165, %v2166
        %v2168 = vrot.slane %v2167, 2
        %v2169 = vmax.f32 %v2167, %v2168
        %v2170 = vrot.slane %v2169, 1
        %v2171 = vmax.f32 %v2169, %v2170
        %v2172 = vsel %vm1018, %v2114, -inf
        %v2173 = vrot.slane %v2172, 4
        %v2174 = vmax.f32 %v2172, %v2173
        %v2175 = vrot.slane %v2174, 2
        %v2176 = vmax.f32 %v2174, %v2175
        %v2177 = vrot.slane %v2176, 1
        %v2178 = vmax.f32 %v2176, %v2177
        %v2179 = vsel %vm1018, %v2115, -inf
        %v2180 = vrot.slane %v2179, 4
        %v2181 = vmax.f32 %v2179, %v2180
        %v2182 = vrot.slane %v2181, 2
        %v2183 = vmax.f32 %v2181, %v2182
        %v2184 = vrot.slane %v2183, 1
        %v2185 = vmax.f32 %v2183, %v2184
        %v2186 = vsel %vm1018, %v2116, -inf
        %v2187 = vrot.slane %v2186, 4
        %v2188 = vmax.f32 %v2186, %v2187
        %v2189 = vrot.slane %v2188, 2
        %v2190 = vmax.f32 %v2188, %v2189
        %v2191 = vrot.slane %v2190, 1
        %v2192 = vmax.f32 %v2190, %v2191
        %v2193 = vsel %vm1018, %v2117, -inf
        %v2194 = vrot.slane %v2193, 4
        %v2195 = vmax.f32 %v2193, %v2194
        %v2196 = vrot.slane %v2195, 2
        %v2197 = vmax.f32 %v2195, %v2196
        %v2198 = vrot.slane %v2197, 1
        %v2199 = vmax.f32 %v2197, %v2198
        %v2200 = vsel %vm1018, %v2118, -inf
        %v2201 = vrot.slane %v2200, 4
        %v2202 = vmax.f32 %v2200, %v2201
        %v2203 = vrot.slane %v2202, 2
        %v2204 = vmax.f32 %v2202, %v2203
        %v2205 = vrot.slane %v2204, 1
        %v2206 = vmax.f32 %v2204, %v2205
        %v2207 = vsel %vm1018, %v2119, -inf
        %v2208 = vrot.slane %v2207, 4
        %v2209 = vmax.f32 %v2207, %v2208
        %v2210 = vrot.slane %v2209, 2
        %v2211 = vmax.f32 %v2209, %v2210
        %v2212 = vrot.slane %v2211, 1
        %v2213 = vmax.f32 %v2211, %v2212
        %v2214 = vsel %vm1018, %v2120, -inf
        %v2215 = vrot.slane %v2214, 4
        %v2216 = vmax.f32 %v2214, %v2215
        %v2217 = vrot.slane %v2216, 2
        %v2218 = vmax.f32 %v2216, %v2217
        %v2219 = vrot.slane %v2218, 1
        %v2220 = vmax.f32 %v2218, %v2219
        %v2221 = vsel %vm1018, %v2121, -inf
        %v2222 = vrot.slane %v2221, 4
        %v2223 = vmax.f32 %v2221, %v2222
        %v2224 = vrot.slane %v2223, 2
        %v2225 = vmax.f32 %v2223, %v2224
        %v2226 = vrot.slane %v2225, 1
        %v2227 = vmax.f32 %v2225, %v2226
        %v2228 = vsel %vm1018, %v2122, -inf
        %v2229 = vrot.slane %v2228, 4
        %v2230 = vmax.f32 %v2228, %v2229
        %v2231 = vrot.slane %v2230, 2
        %v2232 = vmax.f32 %v2230, %v2231
        %v2233 = vrot.slane %v2232, 1
        %v2234 = vmax.f32 %v2232, %v2233
        %v2235 = vmax.f32 %v1867, %v2129
        %v2236 = vmax.f32 %v1868, %v2136
        %v2237 = vmax.f32 %v1869, %v2143
        %v2238 = vmax.f32 %v1870, %v2150
        %v2239 = vmax.f32 %v1871, %v2157
        %v2240 = vmax.f32 %v1872, %v2164
        %v2241 = vmax.f32 %v1873, %v2171
        %v2242 = vmax.f32 %v1874, %v2178
        %v2243 = vmax.f32 %v1875, %v2185
        %v2244 = vmax.f32 %v1876, %v2192
        %v2245 = vmax.f32 %v1877, %v2199
        %v2246 = vmax.f32 %v1878, %v2206
        %v2247 = vmax.f32 %v1879, %v2213
        %v2248 = vmax.f32 %v1880, %v2220
        %v2249 = vmax.f32 %v1881, %v2227
        %v2250 = vmax.f32 %v1882, %v2234
        %vm2251 = vcmp.eq.s32.totalorder %v776, 0
        %vm2252 = vcmp.eq.s32.totalorder %v776, 1
        %vm2253 = vcmp.eq.s32.totalorder %v776, 2
        %vm2254 = vcmp.eq.s32.totalorder %v776, 3
        %vm2255 = vcmp.eq.s32.totalorder %v776, 4
        %vm2256 = vcmp.eq.s32.totalorder %v776, 5
        %vm2257 = vcmp.eq.s32.totalorder %v776, 6
        %vm2258 = vcmp.eq.s32.totalorder %v776, 7
        %vm2259 = vcmp.eq.s32.totalorder %v776, 8
        %vm2260 = vcmp.eq.s32.totalorder %v776, 9
        %vm2261 = vcmp.eq.s32.totalorder %v776, 10
        %vm2262 = vcmp.eq.s32.totalorder %v776, 11
        %vm2263 = vcmp.eq.s32.totalorder %v776, 12
        %vm2264 = vcmp.eq.s32.totalorder %v776, 13
        %vm2265 = vcmp.eq.s32.totalorder %v776, 14
        %vm2266 = vcmp.eq.s32.totalorder %v776, 15
        %v2267 = vsel %vm2251, 1, 0
        %v2268 = vsel %vm2252, 1, 0
        %v2269 = vsel %vm2253, 1, 0
        %v2270 = vsel %vm2254, 1, 0
        %v2271 = vsel %vm2255, 1, 0
        %v2272 = vsel %vm2256, 1, 0
        %v2273 = vsel %vm2257, 1, 0
        %v2274 = vsel %vm2258, 1, 0
        %v2275 = vsel %vm2259, 1, 0
        %v2276 = vsel %vm2260, 1, 0
        %v2277 = vsel %vm2261, 1, 0
        %v2278 = vsel %vm2262, 1, 0
        %v2279 = vsel %vm2263, 1, 0
        %v2280 = vsel %vm2264, 1, 0
        %v2281 = vsel %vm2265, 1, 0
        %v2282 = vsel %vm2266, 1, 0
        %2283 = vset.pattern.permute.xlu0 0
        %2284 = vperm.xlu0 %2283, %v2267
        %v2285 = vpop.permute.xlu0 %2284
        %2286 = vset.pattern.permute.xlu0 0
        %2287 = vperm.xlu0 %2286, %v2268
        %v2288 = vpop.permute.xlu0 %2287
        %2289 = vset.pattern.permute.xlu0 0
        %2290 = vperm.xlu0 %2289, %v2269
        %v2291 = vpop.permute.xlu0 %2290
        %2292 = vset.pattern.permute.xlu0 0
        %2293 = vperm.xlu0 %2292, %v2270
        %v2294 = vpop.permute.xlu0 %2293
        %2295 = vset.pattern.permute.xlu0 0
        %2296 = vperm.xlu0 %2295, %v2271
        %v2297 = vpop.permute.xlu0 %2296
        %2298 = vset.pattern.permute.xlu0 0
        %2299 = vperm.xlu0 %2298, %v2272
        %v2300 = vpop.permute.xlu0 %2299
        %2301 = vset.pattern.permute.xlu0 0
        %2302 = vperm.xlu0 %2301, %v2273
        %v2303 = vpop.permute.xlu0 %2302
        %2304 = vset.pattern.permute.xlu0 0
        %2305 = vperm.xlu0 %2304, %v2274
        %v2306 = vpop.permute.xlu0 %2305
        %2307 = vset.pattern.permute.xlu0 0
        %2308 = vperm.xlu0 %2307, %v2275
        %v2309 = vpop.permute.xlu0 %2308
        %2310 = vset.pattern.permute.xlu0 0
        %2311 = vperm.xlu0 %2310, %v2276
        %v2312 = vpop.permute.xlu0 %2311
        %2313 = vset.pattern.permute.xlu0 0
        %2314 = vperm.xlu0 %2313, %v2277
        %v2315 = vpop.permute.xlu0 %2314
        %2316 = vset.pattern.permute.xlu0 0
        %2317 = vperm.xlu0 %2316, %v2278
        %v2318 = vpop.permute.xlu0 %2317
        %2319 = vset.pattern.permute.xlu0 0
        %2320 = vperm.xlu0 %2319, %v2279
        %v2321 = vpop.permute.xlu0 %2320
        %2322 = vset.pattern.permute.xlu0 0
        %2323 = vperm.xlu0 %2322, %v2280
        %v2324 = vpop.permute.xlu0 %2323
        %2325 = vset.pattern.permute.xlu0 0
        %2326 = vperm.xlu0 %2325, %v2281
        %v2327 = vpop.permute.xlu0 %2326
        %2328 = vset.pattern.permute.xlu0 0
        %2329 = vperm.xlu0 %2328, %v2282
        %v2330 = vpop.permute.xlu0 %2329
        %vm2331 = vcmp.eq.s32.totalorder %v2285, 1
        %vm2332 = vcmp.eq.s32.totalorder %v2288, 1
        %vm2333 = vcmp.eq.s32.totalorder %v2291, 1
        %vm2334 = vcmp.eq.s32.totalorder %v2294, 1
        %vm2335 = vcmp.eq.s32.totalorder %v2297, 1
        %vm2336 = vcmp.eq.s32.totalorder %v2300, 1
        %vm2337 = vcmp.eq.s32.totalorder %v2303, 1
        %vm2338 = vcmp.eq.s32.totalorder %v2306, 1
        %vm2339 = vcmp.eq.s32.totalorder %v2309, 1
        %vm2340 = vcmp.eq.s32.totalorder %v2312, 1
        %vm2341 = vcmp.eq.s32.totalorder %v2315, 1
        %vm2342 = vcmp.eq.s32.totalorder %v2318, 1
        %vm2343 = vcmp.eq.s32.totalorder %v2321, 1
        %vm2344 = vcmp.eq.s32.totalorder %v2324, 1
        %vm2345 = vcmp.eq.s32.totalorder %v2327, 1
        %vm2346 = vcmp.eq.s32.totalorder %v2330, 1
        %v2347 = vsel %vm2331, %v766, -1e+30
        %v2348 = vsel %vm2332, %v766, -1e+30
        %v2349 = vsel %vm2333, %v766, -1e+30
        %v2350 = vsel %vm2334, %v766, -1e+30
        %v2351 = vsel %vm2335, %v766, -1e+30
        %v2352 = vsel %vm2336, %v766, -1e+30
        %v2353 = vsel %vm2337, %v766, -1e+30
        %v2354 = vsel %vm2338, %v766, -1e+30
        %v2355 = vsel %vm2339, %v766, -1e+30
        %v2356 = vsel %vm2340, %v766, -1e+30
        %v2357 = vsel %vm2341, %v766, -1e+30
        %v2358 = vsel %vm2342, %v766, -1e+30
        %v2359 = vsel %vm2343, %v766, -1e+30
        %v2360 = vsel %vm2344, %v766, -1e+30
        %v2361 = vsel %vm2345, %v766, -1e+30
        %v2362 = vsel %vm2346, %v766, -1e+30
        %v2363 = vrot.slane %v2347, 4
        %v2364 = vmax.f32 %v2347, %v2363
        %v2365 = vrot.slane %v2364, 2
        %v2366 = vmax.f32 %v2364, %v2365
        %v2367 = vrot.slane %v2366, 1
        %v2368 = vmax.f32 %v2366, %v2367
        %v2369 = vrot.slane %v2348, 4
        %v2370 = vmax.f32 %v2348, %v2369
        %v2371 = vrot.slane %v2370, 2
        %v2372 = vmax.f32 %v2370, %v2371
        %v2373 = vrot.slane %v2372, 1
        %v2374 = vmax.f32 %v2372, %v2373
        %v2375 = vrot.slane %v2349, 4
        %v2376 = vmax.f32 %v2349, %v2375
        %v2377 = vrot.slane %v2376, 2
        %v2378 = vmax.f32 %v2376, %v2377
        %v2379 = vrot.slane %v2378, 1
        %v2380 = vmax.f32 %v2378, %v2379
        %v2381 = vrot.slane %v2350, 4
        %v2382 = vmax.f32 %v2350, %v2381
        %v2383 = vrot.slane %v2382, 2
        %v2384 = vmax.f32 %v2382, %v2383
        %v2385 = vrot.slane %v2384, 1
        %v2386 = vmax.f32 %v2384, %v2385
        %v2387 = vrot.slane %v2351, 4
        %v2388 = vmax.f32 %v2351, %v2387
        %v2389 = vrot.slane %v2388, 2
        %v2390 = vmax.f32 %v2388, %v2389
        %v2391 = vrot.slane %v2390, 1
        %v2392 = vmax.f32 %v2390, %v2391
        %v2393 = vrot.slane %v2352, 4
        %v2394 = vmax.f32 %v2352, %v2393
        %v2395 = vrot.slane %v2394, 2
        %v2396 = vmax.f32 %v2394, %v2395
        %v2397 = vrot.slane %v2396, 1
        %v2398 = vmax.f32 %v2396, %v2397
        %v2399 = vrot.slane %v2353, 4
        %v2400 = vmax.f32 %v2353, %v2399
        %v2401 = vrot.slane %v2400, 2
        %v2402 = vmax.f32 %v2400, %v2401
        %v2403 = vrot.slane %v2402, 1
        %v2404 = vmax.f32 %v2402, %v2403
        %v2405 = vrot.slane %v2354, 4
        %v2406 = vmax.f32 %v2354, %v2405
        %v2407 = vrot.slane %v2406, 2
        %v2408 = vmax.f32 %v2406, %v2407
        %v2409 = vrot.slane %v2408, 1
        %v2410 = vmax.f32 %v2408, %v2409
        %v2411 = vrot.slane %v2355, 4
        %v2412 = vmax.f32 %v2355, %v2411
        %v2413 = vrot.slane %v2412, 2
        %v2414 = vmax.f32 %v2412, %v2413
        %v2415 = vrot.slane %v2414, 1
        %v2416 = vmax.f32 %v2414, %v2415
        %v2417 = vrot.slane %v2356, 4
        %v2418 = vmax.f32 %v2356, %v2417
        %v2419 = vrot.slane %v2418, 2
        %v2420 = vmax.f32 %v2418, %v2419
        %v2421 = vrot.slane %v2420, 1
        %v2422 = vmax.f32 %v2420, %v2421
        %v2423 = vrot.slane %v2357, 4
        %v2424 = vmax.f32 %v2357, %v2423
        %v2425 = vrot.slane %v2424, 2
        %v2426 = vmax.f32 %v2424, %v2425
        %v2427 = vrot.slane %v2426, 1
        %v2428 = vmax.f32 %v2426, %v2427
        %v2429 = vrot.slane %v2358, 4
        %v2430 = vmax.f32 %v2358, %v2429
        %v2431 = vrot.slane %v2430, 2
        %v2432 = vmax.f32 %v2430, %v2431
        %v2433 = vrot.slane %v2432, 1
        %v2434 = vmax.f32 %v2432, %v2433
        %v2435 = vrot.slane %v2359, 4
        %v2436 = vmax.f32 %v2359, %v2435
        %v2437 = vrot.slane %v2436, 2
        %v2438 = vmax.f32 %v2436, %v2437
        %v2439 = vrot.slane %v2438, 1
        %v2440 = vmax.f32 %v2438, %v2439
        %v2441 = vrot.slane %v2360, 4
        %v2442 = vmax.f32 %v2360, %v2441
        %v2443 = vrot.slane %v2442, 2
        %v2444 = vmax.f32 %v2442, %v2443
        %v2445 = vrot.slane %v2444, 1
        %v2446 = vmax.f32 %v2444, %v2445
        %v2447 = vrot.slane %v2361, 4
        %v2448 = vmax.f32 %v2361, %v2447
        %v2449 = vrot.slane %v2448, 2
        %v2450 = vmax.f32 %v2448, %v2449
        %v2451 = vrot.slane %v2450, 1
        %v2452 = vmax.f32 %v2450, %v2451
        %v2453 = vrot.slane %v2362, 4
        %v2454 = vmax.f32 %v2362, %v2453
        %v2455 = vrot.slane %v2454, 2
        %v2456 = vmax.f32 %v2454, %v2455
        %v2457 = vrot.slane %v2456, 1
        %v2458 = vmax.f32 %v2456, %v2457
        %v2459 = vmax.f32 %v2091, %v2368
        %v2460 = vmax.f32 %v2092, %v2374
        %v2461 = vmax.f32 %v2093, %v2380
        %v2462 = vmax.f32 %v2094, %v2386
        %v2463 = vmax.f32 %v2095, %v2392
        %v2464 = vmax.f32 %v2096, %v2398
        %v2465 = vmax.f32 %v2097, %v2404
        %v2466 = vmax.f32 %v2098, %v2410
        %v2467 = vmax.f32 %v2099, %v2416
        %v2468 = vmax.f32 %v2100, %v2422
        %v2469 = vmax.f32 %v2101, %v2428
        %v2470 = vmax.f32 %v2102, %v2434
        %v2471 = vmax.f32 %v2103, %v2440
        %v2472 = vmax.f32 %v2104, %v2446
        %v2473 = vmax.f32 %v2105, %v2452
        %v2474 = vmax.f32 %v2106, %v2458
        %v2475 = vcvt.s32.f32 %v2267
        %v2476 = vcvt.s32.f32 %v2268
        %v2477 = vcvt.s32.f32 %v2269
        %v2478 = vcvt.s32.f32 %v2270
        %v2479 = vcvt.s32.f32 %v2271
        %v2480 = vcvt.s32.f32 %v2272
        %v2481 = vcvt.s32.f32 %v2273
        %v2482 = vcvt.s32.f32 %v2274
        %v2483 = vcvt.s32.f32 %v2275
        %v2484 = vcvt.s32.f32 %v2276
        %v2485 = vcvt.s32.f32 %v2277
        %v2486 = vcvt.s32.f32 %v2278
        %v2487 = vcvt.s32.f32 %v2279
        %v2488 = vcvt.s32.f32 %v2280
        %v2489 = vcvt.s32.f32 %v2281
        %v2490 = vcvt.s32.f32 %v2282
        %v2491 = vsel %vm1018, %v2475, -inf
        %v2492 = vrot.slane %v2491, 4
        %v2493 = vmax.f32 %v2491, %v2492
        %v2494 = vrot.slane %v2493, 2
        %v2495 = vmax.f32 %v2493, %v2494
        %v2496 = vrot.slane %v2495, 1
        %v2497 = vmax.f32 %v2495, %v2496
        %v2498 = vsel %vm1018, %v2476, -inf
        %v2499 = vrot.slane %v2498, 4
        %v2500 = vmax.f32 %v2498, %v2499
        %v2501 = vrot.slane %v2500, 2
        %v2502 = vmax.f32 %v2500, %v2501
        %v2503 = vrot.slane %v2502, 1
        %v2504 = vmax.f32 %v2502, %v2503
        %v2505 = vsel %vm1018, %v2477, -inf
        %v2506 = vrot.slane %v2505, 4
        %v2507 = vmax.f32 %v2505, %v2506
        %v2508 = vrot.slane %v2507, 2
        %v2509 = vmax.f32 %v2507, %v2508
        %v2510 = vrot.slane %v2509, 1
        %v2511 = vmax.f32 %v2509, %v2510
        %v2512 = vsel %vm1018, %v2478, -inf
        %v2513 = vrot.slane %v2512, 4
        %v2514 = vmax.f32 %v2512, %v2513
        %v2515 = vrot.slane %v2514, 2
        %v2516 = vmax.f32 %v2514, %v2515
        %v2517 = vrot.slane %v2516, 1
        %v2518 = vmax.f32 %v2516, %v2517
        %v2519 = vsel %vm1018, %v2479, -inf
        %v2520 = vrot.slane %v2519, 4
        %v2521 = vmax.f32 %v2519, %v2520
        %v2522 = vrot.slane %v2521, 2
        %v2523 = vmax.f32 %v2521, %v2522
        %v2524 = vrot.slane %v2523, 1
        %v2525 = vmax.f32 %v2523, %v2524
        %v2526 = vsel %vm1018, %v2480, -inf
        %v2527 = vrot.slane %v2526, 4
        %v2528 = vmax.f32 %v2526, %v2527
        %v2529 = vrot.slane %v2528, 2
        %v2530 = vmax.f32 %v2528, %v2529
        %v2531 = vrot.slane %v2530, 1
        %v2532 = vmax.f32 %v2530, %v2531
        %v2533 = vsel %vm1018, %v2481, -inf
        %v2534 = vrot.slane %v2533, 4
        %v2535 = vmax.f32 %v2533, %v2534
        %v2536 = vrot.slane %v2535, 2
        %v2537 = vmax.f32 %v2535, %v2536
        %v2538 = vrot.slane %v2537, 1
        %v2539 = vmax.f32 %v2537, %v2538
        %v2540 = vsel %vm1018, %v2482, -inf
        %v2541 = vrot.slane %v2540, 4
        %v2542 = vmax.f32 %v2540, %v2541
        %v2543 = vrot.slane %v2542, 2
        %v2544 = vmax.f32 %v2542, %v2543
        %v2545 = vrot.slane %v2544, 1
        %v2546 = vmax.f32 %v2544, %v2545
        %v2547 = vsel %vm1018, %v2483, -inf
        %v2548 = vrot.slane %v2547, 4
        %v2549 = vmax.f32 %v2547, %v2548
        %v2550 = vrot.slane %v2549, 2
        %v2551 = vmax.f32 %v2549, %v2550
        %v2552 = vrot.slane %v2551, 1
        %v2553 = vmax.f32 %v2551, %v2552
        %v2554 = vsel %vm1018, %v2484, -inf
        %v2555 = vrot.slane %v2554, 4
        %v2556 = vmax.f32 %v2554, %v2555
        %v2557 = vrot.slane %v2556, 2
        %v2558 = vmax.f32 %v2556, %v2557
        %v2559 = vrot.slane %v2558, 1
        %v2560 = vmax.f32 %v2558, %v2559
        %v2561 = vsel %vm1018, %v2485, -inf
        %v2562 = vrot.slane %v2561, 4
        %v2563 = vmax.f32 %v2561, %v2562
        %v2564 = vrot.slane %v2563, 2
        %v2565 = vmax.f32 %v2563, %v2564
        %v2566 = vrot.slane %v2565, 1
        %v2567 = vmax.f32 %v2565, %v2566
        %v2568 = vsel %vm1018, %v2486, -inf
        %v2569 = vrot.slane %v2568, 4
        %v2570 = vmax.f32 %v2568, %v2569
        %v2571 = vrot.slane %v2570, 2
        %v2572 = vmax.f32 %v2570, %v2571
        %v2573 = vrot.slane %v2572, 1
        %v2574 = vmax.f32 %v2572, %v2573
        %v2575 = vsel %vm1018, %v2487, -inf
        %v2576 = vrot.slane %v2575, 4
        %v2577 = vmax.f32 %v2575, %v2576
        %v2578 = vrot.slane %v2577, 2
        %v2579 = vmax.f32 %v2577, %v2578
        %v2580 = vrot.slane %v2579, 1
        %v2581 = vmax.f32 %v2579, %v2580
        %v2582 = vsel %vm1018, %v2488, -inf
        %v2583 = vrot.slane %v2582, 4
        %v2584 = vmax.f32 %v2582, %v2583
        %v2585 = vrot.slane %v2584, 2
        %v2586 = vmax.f32 %v2584, %v2585
        %v2587 = vrot.slane %v2586, 1
        %v2588 = vmax.f32 %v2586, %v2587
        %v2589 = vsel %vm1018, %v2489, -inf
        %v2590 = vrot.slane %v2589, 4
        %v2591 = vmax.f32 %v2589, %v2590
        %v2592 = vrot.slane %v2591, 2
        %v2593 = vmax.f32 %v2591, %v2592
        %v2594 = vrot.slane %v2593, 1
        %v2595 = vmax.f32 %v2593, %v2594
        %v2596 = vsel %vm1018, %v2490, -inf
        %v2597 = vrot.slane %v2596, 4
        %v2598 = vmax.f32 %v2596, %v2597
        %v2599 = vrot.slane %v2598, 2
        %v2600 = vmax.f32 %v2598, %v2599
        %v2601 = vrot.slane %v2600, 1
        %v2602 = vmax.f32 %v2600, %v2601
        %v2603 = vmax.f32 %v2235, %v2497
        %v2604 = vmax.f32 %v2236, %v2504
        %v2605 = vmax.f32 %v2237, %v2511
        %v2606 = vmax.f32 %v2238, %v2518
        %v2607 = vmax.f32 %v2239, %v2525
        %v2608 = vmax.f32 %v2240, %v2532
        %v2609 = vmax.f32 %v2241, %v2539
        %v2610 = vmax.f32 %v2242, %v2546
        %v2611 = vmax.f32 %v2243, %v2553
        %v2612 = vmax.f32 %v2244, %v2560
        %v2613 = vmax.f32 %v2245, %v2567
        %v2614 = vmax.f32 %v2246, %v2574
        %v2615 = vmax.f32 %v2247, %v2581
        %v2616 = vmax.f32 %v2248, %v2588
        %v2617 = vmax.f32 %v2249, %v2595
        %v2618 = vmax.f32 %v2250, %v2602
        %vm2619 = vcmp.eq.s32.totalorder %v777, 0
        %vm2620 = vcmp.eq.s32.totalorder %v777, 1
        %vm2621 = vcmp.eq.s32.totalorder %v777, 2
        %vm2622 = vcmp.eq.s32.totalorder %v777, 3
        %vm2623 = vcmp.eq.s32.totalorder %v777, 4
        %vm2624 = vcmp.eq.s32.totalorder %v777, 5
        %vm2625 = vcmp.eq.s32.totalorder %v777, 6
        %vm2626 = vcmp.eq.s32.totalorder %v777, 7
        %vm2627 = vcmp.eq.s32.totalorder %v777, 8
        %vm2628 = vcmp.eq.s32.totalorder %v777, 9
        %vm2629 = vcmp.eq.s32.totalorder %v777, 10
        %vm2630 = vcmp.eq.s32.totalorder %v777, 11
        %vm2631 = vcmp.eq.s32.totalorder %v777, 12
        %vm2632 = vcmp.eq.s32.totalorder %v777, 13
        %vm2633 = vcmp.eq.s32.totalorder %v777, 14
        %vm2634 = vcmp.eq.s32.totalorder %v777, 15
        %v2635 = vsel %vm2619, 1, 0
        %v2636 = vsel %vm2620, 1, 0
        %v2637 = vsel %vm2621, 1, 0
        %v2638 = vsel %vm2622, 1, 0
        %v2639 = vsel %vm2623, 1, 0
        %v2640 = vsel %vm2624, 1, 0
        %v2641 = vsel %vm2625, 1, 0
        %v2642 = vsel %vm2626, 1, 0
        %v2643 = vsel %vm2627, 1, 0
        %v2644 = vsel %vm2628, 1, 0
        %v2645 = vsel %vm2629, 1, 0
        %v2646 = vsel %vm2630, 1, 0
        %v2647 = vsel %vm2631, 1, 0
        %v2648 = vsel %vm2632, 1, 0
        %v2649 = vsel %vm2633, 1, 0
        %v2650 = vsel %vm2634, 1, 0
        %2651 = vset.pattern.permute.xlu0 0
        %2652 = vperm.xlu0 %2651, %v2635
        %v2653 = vpop.permute.xlu0 %2652
        %2654 = vset.pattern.permute.xlu0 0
        %2655 = vperm.xlu0 %2654, %v2636
        %v2656 = vpop.permute.xlu0 %2655
        %2657 = vset.pattern.permute.xlu0 0
        %2658 = vperm.xlu0 %2657, %v2637
        %v2659 = vpop.permute.xlu0 %2658
        %2660 = vset.pattern.permute.xlu0 0
        %2661 = vperm.xlu0 %2660, %v2638
        %v2662 = vpop.permute.xlu0 %2661
        %2663 = vset.pattern.permute.xlu0 0
        %2664 = vperm.xlu0 %2663, %v2639
        %v2665 = vpop.permute.xlu0 %2664
        %2666 = vset.pattern.permute.xlu0 0
        %2667 = vperm.xlu0 %2666, %v2640
        %v2668 = vpop.permute.xlu0 %2667
        %2669 = vset.pattern.permute.xlu0 0
        %2670 = vperm.xlu0 %2669, %v2641
        %v2671 = vpop.permute.xlu0 %2670
        %2672 = vset.pattern.permute.xlu0 0
        %2673 = vperm.xlu0 %2672, %v2642
        %v2674 = vpop.permute.xlu0 %2673
        %2675 = vset.pattern.permute.xlu0 0
        %2676 = vperm.xlu0 %2675, %v2643
        %v2677 = vpop.permute.xlu0 %2676
        %2678 = vset.pattern.permute.xlu0 0
        %2679 = vperm.xlu0 %2678, %v2644
        %v2680 = vpop.permute.xlu0 %2679
        %2681 = vset.pattern.permute.xlu0 0
        %2682 = vperm.xlu0 %2681, %v2645
        %v2683 = vpop.permute.xlu0 %2682
        %2684 = vset.pattern.permute.xlu0 0
        %2685 = vperm.xlu0 %2684, %v2646
        %v2686 = vpop.permute.xlu0 %2685
        %2687 = vset.pattern.permute.xlu0 0
        %2688 = vperm.xlu0 %2687, %v2647
        %v2689 = vpop.permute.xlu0 %2688
        %2690 = vset.pattern.permute.xlu0 0
        %2691 = vperm.xlu0 %2690, %v2648
        %v2692 = vpop.permute.xlu0 %2691
        %2693 = vset.pattern.permute.xlu0 0
        %2694 = vperm.xlu0 %2693, %v2649
        %v2695 = vpop.permute.xlu0 %2694
        %2696 = vset.pattern.permute.xlu0 0
        %2697 = vperm.xlu0 %2696, %v2650
        %v2698 = vpop.permute.xlu0 %2697
        %vm2699 = vcmp.eq.s32.totalorder %v2653, 1
        %vm2700 = vcmp.eq.s32.totalorder %v2656, 1
        %vm2701 = vcmp.eq.s32.totalorder %v2659, 1
        %vm2702 = vcmp.eq.s32.totalorder %v2662, 1
        %vm2703 = vcmp.eq.s32.totalorder %v2665, 1
        %vm2704 = vcmp.eq.s32.totalorder %v2668, 1
        %vm2705 = vcmp.eq.s32.totalorder %v2671, 1
        %vm2706 = vcmp.eq.s32.totalorder %v2674, 1
        %vm2707 = vcmp.eq.s32.totalorder %v2677, 1
        %vm2708 = vcmp.eq.s32.totalorder %v2680, 1
        %vm2709 = vcmp.eq.s32.totalorder %v2683, 1
        %vm2710 = vcmp.eq.s32.totalorder %v2686, 1
        %vm2711 = vcmp.eq.s32.totalorder %v2689, 1
        %vm2712 = vcmp.eq.s32.totalorder %v2692, 1
        %vm2713 = vcmp.eq.s32.totalorder %v2695, 1
        %vm2714 = vcmp.eq.s32.totalorder %v2698, 1
        %v2715 = vsel %vm2699, %v769, -1e+30
        %v2716 = vsel %vm2700, %v769, -1e+30
        %v2717 = vsel %vm2701, %v769, -1e+30
        %v2718 = vsel %vm2702, %v769, -1e+30
        %v2719 = vsel %vm2703, %v769, -1e+30
        %v2720 = vsel %vm2704, %v769, -1e+30
        %v2721 = vsel %vm2705, %v769, -1e+30
        %v2722 = vsel %vm2706, %v769, -1e+30
        %v2723 = vsel %vm2707, %v769, -1e+30
        %v2724 = vsel %vm2708, %v769, -1e+30
        %v2725 = vsel %vm2709, %v769, -1e+30
        %v2726 = vsel %vm2710, %v769, -1e+30
        %v2727 = vsel %vm2711, %v769, -1e+30
        %v2728 = vsel %vm2712, %v769, -1e+30
        %v2729 = vsel %vm2713, %v769, -1e+30
        %v2730 = vsel %vm2714, %v769, -1e+30
        %v2731 = vrot.slane %v2715, 4
        %v2732 = vmax.f32 %v2715, %v2731
        %v2733 = vrot.slane %v2732, 2
        %v2734 = vmax.f32 %v2732, %v2733
        %v2735 = vrot.slane %v2734, 1
        %v2736 = vmax.f32 %v2734, %v2735
        %v2737 = vrot.slane %v2716, 4
        %v2738 = vmax.f32 %v2716, %v2737
        %v2739 = vrot.slane %v2738, 2
        %v2740 = vmax.f32 %v2738, %v2739
        %v2741 = vrot.slane %v2740, 1
        %v2742 = vmax.f32 %v2740, %v2741
        %v2743 = vrot.slane %v2717, 4
        %v2744 = vmax.f32 %v2717, %v2743
        %v2745 = vrot.slane %v2744, 2
        %v2746 = vmax.f32 %v2744, %v2745
        %v2747 = vrot.slane %v2746, 1
        %v2748 = vmax.f32 %v2746, %v2747
        %v2749 = vrot.slane %v2718, 4
        %v2750 = vmax.f32 %v2718, %v2749
        %v2751 = vrot.slane %v2750, 2
        %v2752 = vmax.f32 %v2750, %v2751
        %v2753 = vrot.slane %v2752, 1
        %v2754 = vmax.f32 %v2752, %v2753
        %v2755 = vrot.slane %v2719, 4
        %v2756 = vmax.f32 %v2719, %v2755
        %v2757 = vrot.slane %v2756, 2
        %v2758 = vmax.f32 %v2756, %v2757
        %v2759 = vrot.slane %v2758, 1
        %v2760 = vmax.f32 %v2758, %v2759
        %v2761 = vrot.slane %v2720, 4
        %v2762 = vmax.f32 %v2720, %v2761
        %v2763 = vrot.slane %v2762, 2
        %v2764 = vmax.f32 %v2762, %v2763
        %v2765 = vrot.slane %v2764, 1
        %v2766 = vmax.f32 %v2764, %v2765
        %v2767 = vrot.slane %v2721, 4
        %v2768 = vmax.f32 %v2721, %v2767
        %v2769 = vrot.slane %v2768, 2
        %v2770 = vmax.f32 %v2768, %v2769
        %v2771 = vrot.slane %v2770, 1
        %v2772 = vmax.f32 %v2770, %v2771
        %v2773 = vrot.slane %v2722, 4
        %v2774 = vmax.f32 %v2722, %v2773
        %v2775 = vrot.slane %v2774, 2
        %v2776 = vmax.f32 %v2774, %v2775
        %v2777 = vrot.slane %v2776, 1
        %v2778 = vmax.f32 %v2776, %v2777
        %v2779 = vrot.slane %v2723, 4
        %v2780 = vmax.f32 %v2723, %v2779
        %v2781 = vrot.slane %v2780, 2
        %v2782 = vmax.f32 %v2780, %v2781
        %v2783 = vrot.slane %v2782, 1
        %v2784 = vmax.f32 %v2782, %v2783
        %v2785 = vrot.slane %v2724, 4
        %v2786 = vmax.f32 %v2724, %v2785
        %v2787 = vrot.slane %v2786, 2
        %v2788 = vmax.f32 %v2786, %v2787
        %v2789 = vrot.slane %v2788, 1
        %v2790 = vmax.f32 %v2788, %v2789
        %v2791 = vrot.slane %v2725, 4
        %v2792 = vmax.f32 %v2725, %v2791
        %v2793 = vrot.slane %v2792, 2
        %v2794 = vmax.f32 %v2792, %v2793
        %v2795 = vrot.slane %v2794, 1
        %v2796 = vmax.f32 %v2794, %v2795
        %v2797 = vrot.slane %v2726, 4
        %v2798 = vmax.f32 %v2726, %v2797
        %v2799 = vrot.slane %v2798, 2
        %v2800 = vmax.f32 %v2798, %v2799
        %v2801 = vrot.slane %v2800, 1
        %v2802 = vmax.f32 %v2800, %v2801
        %v2803 = vrot.slane %v2727, 4
        %v2804 = vmax.f32 %v2727, %v2803
        %v2805 = vrot.slane %v2804, 2
        %v2806 = vmax.f32 %v2804, %v2805
        %v2807 = vrot.slane %v2806, 1
        %v2808 = vmax.f32 %v2806, %v2807
        %v2809 = vrot.slane %v2728, 4
        %v2810 = vmax.f32 %v2728, %v2809
        %v2811 = vrot.slane %v2810, 2
        %v2812 = vmax.f32 %v2810, %v2811
        %v2813 = vrot.slane %v2812, 1
        %v2814 = vmax.f32 %v2812, %v2813
        %v2815 = vrot.slane %v2729, 4
        %v2816 = vmax.f32 %v2729, %v2815
        %v2817 = vrot.slane %v2816, 2
        %v2818 = vmax.f32 %v2816, %v2817
        %v2819 = vrot.slane %v2818, 1
        %v2820 = vmax.f32 %v2818, %v2819
        %v2821 = vrot.slane %v2730, 4
        %v2822 = vmax.f32 %v2730, %v2821
        %v2823 = vrot.slane %v2822, 2
        %v2824 = vmax.f32 %v2822, %v2823
        %v2825 = vrot.slane %v2824, 1
        %v2826 = vmax.f32 %v2824, %v2825
        %v2827 = vmax.f32 %v2459, %v2736
        %v2828 = vmax.f32 %v2460, %v2742
        %v2829 = vmax.f32 %v2461, %v2748
        %v2830 = vmax.f32 %v2462, %v2754
        %v2831 = vmax.f32 %v2463, %v2760
        %v2832 = vmax.f32 %v2464, %v2766
        %v2833 = vmax.f32 %v2465, %v2772
        %v2834 = vmax.f32 %v2466, %v2778
        %v2835 = vmax.f32 %v2467, %v2784
        %v2836 = vmax.f32 %v2468, %v2790
        %v2837 = vmax.f32 %v2469, %v2796
        %v2838 = vmax.f32 %v2470, %v2802
        %v2839 = vmax.f32 %v2471, %v2808
        %v2840 = vmax.f32 %v2472, %v2814
        %v2841 = vmax.f32 %v2473, %v2820
        %v2842 = vmax.f32 %v2474, %v2826
        %v2843 = vcvt.s32.f32 %v2635
        %v2844 = vcvt.s32.f32 %v2636
        %v2845 = vcvt.s32.f32 %v2637
        %v2846 = vcvt.s32.f32 %v2638
        %v2847 = vcvt.s32.f32 %v2639
        %v2848 = vcvt.s32.f32 %v2640
        %v2849 = vcvt.s32.f32 %v2641
        %v2850 = vcvt.s32.f32 %v2642
        %v2851 = vcvt.s32.f32 %v2643
        %v2852 = vcvt.s32.f32 %v2644
        %v2853 = vcvt.s32.f32 %v2645
        %v2854 = vcvt.s32.f32 %v2646
        %v2855 = vcvt.s32.f32 %v2647
        %v2856 = vcvt.s32.f32 %v2648
        %v2857 = vcvt.s32.f32 %v2649
        %v2858 = vcvt.s32.f32 %v2650
        %v2859 = vsel %vm1018, %v2843, -inf
        %v2860 = vrot.slane %v2859, 4
        %v2861 = vmax.f32 %v2859, %v2860
        %v2862 = vrot.slane %v2861, 2
        %v2863 = vmax.f32 %v2861, %v2862
        %v2864 = vrot.slane %v2863, 1
        %v2865 = vmax.f32 %v2863, %v2864
        %v2866 = vsel %vm1018, %v2844, -inf
        %v2867 = vrot.slane %v2866, 4
        %v2868 = vmax.f32 %v2866, %v2867
        %v2869 = vrot.slane %v2868, 2
        %v2870 = vmax.f32 %v2868, %v2869
        %v2871 = vrot.slane %v2870, 1
        %v2872 = vmax.f32 %v2870, %v2871
        %v2873 = vsel %vm1018, %v2845, -inf
        %v2874 = vrot.slane %v2873, 4
        %v2875 = vmax.f32 %v2873, %v2874
        %v2876 = vrot.slane %v2875, 2
        %v2877 = vmax.f32 %v2875, %v2876
        %v2878 = vrot.slane %v2877, 1
        %v2879 = vmax.f32 %v2877, %v2878
        %v2880 = vsel %vm1018, %v2846, -inf
        %v2881 = vrot.slane %v2880, 4
        %v2882 = vmax.f32 %v2880, %v2881
        %v2883 = vrot.slane %v2882, 2
        %v2884 = vmax.f32 %v2882, %v2883
        %v2885 = vrot.slane %v2884, 1
        %v2886 = vmax.f32 %v2884, %v2885
        %v2887 = vsel %vm1018, %v2847, -inf
        %v2888 = vrot.slane %v2887, 4
        %v2889 = vmax.f32 %v2887, %v2888
        %v2890 = vrot.slane %v2889, 2
        %v2891 = vmax.f32 %v2889, %v2890
        %v2892 = vrot.slane %v2891, 1
        %v2893 = vmax.f32 %v2891, %v2892
        %v2894 = vsel %vm1018, %v2848, -inf
        %v2895 = vrot.slane %v2894, 4
        %v2896 = vmax.f32 %v2894, %v2895
        %v2897 = vrot.slane %v2896, 2
        %v2898 = vmax.f32 %v2896, %v2897
        %v2899 = vrot.slane %v2898, 1
        %v2900 = vmax.f32 %v2898, %v2899
        %v2901 = vsel %vm1018, %v2849, -inf
        %v2902 = vrot.slane %v2901, 4
        %v2903 = vmax.f32 %v2901, %v2902
        %v2904 = vrot.slane %v2903, 2
        %v2905 = vmax.f32 %v2903, %v2904
        %v2906 = vrot.slane %v2905, 1
        %v2907 = vmax.f32 %v2905, %v2906
        %v2908 = vsel %vm1018, %v2850, -inf
        %v2909 = vrot.slane %v2908, 4
        %v2910 = vmax.f32 %v2908, %v2909
        %v2911 = vrot.slane %v2910, 2
        %v2912 = vmax.f32 %v2910, %v2911
        %v2913 = vrot.slane %v2912, 1
        %v2914 = vmax.f32 %v2912, %v2913
        %v2915 = vsel %vm1018, %v2851, -inf
        %v2916 = vrot.slane %v2915, 4
        %v2917 = vmax.f32 %v2915, %v2916
        %v2918 = vrot.slane %v2917, 2
        %v2919 = vmax.f32 %v2917, %v2918
        %v2920 = vrot.slane %v2919, 1
        %v2921 = vmax.f32 %v2919, %v2920
        %v2922 = vsel %vm1018, %v2852, -inf
        %v2923 = vrot.slane %v2922, 4
        %v2924 = vmax.f32 %v2922, %v2923
        %v2925 = vrot.slane %v2924, 2
        %v2926 = vmax.f32 %v2924, %v2925
        %v2927 = vrot.slane %v2926, 1
        %v2928 = vmax.f32 %v2926, %v2927
        %v2929 = vsel %vm1018, %v2853, -inf
        %v2930 = vrot.slane %v2929, 4
        %v2931 = vmax.f32 %v2929, %v2930
        %v2932 = vrot.slane %v2931, 2
        %v2933 = vmax.f32 %v2931, %v2932
        %v2934 = vrot.slane %v2933, 1
        %v2935 = vmax.f32 %v2933, %v2934
        %v2936 = vsel %vm1018, %v2854, -inf
        %v2937 = vrot.slane %v2936, 4
        %v2938 = vmax.f32 %v2936, %v2937
        %v2939 = vrot.slane %v2938, 2
        %v2940 = vmax.f32 %v2938, %v2939
        %v2941 = vrot.slane %v2940, 1
        %v2942 = vmax.f32 %v2940, %v2941
        %v2943 = vsel %vm1018, %v2855, -inf
        %v2944 = vrot.slane %v2943, 4
        %v2945 = vmax.f32 %v2943, %v2944
        %v2946 = vrot.slane %v2945, 2
        %v2947 = vmax.f32 %v2945, %v2946
        %v2948 = vrot.slane %v2947, 1
        %v2949 = vmax.f32 %v2947, %v2948
        %v2950 = vsel %vm1018, %v2856, -inf
        %v2951 = vrot.slane %v2950, 4
        %v2952 = vmax.f32 %v2950, %v2951
        %v2953 = vrot.slane %v2952, 2
        %v2954 = vmax.f32 %v2952, %v2953
        %v2955 = vrot.slane %v2954, 1
        %v2956 = vmax.f32 %v2954, %v2955
        %v2957 = vsel %vm1018, %v2857, -inf
        %v2958 = vrot.slane %v2957, 4
        %v2959 = vmax.f32 %v2957, %v2958
        %v2960 = vrot.slane %v2959, 2
        %v2961 = vmax.f32 %v2959, %v2960
        %v2962 = vrot.slane %v2961, 1
        %v2963 = vmax.f32 %v2961, %v2962
        %v2964 = vsel %vm1018, %v2858, -inf
        %v2965 = vrot.slane %v2964, 4
        %v2966 = vmax.f32 %v2964, %v2965
        %v2967 = vrot.slane %v2966, 2
        %v2968 = vmax.f32 %v2966, %v2967
        %v2969 = vrot.slane %v2968, 1
        %v2970 = vmax.f32 %v2968, %v2969
        %v2971 = vmax.f32 %v2603, %v2865
        %v2972 = vmax.f32 %v2604, %v2872
        %v2973 = vmax.f32 %v2605, %v2879
        %v2974 = vmax.f32 %v2606, %v2886
        %v2975 = vmax.f32 %v2607, %v2893
        %v2976 = vmax.f32 %v2608, %v2900
        %v2977 = vmax.f32 %v2609, %v2907
        %v2978 = vmax.f32 %v2610, %v2914
        %v2979 = vmax.f32 %v2611, %v2921
        %v2980 = vmax.f32 %v2612, %v2928
        %v2981 = vmax.f32 %v2613, %v2935
        %v2982 = vmax.f32 %v2614, %v2942
        %v2983 = vmax.f32 %v2615, %v2949
        %v2984 = vmax.f32 %v2616, %v2956
        %v2985 = vmax.f32 %v2617, %v2963
        %v2986 = vmax.f32 %v2618, %v2970
        %vm2987 = vcmp.gt.f32.partialorder %v2971, 0.5
        %vm2988 = vcmp.gt.f32.partialorder %v2972, 0.5
        %vm2989 = vcmp.gt.f32.partialorder %v2973, 0.5
        %vm2990 = vcmp.gt.f32.partialorder %v2974, 0.5
        %vm2991 = vcmp.gt.f32.partialorder %v2975, 0.5
        %vm2992 = vcmp.gt.f32.partialorder %v2976, 0.5
        %vm2993 = vcmp.gt.f32.partialorder %v2977, 0.5
        %vm2994 = vcmp.gt.f32.partialorder %v2978, 0.5
        %vm2995 = vcmp.gt.f32.partialorder %v2979, 0.5
        %vm2996 = vcmp.gt.f32.partialorder %v2980, 0.5
        %vm2997 = vcmp.gt.f32.partialorder %v2981, 0.5
        %vm2998 = vcmp.gt.f32.partialorder %v2982, 0.5
        %vm2999 = vcmp.gt.f32.partialorder %v2983, 0.5
        %vm3000 = vcmp.gt.f32.partialorder %v2984, 0.5
        %vm3001 = vcmp.gt.f32.partialorder %v2985, 0.5
        %vm3002 = vcmp.gt.f32.partialorder %v2986, 0.5
        %v3003 = vsel %vm2987, 1, 0
        %v3004 = vsel %vm2988, 1, 0
        %v3005 = vsel %vm2989, 1, 0
        %v3006 = vsel %vm2990, 1, 0
        %v3007 = vsel %vm2991, 1, 0
        %v3008 = vsel %vm2992, 1, 0
        %v3009 = vsel %vm2993, 1, 0
        %v3010 = vsel %vm2994, 1, 0
        %v3011 = vsel %vm2995, 1, 0
        %v3012 = vsel %vm2996, 1, 0
        %v3013 = vsel %vm2997, 1, 0
        %v3014 = vsel %vm2998, 1, 0
        %v3015 = vsel %vm2999, 1, 0
        %v3016 = vsel %vm3000, 1, 0
        %v3017 = vsel %vm3001, 1, 0
        %v3018 = vsel %vm3002, 1, 0
        %3019 = vset.pattern.permute.xlu0 0
        %3020 = vperm.xlu0 %3019, %v3003
        %v3021 = vpop.permute.xlu0 %3020
        %3022 = vset.pattern.permute.xlu0 0
        %3023 = vperm.xlu0 %3022, %v3004
        %v3024 = vpop.permute.xlu0 %3023
        %3025 = vset.pattern.permute.xlu0 0
        %3026 = vperm.xlu0 %3025, %v3005
        %v3027 = vpop.permute.xlu0 %3026
        %3028 = vset.pattern.permute.xlu0 0
        %3029 = vperm.xlu0 %3028, %v3006
        %v3030 = vpop.permute.xlu0 %3029
        %3031 = vset.pattern.permute.xlu0 0
        %3032 = vperm.xlu0 %3031, %v3007
        %v3033 = vpop.permute.xlu0 %3032
        %3034 = vset.pattern.permute.xlu0 0
        %3035 = vperm.xlu0 %3034, %v3008
        %v3036 = vpop.permute.xlu0 %3035
        %3037 = vset.pattern.permute.xlu0 0
        %3038 = vperm.xlu0 %3037, %v3009
        %v3039 = vpop.permute.xlu0 %3038
        %3040 = vset.pattern.permute.xlu0 0
        %3041 = vperm.xlu0 %3040, %v3010
        %v3042 = vpop.permute.xlu0 %3041
        %3043 = vset.pattern.permute.xlu0 0
        %3044 = vperm.xlu0 %3043, %v3011
        %v3045 = vpop.permute.xlu0 %3044
        %3046 = vset.pattern.permute.xlu0 0
        %3047 = vperm.xlu0 %3046, %v3012
        %v3048 = vpop.permute.xlu0 %3047
        %3049 = vset.pattern.permute.xlu0 0
        %3050 = vperm.xlu0 %3049, %v3013
        %v3051 = vpop.permute.xlu0 %3050
        %3052 = vset.pattern.permute.xlu0 0
        %3053 = vperm.xlu0 %3052, %v3014
        %v3054 = vpop.permute.xlu0 %3053
        %3055 = vset.pattern.permute.xlu0 0
        %3056 = vperm.xlu0 %3055, %v3015
        %v3057 = vpop.permute.xlu0 %3056
        %3058 = vset.pattern.permute.xlu0 0
        %3059 = vperm.xlu0 %3058, %v3016
        %v3060 = vpop.permute.xlu0 %3059
        %3061 = vset.pattern.permute.xlu0 0
        %3062 = vperm.xlu0 %3061, %v3017
        %v3063 = vpop.permute.xlu0 %3062
        %3064 = vset.pattern.permute.xlu0 0
        %3065 = vperm.xlu0 %3064, %v3018
        %v3066 = vpop.permute.xlu0 %3065
        %vm3067 = vcmp.eq.s32.totalorder %v3021, 1
        %vm3068 = vcmp.eq.s32.totalorder %v3024, 1
        %vm3069 = vcmp.eq.s32.totalorder %v3027, 1
        %vm3070 = vcmp.eq.s32.totalorder %v3030, 1
        %vm3071 = vcmp.eq.s32.totalorder %v3033, 1
        %vm3072 = vcmp.eq.s32.totalorder %v3036, 1
        %vm3073 = vcmp.eq.s32.totalorder %v3039, 1
        %vm3074 = vcmp.eq.s32.totalorder %v3042, 1
        %vm3075 = vcmp.eq.s32.totalorder %v3045, 1
        %vm3076 = vcmp.eq.s32.totalorder %v3048, 1
        %vm3077 = vcmp.eq.s32.totalorder %v3051, 1
        %vm3078 = vcmp.eq.s32.totalorder %v3054, 1
        %vm3079 = vcmp.eq.s32.totalorder %v3057, 1
        %vm3080 = vcmp.eq.s32.totalorder %v3060, 1
        %vm3081 = vcmp.eq.s32.totalorder %v3063, 1
        %vm3082 = vcmp.eq.s32.totalorder %v3066, 1
        %v3083 = vsel %vm3067, %v2827, 0.0
        %v3084 = vsel %vm3068, %v2828, 0.0
        %v3085 = vsel %vm3069, %v2829, 0.0
        %v3086 = vsel %vm3070, %v2830, 0.0
        %v3087 = vsel %vm3071, %v2831, 0.0
        %v3088 = vsel %vm3072, %v2832, 0.0
        %v3089 = vsel %vm3073, %v2833, 0.0
        %v3090 = vsel %vm3074, %v2834, 0.0
        %v3091 = vsel %vm3075, %v2835, 0.0
        %v3092 = vsel %vm3076, %v2836, 0.0
        %v3093 = vsel %vm3077, %v2837, 0.0
        %v3094 = vsel %vm3078, %v2838, 0.0
        %v3095 = vsel %vm3079, %v2839, 0.0
        %v3096 = vsel %vm3080, %v2840, 0.0
        %v3097 = vsel %vm3081, %v2841, 0.0
        %v3098 = vsel %vm3082, %v2842, 0.0
        %v3099 = vpack.c.bf16 %v3083, %v3083
        %v3100 = vpack.c.bf16 %v3084, %v3084
        %v3101 = vpack.c.bf16 %v3085, %v3085
        %v3102 = vpack.c.bf16 %v3086, %v3086
        %v3103 = vpack.c.bf16 %v3087, %v3087
        %v3104 = vpack.c.bf16 %v3088, %v3088
        %v3105 = vpack.c.bf16 %v3089, %v3089
        %v3106 = vpack.c.bf16 %v3090, %v3090
        %v3107 = vpack.c.bf16 %v3091, %v3091
        %v3108 = vpack.c.bf16 %v3092, %v3092
        %v3109 = vpack.c.bf16 %v3093, %v3093
        %v3110 = vpack.c.bf16 %v3094, %v3094
        %v3111 = vpack.c.bf16 %v3095, %v3095
        %v3112 = vpack.c.bf16 %v3096, %v3096
        %v3113 = vpack.c.bf16 %v3097, %v3097
        %v3114 = vpack.c.bf16 %v3098, %v3098
        %v3115 = vld [vmem:[%s453] sm:$0xf]
        %v3116 = vld [vmem:[%s453 + $0x4] sm:$0xf]
        %v3117 = vld [vmem:[%s453 + $0x8] sm:$0xf]
        %v3118 = vld [vmem:[%s453 + $0xc] sm:$0xf]
        %v3119 = vld [vmem:[%s453 + $0x10] sm:$0xf]
        %v3120 = vld [vmem:[%s453 + $0x14] sm:$0xf]
        %v3121 = vld [vmem:[%s453 + $0x18] sm:$0xf]
        %v3122 = vld [vmem:[%s453 + $0x1c] sm:$0xf]
        %v3123 = vld [vmem:[%s453 + $0x20] sm:$0xf]
        %v3124 = vld [vmem:[%s453 + $0x24] sm:$0xf]
        %v3125 = vld [vmem:[%s453 + $0x28] sm:$0xf]
        %v3126 = vld [vmem:[%s453 + $0x2c] sm:$0xf]
        %v3127 = vld [vmem:[%s453 + $0x30] sm:$0xf]
        %v3128 = vld [vmem:[%s453 + $0x34] sm:$0xf]
        %v3129 = vld [vmem:[%s453 + $0x38] sm:$0xf]
        %v3130 = vld [vmem:[%s453 + $0x3c] sm:$0xf]
        %v3147 = vunpack.c.l.b16 %v3099
        %v3148 = vunpack.c.l.b16 %v3100
        %v3149 = vunpack.c.l.b16 %v3101
        %v3150 = vunpack.c.l.b16 %v3102
        %v3151 = vunpack.c.l.b16 %v3103
        %v3152 = vunpack.c.l.b16 %v3104
        %v3153 = vunpack.c.l.b16 %v3105
        %v3154 = vunpack.c.l.b16 %v3106
        %v3155 = vunpack.c.l.b16 %v3107
        %v3156 = vunpack.c.l.b16 %v3108
        %v3157 = vunpack.c.l.b16 %v3109
        %v3158 = vunpack.c.l.b16 %v3110
        %v3159 = vunpack.c.l.b16 %v3111
        %v3160 = vunpack.c.l.b16 %v3112
        %v3161 = vunpack.c.l.b16 %v3113
        %v3162 = vunpack.c.l.b16 %v3114
        %vm3163 = vcmask 1041409
        %v3164 = vsel %vm3163, %v3148, %v3147
        %vm3165 = vcmask 1042434
        %v3166 = vsel %vm3165, %v3149, %v3164
        %vm3167 = vcmask 1043459
        %v3168 = vsel %vm3167, %v3150, %v3166
        %vm3169 = vcmask 1044484
        %v3170 = vsel %vm3169, %v3151, %v3168
        %vm3171 = vcmask 1045509
        %v3172 = vsel %vm3171, %v3152, %v3170
        %vm3173 = vcmask 1046534
        %v3174 = vsel %vm3173, %v3153, %v3172
        %vm3175 = vcmask 1047559
        %v3176 = vsel %vm3175, %v3154, %v3174
        %v3177 = vsel %vm3163, %v3156, %v3155
        %v3178 = vsel %vm3165, %v3157, %v3177
        %v3179 = vsel %vm3167, %v3158, %v3178
        %v3180 = vsel %vm3169, %v3159, %v3179
        %v3181 = vsel %vm3171, %v3160, %v3180
        %v3182 = vsel %vm3173, %v3161, %v3181
        %v3183 = vsel %vm3175, %v3162, %v3182
        %v3184 = vpack.c.b16 %v3183, %v3176
        %v3202 = vunpack.c.l.b16 %v3115
        %v3203 = vunpack.c.l.b16 %v3116
        %v3204 = vunpack.c.l.b16 %v3117
        %v3205 = vunpack.c.l.b16 %v3118
        %v3206 = vunpack.c.l.b16 %v3119
        %v3207 = vunpack.c.l.b16 %v3120
        %v3208 = vunpack.c.l.b16 %v3121
        %v3209 = vunpack.c.l.b16 %v3122
        %v3210 = vunpack.c.l.b16 %v3123
        %v3211 = vunpack.c.l.b16 %v3124
        %v3212 = vunpack.c.l.b16 %v3125
        %v3213 = vunpack.c.l.b16 %v3126
        %v3214 = vunpack.c.l.b16 %v3127
        %v3215 = vunpack.c.l.b16 %v3128
        %v3216 = vunpack.c.l.b16 %v3129
        %v3217 = vunpack.c.l.b16 %v3130
        %v3218 = vpack.c.b16 %v3203, %v3202
        %v3219 = vpack.c.b16 %v3205, %v3204
        %v3220 = vpack.c.b16 %v3207, %v3206
        %v3221 = vpack.c.b16 %v3209, %v3208
        %v3222 = vpack.c.b16 %v3211, %v3210
        %v3223 = vpack.c.b16 %v3213, %v3212
        %v3224 = vpack.c.b16 %v3215, %v3214
        %v3225 = vpack.c.b16 %v3217, %v3216
        %3234 = vmatprep.subr.bf16.mxu0 0
        %3235 = vmatpush1.bf16.msra.mxu0 %v3218
        %3236 = vmatprep.subr.bf16.mxu0 0
        %3237 = vmatpush1.bf16.msra.mxu0 %v3219
        %3238 = vmatprep.subr.bf16.mxu0 0
        %3239 = vmatpush1.bf16.msra.mxu0 %v3220
        %3240 = vmatprep.subr.bf16.mxu0 0
        %3241 = vmatpush1.bf16.msra.mxu0 %v3221
        %3242 = vmatprep.subr.bf16.mxu0 0
        %3243 = vmatpush1.bf16.msra.mxu0 %v3222
        %3244 = vmatprep.subr.bf16.mxu0 0
        %3245 = vmatpush1.bf16.msra.mxu0 %v3223
        %3246 = vmatprep.subr.bf16.mxu0 0
        %3247 = vmatpush1.bf16.msra.mxu0 %v3224
        %3248 = vmatprep.subr.bf16.mxu0 0
        %3249 = vmatpush1.bf16.msra.mxu0 %v3225
        %3250 = vmatprep.subr.bf16.mxu0 0
        %3251 = vmatpush1.bf16.msra.mxu0 0
        %3252 = vmatprep.subr.bf16.mxu0 0
        %3253 = vmatpush1.bf16.msra.mxu0 0
        %3254 = vmatprep.subr.bf16.mxu0 0
        %3255 = vmatpush1.bf16.msra.mxu0 0
        %3256 = vmatprep.subr.bf16.mxu0 0
        %3257 = vmatpush1.bf16.msra.mxu0 0
        %3258 = vmatprep.subr.bf16.mxu0 0
        %3259 = vmatpush1.bf16.msra.mxu0 0
        %3260 = vmatprep.subr.bf16.mxu0 0
        %3261 = vmatpush1.bf16.msra.mxu0 0
        %3262 = vmatprep.subr.bf16.mxu0 0
        %3263 = vmatpush1.bf16.msra.mxu0 0
        %3264 = vmatprep.subr.bf16.mxu0 0
        %3265 = vmatpush1.bf16.msra.mxu0 0
        %3266 = vmatprep.mubr.bf16.mxu0 0
        %3267 = vmatmul.mubr.bf16.gmra.mrb[0].mxu0 %v3184
        %v3268 = vpop.f32.mrb[0].mxu0
        %v3269 = vadd.f32 0.0, %v3268
        %v3270 = vpop.f32.mrb[0].mxu0
        %v3271 = vpop.f32.mrb[0].mxu0
        %v3272 = vadd.f32 0.0, %v3271
        %v3273 = vpop.f32.mrb[0].mxu0
        %3274 = vdwg.mxu0
        %v3275 = vadd.f32 %v614, %v3269
        %v3276 = vadd.f32 %v618, %v3272
        %3277 = vadd.xlane.f32.xlu0 %v3275
        %v3278 = vpop.xlane.xlu0 %3277
        %3279 = vadd.xlane.f32.xlu0 %v3276
        %v3280 = vpop.xlane.xlu0 %3279
        %v3281 = vmul.f32 %v3278, %v624
        %v3282 = vmul.f32 %v3280, %v624
        %v3283 = vsub.f32 %v3275, %v3281
        %v3284 = vsub.f32 %v3276, %v3282
        %v3285 = vmul.f32 %v3283, %v3283
        %v3286 = vmul.f32 %v3284, %v3284
        %3287 = vadd.xlane.f32.xlu0 %v3285
        %v3288 = vpop.xlane.xlu0 %3287
        %3289 = vadd.xlane.f32.xlu0 %v3286
        %v3290 = vpop.xlane.xlu0 %3289
        %v3291 = vmul.f32 %v3288, %v624
        %v3292 = vmul.f32 %v3290, %v624
        %v3293 = vadd.f32 %v3291, 1e-05
        %v3294 = vadd.f32 %v3292, 1e-05
        %v3295 = vrsqrt.pop %v3293
        %v3296 = vrsqrt.pop %v3294
        %v3297 = vmul.f32 %v3283, %v3295
        %v3298 = vmul.f32 %v3284, %v3296
        %v3299 = vlaneseq
        %v3300 = vshrl.u32 %v3299, 7
        %v3301 = vsub.s32 2, %v3300
        %v3302 = vrot.slane %v479, %v3301
        %v3303 = vmul.f32 %v3297, %v3302
        %v3304 = vmul.f32 %v3298, %v3302
        %v3305 = vlaneseq
        %v3306 = vshrl.u32 %v3305, 7
        %v3307 = vsub.s32 3, %v3306
        %v3308 = vrot.slane %v479, %v3307
        %v3309 = vadd.f32 %v3303, %v3308
        %v3310 = vadd.f32 %v3304, %v3308
        %v3311 = vmax.f32 %v3309, 0.0
        %v3312 = vmax.f32 %v3310, 0.0
        %v3313 = vpack.c.bf16 %v3312, %v3311
        %v3314 = vld [vmem:[%s377] sm:$0xf]
        %v3315 = vld [vmem:[%s377 + $0x4] sm:$0xf]
        %v3316 = vld [vmem:[%s377 + $0x8] sm:$0xf]
        %v3317 = vld [vmem:[%s377 + $0xc] sm:$0xf]
        %v3318 = vld [vmem:[%s377 + $0x10] sm:$0xf]
        %v3319 = vld [vmem:[%s377 + $0x14] sm:$0xf]
        %v3320 = vld [vmem:[%s377 + $0x18] sm:$0xf]
        %v3321 = vld [vmem:[%s377 + $0x1c] sm:$0xf]
        %v3322 = vld [vmem:[%s377 + $0x20] sm:$0xf]
        %v3323 = vld [vmem:[%s377 + $0x24] sm:$0xf]
        %v3324 = vld [vmem:[%s377 + $0x28] sm:$0xf]
        %v3325 = vld [vmem:[%s377 + $0x2c] sm:$0xf]
        %v3326 = vld [vmem:[%s377 + $0x30] sm:$0xf]
        %v3327 = vld [vmem:[%s377 + $0x34] sm:$0xf]
        %v3328 = vld [vmem:[%s377 + $0x38] sm:$0xf]
        %v3329 = vld [vmem:[%s377 + $0x3c] sm:$0xf]
        %v3346 = vunpack.c.l.b16 %v3314
        %v3347 = vunpack.c.l.b16 %v3315
        %v3348 = vunpack.c.l.b16 %v3316
        %v3349 = vunpack.c.l.b16 %v3317
        %v3350 = vunpack.c.l.b16 %v3318
        %v3351 = vunpack.c.l.b16 %v3319
        %v3352 = vunpack.c.l.b16 %v3320
        %v3353 = vunpack.c.l.b16 %v3321
        %v3354 = vunpack.c.l.b16 %v3322
        %v3355 = vunpack.c.l.b16 %v3323
        %v3356 = vunpack.c.l.b16 %v3324
        %v3357 = vunpack.c.l.b16 %v3325
        %v3358 = vunpack.c.l.b16 %v3326
        %v3359 = vunpack.c.l.b16 %v3327
        %v3360 = vunpack.c.l.b16 %v3328
        %v3361 = vunpack.c.l.b16 %v3329
        %v3362 = vpack.c.b16 %v3347, %v3346
        %v3363 = vpack.c.b16 %v3349, %v3348
        %v3364 = vpack.c.b16 %v3351, %v3350
        %v3365 = vpack.c.b16 %v3353, %v3352
        %v3366 = vpack.c.b16 %v3355, %v3354
        %v3367 = vpack.c.b16 %v3357, %v3356
        %v3368 = vpack.c.b16 %v3359, %v3358
        %v3369 = vpack.c.b16 %v3361, %v3360
        %3378 = vmatprep.subr.bf16.mxu0 0
        %3379 = vmatpush1.bf16.msra.mxu0 %v3362
        %3380 = vmatprep.subr.bf16.mxu0 0
        %3381 = vmatpush1.bf16.msra.mxu0 %v3363
        %3382 = vmatprep.subr.bf16.mxu0 0
        %3383 = vmatpush1.bf16.msra.mxu0 %v3364
        %3384 = vmatprep.subr.bf16.mxu0 0
        %3385 = vmatpush1.bf16.msra.mxu0 %v3365
        %3386 = vmatprep.subr.bf16.mxu0 0
        %3387 = vmatpush1.bf16.msra.mxu0 %v3366
        %3388 = vmatprep.subr.bf16.mxu0 0
        %3389 = vmatpush1.bf16.msra.mxu0 %v3367
        %3390 = vmatprep.subr.bf16.mxu0 0
        %3391 = vmatpush1.bf16.msra.mxu0 %v3368
        %3392 = vmatprep.subr.bf16.mxu0 0
        %3393 = vmatpush1.bf16.msra.mxu0 %v3369
        %3394 = vmatprep.subr.bf16.mxu0 0
        %3395 = vmatpush1.bf16.msra.mxu0 0
        %3396 = vmatprep.subr.bf16.mxu0 0
        %3397 = vmatpush1.bf16.msra.mxu0 0
        %3398 = vmatprep.subr.bf16.mxu0 0
        %3399 = vmatpush1.bf16.msra.mxu0 0
        %3400 = vmatprep.subr.bf16.mxu0 0
        %3401 = vmatpush1.bf16.msra.mxu0 0
        %3402 = vmatprep.subr.bf16.mxu0 0
        %3403 = vmatpush1.bf16.msra.mxu0 0
        %3404 = vmatprep.subr.bf16.mxu0 0
        %3405 = vmatpush1.bf16.msra.mxu0 0
        %3406 = vmatprep.subr.bf16.mxu0 0
        %3407 = vmatpush1.bf16.msra.mxu0 0
        %3408 = vmatprep.subr.bf16.mxu0 0
        %3409 = vmatpush1.bf16.msra.mxu0 0
        %3410 = vmatprep.mubr.bf16.mxu0 0
        %3411 = vmatmul.mubr.bf16.gmra.mrb[0].mxu0 %v3313
        %v3412 = vpop.f32.mrb[0].mxu0
        %v3413 = vadd.f32 0.0, %v3412
        %v3414 = vpop.f32.mrb[0].mxu0
        %v3415 = vpop.f32.mrb[0].mxu0
        %v3416 = vadd.f32 0.0, %v3415
        %v3417 = vpop.f32.mrb[0].mxu0
        %3418 = vdwg.mxu0
        %3419 = vadd.xlane.f32.xlu0 %v3413
        %v3420 = vpop.xlane.xlu0 %3419
        %3421 = vadd.xlane.f32.xlu0 %v3416
        %v3422 = vpop.xlane.xlu0 %3421
        %v3423 = vmul.f32 %v3420, %v624
        %v3424 = vmul.f32 %v3422, %v624
        %v3425 = vsub.f32 %v3413, %v3423
        %v3426 = vsub.f32 %v3416, %v3424
        %v3427 = vmul.f32 %v3425, %v3425
        %v3428 = vmul.f32 %v3426, %v3426
        %3429 = vadd.xlane.f32.xlu0 %v3427
        %v3430 = vpop.xlane.xlu0 %3429
        %3431 = vadd.xlane.f32.xlu0 %v3428
        %v3432 = vpop.xlane.xlu0 %3431
        %v3433 = vmul.f32 %v3430, %v624
        %v3434 = vmul.f32 %v3432, %v624
        %v3435 = vadd.f32 %v3433, 1e-05
        %v3436 = vadd.f32 %v3434, 1e-05
        %v3437 = vrsqrt.pop %v3435
        %v3438 = vrsqrt.pop %v3436
        %v3439 = vmul.f32 %v3425, %v3437
        %v3440 = vmul.f32 %v3426, %v3438
        %v3441 = vlaneseq
        %v3442 = vshrl.u32 %v3441, 7
        %v3443 = vsub.s32 4, %v3442
        %v3444 = vrot.slane %v479, %v3443
        %v3445 = vmul.f32 %v3439, %v3444
        %v3446 = vmul.f32 %v3440, %v3444
        %v3447 = vlaneseq
        %v3448 = vshrl.u32 %v3447, 7
        %v3449 = vsub.s32 5, %v3448
        %v3450 = vrot.slane %v479, %v3449
        %v3451 = vadd.f32 %v3445, %v3450
        %v3452 = vadd.f32 %v3446, %v3450
        %v3453 = vadd.f32 %v3451, %v477
        %v3454 = vadd.f32 %v3452, %v478
        %v3455 = vmax.f32 %v3453, 0.0
        %v3456 = vmax.f32 %v3454, 0.0
        %3457 = vst [vmem:[#allocation2] sm:$0xff] %v3455
        %3458 = vst [vmem:[#allocation2 + $0x8] sm:$0xff] %v3456
        // Predicated region
        $region65: #{da2da_forward.1} parent=47 // pred_check
          _
        $region66: #{da2da_forward.1} parent=47 // pred_check_branch
          %3460 = sbr.rel (%p469) target = $region68
        $region67: #{da2da_forward.1} parent=47 // pred_region
          %3461 = vst [vmem:[#allocation9] sm:$0xff] %v3455
          %3462 = vst [vmem:[#allocation9 + $0x8] sm:$0xff] %v3456
        $region68: #{da2da_forward.1} parent=47 // pred_fallthru
          _
        // Predicated region
        $region69: #{da2da_forward.1} parent=47 // pred_check
          %p3463 = pneg %p233
        $region70: #{da2da_forward.1} parent=47 // pred_check_branch
          %3465 = sbr.rel (%p3463) target = $region72
        $region71: #{da2da_forward.1} parent=47 // pred_region
          %s3467 = ssub.s32 256, 256
          %3468 = vsyncadd [#allocation5], %s3467
          %s3469 = sshll.u32 [#allocation9], 4
          %s3470 = int_to_ptr.vmem [resolvable:$true] %s3469
          %3475 = dma.vmem_to_hbm [thread:$0]  %s3470, 256, %s7, [#allocation5], 128, 128, 8
        $region72: #{da2da_forward.1} parent=47 // pred_fallthru
          _
        // Predicated region
        $region73: #{da2da_forward.1} parent=47 // pred_check
          %p3476 = pneg %p233
        $region74: #{da2da_forward.1} parent=47 // pred_check_branch
          %3478 = sbr.rel (%p3476) target = $region76
        $region75: #{da2da_forward.1} parent=47 // pred_region
          %3479 = dma.done [#allocation5], 256
        $region76: #{da2da_forward.1} parent=47 // pred_fallthru
          _
      $region48: #{da2da_forward.1} parent=5 // pred_fallthru
        _
      %p3480 = scmp.le.s32.totalorder 2, %s18
      // Predicated region
      $region77: #{da2da_forward.1} parent=5 // pred_check
        %p3481 = pneg %p3480
      $region78: #{da2da_forward.1} parent=5 // pred_check_branch
        %3483 = sbr.rel (%p3481) target = $region80
      $region79: #{da2da_forward.1} parent=5 // pred_region
        %s3484 = ssub.s32 %s18, 2
      $region80: #{da2da_forward.1} parent=5 // pred_fallthru
        _
    $region6: #{da2da_forward.1} parent=1 // loop_footer
      %s22 = sadd.s32 1, %s18
    $region7: #{da2da_forward.1} parent=1 // loop_footer_branch
      %17 = sbr.rel target = $region3
    $region8: #{da2da_forward.1} parent=1 // loop_exit
      _
    %3485 = vsyncpa [#allocation4], 1
    %s3486 = scalar_lea.sflag [#allocation4], 1
    %3487 = vsyncpa %s3486, 1
    %3488 = vsyncpa [#allocation7], 1
    %s3489 = scalar_lea.sflag [#allocation7], 1
    %3490 = vsyncpa %s3489, 1
    %3491 = vsyncpa [#allocation5], 1
    %s3492 = scalar_lea.sflag [#allocation5], 1
    %3493 = vsyncpa %s3492, 1

</llo_original>
